<compile_context>
chip_gen: v7x
topology: tpu7x:2x2x1
jax: 0.10.0
libtpu: 0.0.40
codegen_flags: <defaults>
</compile_context>

<pallas_src>
import math
import functools

import jax
import jax.numpy as jnp
from jax.experimental import pallas as pl
from jax.experimental.pallas import tpu as pltpu


def _cross_attention_kernel(text_ref, vision_ref,
                            wq_ref, wkv_ref, wo_ref,
                            bq_ref, bkv_ref, bo_ref,
                            out_ref,
                            q_sc, acc_sc, m_sc, l_sc,
                            *, num_heads):
    """Grid = (batch tiles, Lk tiles). Lk axis is an online-softmax reduction.

    text_ref   : (Bt, Lq, E)   query tile (constant across the Lk axis)
    vision_ref : (Bt, Tk, E)   key/value tile
    wq_ref     : (E, E)        Wq^T * (1/sqrt(d))   (scale folded in wrapper)
    wkv_ref    : (E, 2E)       [Wk^T | Wv^T] fused
    wo_ref     : (E, E)        Wo^T
    bq_ref     : (1, E)        bq * (1/sqrt(d))
    bkv_ref    : (1, 2E)       [bk | bv]
    bo_ref     : (1, E)
    out_ref    : (Bt, Lq, E)
    q_sc       : (Bt*Lq, E)    projected queries (persist across Lk tiles)
    acc_sc     : (Bt*Lq, E)    f32 un-normalized PV accumulator (head-merged)
    m_sc, l_sc : (H, Bt*Lq, 1) f32 online-softmax running max / sum
    """
    ki = pl.program_id(1)
    H = num_heads
    E = wq_ref.shape[0]
    d = E // H
    Bt, Lq, _ = text_ref.shape
    Tk = vision_ref.shape[1]
    rows_q = Bt * Lq
    in_dtype = text_ref.dtype

    # ---- First Lk tile: project queries once, reset online-softmax state.
    @pl.when(ki == 0)
    def _init():
        x = text_ref[...].reshape(rows_q, E)
        q = jnp.dot(x, wq_ref[...],
                    preferred_element_type=jnp.float32) + bq_ref[...]
        q_sc[...] = q.astype(in_dtype)
        acc_sc[...] = jnp.zeros(acc_sc.shape, acc_sc.dtype)
        m_sc[...] = jnp.full(m_sc.shape, -jnp.inf, m_sc.dtype)
        l_sc[...] = jnp.zeros(l_sc.shape, l_sc.dtype)

    # ---- K/V projection for this vision tile: one fused (E, 2E) matmul.
    kv = vision_ref[...].reshape(Bt * Tk, E)
    kvp = (jnp.dot(kv, wkv_ref[...], preferred_element_type=jnp.float32)
           + bkv_ref[...]).astype(in_dtype)
    k = kvp[:, :E]
    v = kvp[:, E:]

    # ---- Online-softmax update per (batch-in-tile, head). Static lane /
    # sublane slices only; the 1/sqrt(d) scale is already folded into Wq/bq
    # and normalization is deferred to the finalize step.
    for b in range(Bt):
        qr = slice(b * Lq, (b + 1) * Lq)
        kr = slice(b * Tk, (b + 1) * Tk)
        for h in range(H):
            hs = slice(h * d, (h + 1) * d)
            q_bh = q_sc[qr, hs]                                    # (Lq, d)
            k_bh = k[kr, hs]                                       # (Tk, d)
            v_bh = v[kr, hs]                                       # (Tk, d)
            s = jnp.einsum('qd,kd->qk', q_bh, k_bh,
                           preferred_element_type=jnp.float32)     # (Lq, Tk)
            m_prev = m_sc[h, qr]                                   # (Lq, 1)
            l_prev = l_sc[h, qr]
            m_new = jnp.maximum(m_prev, jnp.max(s, axis=-1, keepdims=True))
            alpha = jnp.exp(m_prev - m_new)
            p = jnp.exp(s - m_new)
            l_new = alpha * l_prev + jnp.sum(p, axis=-1, keepdims=True)
            pv = jnp.dot(p.astype(in_dtype), v_bh,
                         preferred_element_type=jnp.float32)       # (Lq, d)
            acc_sc[qr, hs] = alpha * acc_sc[qr, hs] + pv
            m_sc[h, qr] = m_new
            l_sc[h, qr] = l_new

    # ---- Last Lk tile: exact deferred normalization on the (rows, d)
    # accumulators, then output projection + residual. Dropout = identity.
    @pl.when(ki == pl.num_programs(1) - 1)
    def _finalize():
        for h in range(H):
            hs = slice(h * d, (h + 1) * d)
            acc_sc[:, hs] = acc_sc[:, hs] * pl.reciprocal(l_sc[h])
        att = acc_sc[...].astype(in_dtype)                          # (rows, E)
        x = text_ref[...].reshape(rows_q, E)
        out = (jnp.dot(att, wo_ref[...], preferred_element_type=jnp.float32)
               + bo_ref[...] + x.astype(jnp.float32))
        out_ref[...] = out.reshape(Bt, Lq, E).astype(out_ref.dtype)


def _largest_divisor_leq(n, cap):
    c = max(1, min(n, cap))
    while n % c:
        c -= 1
    return c


def cross_attention(text, vision, params, *, num_heads,
                    block_b=None, block_k=None, vmem_limit_bytes=None):
    """text: (B, Lq, E), vision: (B, Lk, E). Returns (B, Lq, E)."""
    B, Lq, E = text.shape
    _, Lk, _ = vision.shape
    assert E % num_heads == 0, "hidden_dim must be divisible by num_heads"
    d = E // num_heads
    wq, wk, wv, wo, bq, bk, bv, bo = params

    # One-time XLA-side weight prep:
    #  * fold the 1/sqrt(d) attention scale into Wq AND bq,
    #  * pre-transpose to (in, out) layout so the kernel never transposes,
    #  * fuse the K and V projections into a single (E, 2E) matmul.
    scale = 1.0 / math.sqrt(d)
    wq_t = wq.T * scale                                 # (E, E)
    bq_s = bq * scale                                   # (1, E)
    wkv_t = jnp.concatenate([wk.T, wv.T], axis=1)       # (E, 2E)
    bkv = jnp.concatenate([bk, bv], axis=1)             # (1, 2E)
    wo_t = wo.T                                         # (E, E)

    # Lk (vision) tile size: bounds the f32 score / prob tensors in VMEM.
    if block_k is None:
        if Lk <= 512:
            block_k = Lk
        else:
            block_k = _largest_divisor_leq(Lk, 512)
            if block_k % 8 != 0:
                block_k = Lk            # keep the (8,128) block constraint
    assert Lk % block_k == 0

    # Batch tile: pack several batch elements per grid step so projection
    # matmuls see M = block_b*Lq rows (target >=128/256 rows for the MXU).
    if block_b is None:
        block_b = max(1, min(B, 256 // max(Lq, 1)))
        while B % block_b:
            block_b -= 1
    if block_b > 1 and (Lq % 8 or block_k % 8):
        block_b = 1     # keep in-kernel (Bt, L, E) -> (Bt*L, E) reshape layout-free
    assert B % block_b == 0

    grid = (B // block_b, Lk // block_k)
    full2d = lambda bi, ki: (0, 0)

    kernel = functools.partial(_cross_attention_kernel, num_heads=num_heads)
    return pl.pallas_call(
        kernel,
        out_shape=jax.ShapeDtypeStruct((B, Lq, E), text.dtype),
        grid_spec=pltpu.PrefetchScalarGridSpec(
            num_scalar_prefetch=0,
            grid=grid,
            in_specs=[
                pl.BlockSpec((block_b, Lq, E), lambda bi, ki: (bi, 0, 0)),        # text
                pl.BlockSpec((block_b, block_k, E), lambda bi, ki: (bi, ki, 0)),  # vision
                pl.BlockSpec((E, E), full2d),          # Wq^T * scale
                pl.BlockSpec((E, 2 * E), full2d),      # [Wk^T | Wv^T]
                pl.BlockSpec((E, E), full2d),          # Wo^T
                pl.BlockSpec((1, E), full2d),          # bq * scale
                pl.BlockSpec((1, 2 * E), full2d),      # [bk | bv]
                pl.BlockSpec((1, E), full2d),          # bo
            ],
            out_specs=pl.BlockSpec((block_b, Lq, E), lambda bi, ki: (bi, 0, 0)),
            scratch_shapes=[
                pltpu.VMEM((block_b * Lq, E), text.dtype),               # Q proj
                pltpu.VMEM((block_b * Lq, E), jnp.float32),              # PV acc
                pltpu.VMEM((num_heads, block_b * Lq, 1), jnp.float32),   # running max
                pltpu.VMEM((num_heads, block_b * Lq, 1), jnp.float32),   # running sum
            ]),
        compiler_params=pltpu.CompilerParams(
            dimension_semantics=("parallel", "arbitrary"),
            vmem_limit_bytes=vmem_limit_bytes),
    )(text, vision, wq_t, wkv_t, wo_t, bq_s, bkv, bo)


def reference_cross_attention(text, vision, params, *, num_heads):
    """Pure-JAX reference mirroring PyTorch nn.MultiheadAttention (eval mode)."""
    wq, wk, wv, wo, bq, bk, bv, bo = params
    B, Lq, E = text.shape
    Lk = vision.shape[1]
    d = E // num_heads

    q = text @ wq.T + bq[0]
    k = vision @ wk.T + bk[0]
    v = vision @ wv.T + bv[0]

    def split(t, L):
        return t.reshape(B, L, num_heads, d).transpose(0, 2, 1, 3)  # (B,H,L,d)

    qh, kh, vh = split(q, Lq), split(k, Lk), split(v, Lk)
    s = jnp.einsum("bhqd,bhkd->bhqk", qh, kh) / math.sqrt(d)
    p = jax.nn.softmax(s, axis=-1)
    att = jnp.einsum("bhqk,bhkd->bhqd", p, vh)           # (B,H,Lq,d)
    att = att.transpose(0, 2, 1, 3).reshape(B, Lq, E)
    out = att @ wo.T + bo[0]
    return out + text


if __name__ == "__main__":
    # Small, deterministic configuration.
    B, Lq, Lk = 2, 8, 16
    E, H = 32, 4
    dtype = jnp.float32

    key = jax.random.PRNGKey(0)
    keys = jax.random.split(key, 8)

    # nn.MultiheadAttention params: in_proj (3E, E) split into Wq/Wk/Wv,
    # in_proj_bias (3E,), out_proj.weight (E, E), out_proj.bias (E,).
    bound = 1.0 / math.sqrt(E)
    wq = jax.random.uniform(keys[0], (E, E), dtype, -bound, bound)
    wk = jax.random.uniform(keys[1], (E, E), dtype, -bound, bound)
    wv = jax.random.uniform(keys[2], (E, E), dtype, -bound, bound)
    wo = jax.random.uniform(keys[3], (E, E), dtype, -bound, bound)
    bq = jax.random.uniform(keys[4], (1, E), dtype, -bound, bound)
    bk = jax.random.uniform(keys[5], (1, E), dtype, -bound, bound)
    bv = jax.random.uniform(keys[6], (1, E), dtype, -bound, bound)
    bo = jnp.zeros((1, E), dtype)
    params = (wq, wk, wv, wo, bq, bk, bv, bo)

    xkey, vkey = jax.random.split(keys[7])
    text_embeds = jax.random.normal(xkey, (B, Lq, E), dtype)
    vision_embeds = jax.random.normal(vkey, (B, Lk, E), dtype)

    out = cross_attention(text_embeds, vision_embeds, params, num_heads=H)
    out = jax.block_until_ready(out)

    # Reference at highest matmul precision (softmax normalization in the
    # kernel is now exact; remaining tolerance covers MXU multi-pass f32 vs
    # XLA matmul precision-mode differences only).
    with jax.default_matmul_precision("highest"):
        ref = reference_cross_attention(text_embeds, vision_embeds, params,
                                        num_heads=H)
    ref = jax.block_until_ready(ref)

    assert out.shape == (B, Lq, E)
    assert jnp.allclose(out, ref, atol=5e-3, rtol=5e-3), "mismatch vs reference"

    print("KERNEL_OK")
</pallas_src>

<mosaic_0001>
module attributes {stable_mosaic.version = 11 : i64} {
  func.func @_cross_attention_kernel(%arg0: i32, %arg1: i32, %arg2: memref<2x8x32xf32, #tpu.memory_space<vmem>>, %arg3: memref<2x16x32xf32, #tpu.memory_space<vmem>>, %arg4: memref<32x32xf32, #tpu.memory_space<vmem>>, %arg5: memref<32x64xf32, #tpu.memory_space<vmem>>, %arg6: memref<32x32xf32, #tpu.memory_space<vmem>>, %arg7: memref<1x32xf32, #tpu.memory_space<vmem>>, %arg8: memref<1x64xf32, #tpu.memory_space<vmem>>, %arg9: memref<1x32xf32, #tpu.memory_space<vmem>>, %arg10: memref<2x8x32xf32, #tpu.memory_space<vmem>>, %arg11: memref<16x32xf32, #tpu.memory_space<vmem>>, %arg12: memref<16x32xf32, #tpu.memory_space<vmem>>, %arg13: memref<4x16x1xf32, #tpu.memory_space<vmem>>, %arg14: memref<4x16x1xf32, #tpu.memory_space<vmem>>) attributes {dimension_semantics = [#tpu.dimension_semantics<parallel>, #tpu.dimension_semantics<arbitrary>], iteration_bounds = array<i64: 1, 1>, scalar_prefetch = 0 : i64, scratch_operands = 4 : i64, tpu.core_type = #tpu.core_type<tc>, window_params = [{transform_indices = @transform_0, window_bounds = array<i64: 2, 8, 32>}, {transform_indices = @transform_1, window_bounds = array<i64: 2, 16, 32>}, {pipeline_mode = #tpu.pipeline_mode<synchronous>, transform_indices = @transform_2, window_bounds = array<i64: 32, 32>}, {pipeline_mode = #tpu.pipeline_mode<synchronous>, transform_indices = @transform_3, window_bounds = array<i64: 32, 64>}, {pipeline_mode = #tpu.pipeline_mode<synchronous>, transform_indices = @transform_4, window_bounds = array<i64: 32, 32>}, {pipeline_mode = #tpu.pipeline_mode<synchronous>, transform_indices = @transform_5, window_bounds = array<i64: 1, 32>}, {pipeline_mode = #tpu.pipeline_mode<synchronous>, transform_indices = @transform_6, window_bounds = array<i64: 1, 64>}, {pipeline_mode = #tpu.pipeline_mode<synchronous>, transform_indices = @transform_7, window_bounds = array<i64: 1, 32>}, {transform_indices = @transform_8, window_bounds = array<i64: 2, 8, 32>}]} {
    %c0_i32 = arith.constant 0 : i32
    %0 = arith.cmpi eq, %arg1, %c0_i32 : i32
    %1 = arith.extui %0 : i1 to i32
    %c0_i32_0 = arith.constant 0 : i32
    %2 = arith.cmpi ne, %1, %c0_i32_0 : i32
    scf.if %2 {
      %c0_179 = arith.constant 0 : index
      %c0_180 = arith.constant 0 : index
      %c0_181 = arith.constant 0 : index
      %271 = vector.load %arg2[%c0_179, %c0_180, %c0_181] : memref<2x8x32xf32, #tpu.memory_space<vmem>>, vector<2x8x32xf32>
      %272 = vector.shape_cast %271 : vector<2x8x32xf32> to vector<16x32xf32>
      %c0_182 = arith.constant 0 : index
      %c0_183 = arith.constant 0 : index
      %273 = vector.load %arg4[%c0_182, %c0_183] : memref<32x32xf32, #tpu.memory_space<vmem>>, vector<32x32xf32>
      %cst_184 = arith.constant dense<0.000000e+00> : vector<16x32xf32>
      %274 = tpu.matmul %272, %273, %cst_184 {dimension_numbers = #tpu.dot_dimension_numbers<[1], [0], [0], [1], [0, 0, 1, 1], [], []>} : vector<16x32xf32>, vector<32x32xf32>, vector<16x32xf32> -> vector<16x32xf32>
      %c0_185 = arith.constant 0 : index
      %c0_186 = arith.constant 0 : index
      %275 = vector.load %arg7[%c0_185, %c0_186] : memref<1x32xf32, #tpu.memory_space<vmem>>, vector<1x32xf32>
      %276 = vector.broadcast %275 : vector<1x32xf32> to vector<16x32xf32>
      %277 = arith.addf %274, %276 : vector<16x32xf32>
      %c0_187 = arith.constant 0 : index
      %c0_188 = arith.constant 0 : index
      %278 = vector.load %arg11[%c0_187, %c0_188] : memref<16x32xf32, #tpu.memory_space<vmem>>, vector<16x32xf32>
      tpu.vector_store %arg11[%c0_187, %c0_188], %277 {strides = array<i32>} : memref<16x32xf32, #tpu.memory_space<vmem>>, vector<16x32xf32>,
      %cst_189 = arith.constant 0.000000e+00 : f32
      %279 = vector.broadcast %cst_189 : f32 to vector<16x32xf32>
      %c0_190 = arith.constant 0 : index
      %c0_191 = arith.constant 0 : index
      %280 = vector.load %arg12[%c0_190, %c0_191] : memref<16x32xf32, #tpu.memory_space<vmem>>, vector<16x32xf32>
      tpu.vector_store %arg12[%c0_190, %c0_191], %279 {strides = array<i32>} : memref<16x32xf32, #tpu.memory_space<vmem>>, vector<16x32xf32>,
      %cst_192 = arith.constant 0xFF800000 : f32
      %281 = vector.broadcast %cst_192 : f32 to vector<4x16x1xf32>
      %c0_193 = arith.constant 0 : index
      %c0_194 = arith.constant 0 : index
      %c0_195 = arith.constant 0 : index
      %282 = vector.load %arg13[%c0_193, %c0_194, %c0_195] : memref<4x16x1xf32, #tpu.memory_space<vmem>>, vector<4x16x1xf32>
      tpu.vector_store %arg13[%c0_193, %c0_194, %c0_195], %281 {strides = array<i32>} : memref<4x16x1xf32, #tpu.memory_space<vmem>>, vector<4x16x1xf32>,
      %cst_196 = arith.constant 0.000000e+00 : f32
      %283 = vector.broadcast %cst_196 : f32 to vector<4x16x1xf32>
      %c0_197 = arith.constant 0 : index
      %c0_198 = arith.constant 0 : index
      %c0_199 = arith.constant 0 : index
      %284 = vector.load %arg14[%c0_197, %c0_198, %c0_199] : memref<4x16x1xf32, #tpu.memory_space<vmem>>, vector<4x16x1xf32>
      tpu.vector_store %arg14[%c0_197, %c0_198, %c0_199], %283 {strides = array<i32>} : memref<4x16x1xf32, #tpu.memory_space<vmem>>, vector<4x16x1xf32>,
    } else {
    }
    %c0 = arith.constant 0 : index
    %c0_1 = arith.constant 0 : index
    %c0_2 = arith.constant 0 : index
    %3 = vector.load %arg3[%c0, %c0_1, %c0_2] : memref<2x16x32xf32, #tpu.memory_space<vmem>>, vector<2x16x32xf32>
    %4 = vector.shape_cast %3 : vector<2x16x32xf32> to vector<32x32xf32>
    %c0_3 = arith.constant 0 : index
    %c0_4 = arith.constant 0 : index
    %5 = vector.load %arg5[%c0_3, %c0_4] : memref<32x64xf32, #tpu.memory_space<vmem>>, vector<32x64xf32>
    %cst = arith.constant dense<0.000000e+00> : vector<32x64xf32>
    %6 = tpu.matmul %4, %5, %cst {dimension_numbers = #tpu.dot_dimension_numbers<[1], [0], [0], [1], [0, 0, 1, 1], [], []>} : vector<32x32xf32>, vector<32x64xf32>, vector<32x64xf32> -> vector<32x64xf32>
    %c0_5 = arith.constant 0 : index
    %c0_6 = arith.constant 0 : index
    %7 = vector.load %arg8[%c0_5, %c0_6] : memref<1x64xf32, #tpu.memory_space<vmem>>, vector<1x64xf32>
    %8 = vector.broadcast %7 : vector<1x64xf32> to vector<32x64xf32>
    %9 = arith.addf %6, %8 : vector<32x64xf32>
    %10 = vector.extract_strided_slice %9 {offsets = [0, 0], sizes = [32, 32], strides = [1, 1]} : vector<32x64xf32> to vector<32x32xf32>
    %11 = vector.extract_strided_slice %9 {offsets = [0, 32], sizes = [32, 32], strides = [1, 1]} : vector<32x64xf32> to vector<32x32xf32>
    %c0_7 = arith.constant 0 : index
    %c0_8 = arith.constant 0 : index
    %12 = vector.load %arg11[%c0_7, %c0_8] : memref<16x32xf32, #tpu.memory_space<vmem>>, vector<8x8xf32>
    %13 = vector.extract_strided_slice %10 {offsets = [0, 0], sizes = [16, 8], strides = [1, 1]} : vector<32x32xf32> to vector<16x8xf32>
    %14 = vector.extract_strided_slice %11 {offsets = [0, 0], sizes = [16, 8], strides = [1, 1]} : vector<32x32xf32> to vector<16x8xf32>
    "tpu.trace_start"() <{level = 10 : i32, message = "qd,kd->qk"}> : () -> ()
    %cst_9 = arith.constant dense<0.000000e+00> : vector<8x16xf32>
    %15 = tpu.matmul %12, %13, %cst_9 {dimension_numbers = #tpu.dot_dimension_numbers<[1], [1], [0], [0], [0, 0, 1, 0], [], []>} : vector<8x8xf32>, vector<16x8xf32>, vector<8x16xf32> -> vector<8x16xf32>
    "tpu.trace_stop"() : () -> ()
    %c0_10 = arith.constant 0 : index
    %c0_11 = arith.constant 0 : index
    %c0_12 = arith.constant 0 : index
    %16 = vector.load %arg13[%c0_10, %c0_11, %c0_12] : memref<4x16x1xf32, #tpu.memory_space<vmem>>, vector<1x8x1xf32>
    %17 = vector.shape_cast %16 : vector<1x8x1xf32> to vector<8x1xf32>
    %c0_13 = arith.constant 0 : index
    %c0_14 = arith.constant 0 : index
    %c0_15 = arith.constant 0 : index
    %18 = vector.load %arg14[%c0_13, %c0_14, %c0_15] : memref<4x16x1xf32, #tpu.memory_space<vmem>>, vector<1x8x1xf32>
    %19 = vector.shape_cast %18 : vector<1x8x1xf32> to vector<8x1xf32>
    %cst_16 = arith.constant dense<0xFF800000> : vector<8xf32>
    %20 = vector.multi_reduction <maximumf>, %15, %cst_16 [1] : vector<8x16xf32> to vector<8xf32>
    %21 = vector.shape_cast %20 : vector<8xf32> to vector<8x1xf32>
    %22 = arith.maximumf %17, %21 : vector<8x1xf32>
    %23 = arith.subf %17, %22 : vector<8x1xf32>
    %24 = math.exp %23 : vector<8x1xf32>
    %25 = vector.broadcast %22 : vector<8x1xf32> to vector<8x16xf32>
    %26 = arith.subf %15, %25 : vector<8x16xf32>
    %27 = math.exp %26 : vector<8x16xf32>
    %28 = arith.mulf %24, %19 : vector<8x1xf32>
    %cst_17 = arith.constant dense<0.000000e+00> : vector<8xf32>
    %29 = vector.multi_reduction <add>, %27, %cst_17 [1] : vector<8x16xf32> to vector<8xf32>
    %30 = vector.shape_cast %29 : vector<8xf32> to vector<8x1xf32>
    %31 = arith.addf %28, %30 : vector<8x1xf32>
    %cst_18 = arith.constant dense<0.000000e+00> : vector<8x8xf32>
    %32 = tpu.matmul %27, %14, %cst_18 {dimension_numbers = #tpu.dot_dimension_numbers<[1], [0], [0], [1], [0, 0, 1, 1], [], []>} : vector<8x16xf32>, vector<16x8xf32>, vector<8x8xf32> -> vector<8x8xf32>
    %c0_19 = arith.constant 0 : index
    %c0_20 = arith.constant 0 : index
    %33 = vector.load %arg12[%c0_19, %c0_20] : memref<16x32xf32, #tpu.memory_space<vmem>>, vector<8x8xf32>
    %34 = vector.broadcast %24 : vector<8x1xf32> to vector<8x8xf32>
    %35 = arith.mulf %34, %33 : vector<8x8xf32>
    %36 = arith.addf %35, %32 : vector<8x8xf32>
    %c0_21 = arith.constant 0 : index
    %c0_22 = arith.constant 0 : index
    %37 = vector.load %arg12[%c0_21, %c0_22] : memref<16x32xf32, #tpu.memory_space<vmem>>, vector<8x8xf32>
    tpu.vector_store %arg12[%c0_21, %c0_22], %36 {strides = array<i32>} : memref<16x32xf32, #tpu.memory_space<vmem>>, vector<8x8xf32>,
    %c0_23 = arith.constant 0 : index
    %c0_24 = arith.constant 0 : index
    %c0_25 = arith.constant 0 : index
    %38 = vector.load %arg13[%c0_23, %c0_24, %c0_25] : memref<4x16x1xf32, #tpu.memory_space<vmem>>, vector<1x8x1xf32>
    %39 = vector.shape_cast %38 : vector<1x8x1xf32> to vector<8x1xf32>
    %40 = vector.shape_cast %22 : vector<8x1xf32> to vector<1x8x1xf32>
    tpu.vector_store %arg13[%c0_23, %c0_24, %c0_25], %40 {strides = array<i32>} : memref<4x16x1xf32, #tpu.memory_space<vmem>>, vector<1x8x1xf32>,
    %c0_26 = arith.constant 0 : index
    %c0_27 = arith.constant 0 : index
    %c0_28 = arith.constant 0 : index
    %41 = vector.load %arg14[%c0_26, %c0_27, %c0_28] : memref<4x16x1xf32, #tpu.memory_space<vmem>>, vector<1x8x1xf32>
    %42 = vector.shape_cast %41 : vector<1x8x1xf32> to vector<8x1xf32>
    %43 = vector.shape_cast %31 : vector<8x1xf32> to vector<1x8x1xf32>
    tpu.vector_store %arg14[%c0_26, %c0_27, %c0_28], %43 {strides = array<i32>} : memref<4x16x1xf32, #tpu.memory_space<vmem>>, vector<1x8x1xf32>,
    %c0_29 = arith.constant 0 : index
    %c8 = arith.constant 8 : index
    %44 = vector.load %arg11[%c0_29, %c8] : memref<16x32xf32, #tpu.memory_space<vmem>>, vector<8x8xf32>
    %45 = vector.extract_strided_slice %10 {offsets = [0, 8], sizes = [16, 8], strides = [1, 1]} : vector<32x32xf32> to vector<16x8xf32>
    %46 = vector.extract_strided_slice %11 {offsets = [0, 8], sizes = [16, 8], strides = [1, 1]} : vector<32x32xf32> to vector<16x8xf32>
    "tpu.trace_start"() <{level = 10 : i32, message = "qd,kd->qk"}> : () -> ()
    %cst_30 = arith.constant dense<0.000000e+00> : vector<8x16xf32>
    %47 = tpu.matmul %44, %45, %cst_30 {dimension_numbers = #tpu.dot_dimension_numbers<[1], [1], [0], [0], [0, 0, 1, 0], [], []>} : vector<8x8xf32>, vector<16x8xf32>, vector<8x16xf32> -> vector<8x16xf32>
    "tpu.trace_stop"() : () -> ()
    %c1 = arith.constant 1 : index
    %c0_31 = arith.constant 0 : index
    %c0_32 = arith.constant 0 : index
    %48 = vector.load %arg13[%c1, %c0_31, %c0_32] : memref<4x16x1xf32, #tpu.memory_space<vmem>>, vector<1x8x1xf32>
    %49 = vector.shape_cast %48 : vector<1x8x1xf32> to vector<8x1xf32>
    %c1_33 = arith.constant 1 : index
    %c0_34 = arith.constant 0 : index
    %c0_35 = arith.constant 0 : index
    %50 = vector.load %arg14[%c1_33, %c0_34, %c0_35] : memref<4x16x1xf32, #tpu.memory_space<vmem>>, vector<1x8x1xf32>
    %51 = vector.shape_cast %50 : vector<1x8x1xf32> to vector<8x1xf32>
    %cst_36 = arith.constant dense<0xFF800000> : vector<8xf32>
    %52 = vector.multi_reduction <maximumf>, %47, %cst_36 [1] : vector<8x16xf32> to vector<8xf32>
    %53 = vector.shape_cast %52 : vector<8xf32> to vector<8x1xf32>
    %54 = arith.maximumf %49, %53 : vector<8x1xf32>
    %55 = arith.subf %49, %54 : vector<8x1xf32>
    %56 = math.exp %55 : vector<8x1xf32>
    %57 = vector.broadcast %54 : vector<8x1xf32> to vector<8x16xf32>
    %58 = arith.subf %47, %57 : vector<8x16xf32>
    %59 = math.exp %58 : vector<8x16xf32>
    %60 = arith.mulf %56, %51 : vector<8x1xf32>
    %cst_37 = arith.constant dense<0.000000e+00> : vector<8xf32>
    %61 = vector.multi_reduction <add>, %59, %cst_37 [1] : vector<8x16xf32> to vector<8xf32>
    %62 = vector.shape_cast %61 : vector<8xf32> to vector<8x1xf32>
    %63 = arith.addf %60, %62 : vector<8x1xf32>
    %cst_38 = arith.constant dense<0.000000e+00> : vector<8x8xf32>
    %64 = tpu.matmul %59, %46, %cst_38 {dimension_numbers = #tpu.dot_dimension_numbers<[1], [0], [0], [1], [0, 0, 1, 1], [], []>} : vector<8x16xf32>, vector<16x8xf32>, vector<8x8xf32> -> vector<8x8xf32>
    %c0_39 = arith.constant 0 : index
    %c8_40 = arith.constant 8 : index
    %65 = vector.load %arg12[%c0_39, %c8_40] : memref<16x32xf32, #tpu.memory_space<vmem>>, vector<8x8xf32>
    %66 = vector.broadcast %56 : vector<8x1xf32> to vector<8x8xf32>
    %67 = arith.mulf %66, %65 : vector<8x8xf32>
    %68 = arith.addf %67, %64 : vector<8x8xf32>
    %c0_41 = arith.constant 0 : index
    %c8_42 = arith.constant 8 : index
    %69 = vector.load %arg12[%c0_41, %c8_42] : memref<16x32xf32, #tpu.memory_space<vmem>>, vector<8x8xf32>
    tpu.vector_store %arg12[%c0_41, %c8_42], %68 {strides = array<i32>} : memref<16x32xf32, #tpu.memory_space<vmem>>, vector<8x8xf32>,
    %c1_43 = arith.constant 1 : index
    %c0_44 = arith.constant 0 : index
    %c0_45 = arith.constant 0 : index
    %70 = vector.load %arg13[%c1_43, %c0_44, %c0_45] : memref<4x16x1xf32, #tpu.memory_space<vmem>>, vector<1x8x1xf32>
    %71 = vector.shape_cast %70 : vector<1x8x1xf32> to vector<8x1xf32>
    %72 = vector.shape_cast %54 : vector<8x1xf32> to vector<1x8x1xf32>
    tpu.vector_store %arg13[%c1_43, %c0_44, %c0_45], %72 {strides = array<i32>} : memref<4x16x1xf32, #tpu.memory_space<vmem>>, vector<1x8x1xf32>,
    %c1_46 = arith.constant 1 : index
    %c0_47 = arith.constant 0 : index
    %c0_48 = arith.constant 0 : index
    %73 = vector.load %arg14[%c1_46, %c0_47, %c0_48] : memref<4x16x1xf32, #tpu.memory_space<vmem>>, vector<1x8x1xf32>
    %74 = vector.shape_cast %73 : vector<1x8x1xf32> to vector<8x1xf32>
    %75 = vector.shape_cast %63 : vector<8x1xf32> to vector<1x8x1xf32>
    tpu.vector_store %arg14[%c1_46, %c0_47, %c0_48], %75 {strides = array<i32>} : memref<4x16x1xf32, #tpu.memory_space<vmem>>, vector<1x8x1xf32>,
    %c0_49 = arith.constant 0 : index
    %c16 = arith.constant 16 : index
    %76 = vector.load %arg11[%c0_49, %c16] : memref<16x32xf32, #tpu.memory_space<vmem>>, vector<8x8xf32>
    %77 = vector.extract_strided_slice %10 {offsets = [0, 16], sizes = [16, 8], strides = [1, 1]} : vector<32x32xf32> to vector<16x8xf32>
    %78 = vector.extract_strided_slice %11 {offsets = [0, 16], sizes = [16, 8], strides = [1, 1]} : vector<32x32xf32> to vector<16x8xf32>
    "tpu.trace_start"() <{level = 10 : i32, message = "qd,kd->qk"}> : () -> ()
    %cst_50 = arith.constant dense<0.000000e+00> : vector<8x16xf32>
    %79 = tpu.matmul %76, %77, %cst_50 {dimension_numbers = #tpu.dot_dimension_numbers<[1], [1], [0], [0], [0, 0, 1, 0], [], []>} : vector<8x8xf32>, vector<16x8xf32>, vector<8x16xf32> -> vector<8x16xf32>
    "tpu.trace_stop"() : () -> ()
    %c2 = arith.constant 2 : index
    %c0_51 = arith.constant 0 : index
    %c0_52 = arith.constant 0 : index
    %80 = vector.load %arg13[%c2, %c0_51, %c0_52] : memref<4x16x1xf32, #tpu.memory_space<vmem>>, vector<1x8x1xf32>
    %81 = vector.shape_cast %80 : vector<1x8x1xf32> to vector<8x1xf32>
    %c2_53 = arith.constant 2 : index
    %c0_54 = arith.constant 0 : index
    %c0_55 = arith.constant 0 : index
    %82 = vector.load %arg14[%c2_53, %c0_54, %c0_55] : memref<4x16x1xf32, #tpu.memory_space<vmem>>, vector<1x8x1xf32>
    %83 = vector.shape_cast %82 : vector<1x8x1xf32> to vector<8x1xf32>
    %cst_56 = arith.constant dense<0xFF800000> : vector<8xf32>
    %84 = vector.multi_reduction <maximumf>, %79, %cst_56 [1] : vector<8x16xf32> to vector<8xf32>
    %85 = vector.shape_cast %84 : vector<8xf32> to vector<8x1xf32>
    %86 = arith.maximumf %81, %85 : vector<8x1xf32>
    %87 = arith.subf %81, %86 : vector<8x1xf32>
    %88 = math.exp %87 : vector<8x1xf32>
    %89 = vector.broadcast %86 : vector<8x1xf32> to vector<8x16xf32>
    %90 = arith.subf %79, %89 : vector<8x16xf32>
    %91 = math.exp %90 : vector<8x16xf32>
    %92 = arith.mulf %88, %83 : vector<8x1xf32>
    %cst_57 = arith.constant dense<0.000000e+00> : vector<8xf32>
    %93 = vector.multi_reduction <add>, %91, %cst_57 [1] : vector<8x16xf32> to vector<8xf32>
    %94 = vector.shape_cast %93 : vector<8xf32> to vector<8x1xf32>
    %95 = arith.addf %92, %94 : vector<8x1xf32>
    %cst_58 = arith.constant dense<0.000000e+00> : vector<8x8xf32>
    %96 = tpu.matmul %91, %78, %cst_58 {dimension_numbers = #tpu.dot_dimension_numbers<[1], [0], [0], [1], [0, 0, 1, 1], [], []>} : vector<8x16xf32>, vector<16x8xf32>, vector<8x8xf32> -> vector<8x8xf32>
    %c0_59 = arith.constant 0 : index
    %c16_60 = arith.constant 16 : index
    %97 = vector.load %arg12[%c0_59, %c16_60] : memref<16x32xf32, #tpu.memory_space<vmem>>, vector<8x8xf32>
    %98 = vector.broadcast %88 : vector<8x1xf32> to vector<8x8xf32>
    %99 = arith.mulf %98, %97 : vector<8x8xf32>
    %100 = arith.addf %99, %96 : vector<8x8xf32>
    %c0_61 = arith.constant 0 : index
    %c16_62 = arith.constant 16 : index
    %101 = vector.load %arg12[%c0_61, %c16_62] : memref<16x32xf32, #tpu.memory_space<vmem>>, vector<8x8xf32>
    tpu.vector_store %arg12[%c0_61, %c16_62], %100 {strides = array<i32>} : memref<16x32xf32, #tpu.memory_space<vmem>>, vector<8x8xf32>,
    %c2_63 = arith.constant 2 : index
    %c0_64 = arith.constant 0 : index
    %c0_65 = arith.constant 0 : index
    %102 = vector.load %arg13[%c2_63, %c0_64, %c0_65] : memref<4x16x1xf32, #tpu.memory_space<vmem>>, vector<1x8x1xf32>
    %103 = vector.shape_cast %102 : vector<1x8x1xf32> to vector<8x1xf32>
    %104 = vector.shape_cast %86 : vector<8x1xf32> to vector<1x8x1xf32>
    tpu.vector_store %arg13[%c2_63, %c0_64, %c0_65], %104 {strides = array<i32>} : memref<4x16x1xf32, #tpu.memory_space<vmem>>, vector<1x8x1xf32>,
    %c2_66 = arith.constant 2 : index
    %c0_67 = arith.constant 0 : index
    %c0_68 = arith.constant 0 : index
    %105 = vector.load %arg14[%c2_66, %c0_67, %c0_68] : memref<4x16x1xf32, #tpu.memory_space<vmem>>, vector<1x8x1xf32>
    %106 = vector.shape_cast %105 : vector<1x8x1xf32> to vector<8x1xf32>
    %107 = vector.shape_cast %95 : vector<8x1xf32> to vector<1x8x1xf32>
    tpu.vector_store %arg14[%c2_66, %c0_67, %c0_68], %107 {strides = array<i32>} : memref<4x16x1xf32, #tpu.memory_space<vmem>>, vector<1x8x1xf32>,
    %c0_69 = arith.constant 0 : index
    %c24 = arith.constant 24 : index
    %108 = vector.load %arg11[%c0_69, %c24] : memref<16x32xf32, #tpu.memory_space<vmem>>, vector<8x8xf32>
    %109 = vector.extract_strided_slice %10 {offsets = [0, 24], sizes = [16, 8], strides = [1, 1]} : vector<32x32xf32> to vector<16x8xf32>
    %110 = vector.extract_strided_slice %11 {offsets = [0, 24], sizes = [16, 8], strides = [1, 1]} : vector<32x32xf32> to vector<16x8xf32>
    "tpu.trace_start"() <{level = 10 : i32, message = "qd,kd->qk"}> : () -> ()
    %cst_70 = arith.constant dense<0.000000e+00> : vector<8x16xf32>
    %111 = tpu.matmul %108, %109, %cst_70 {dimension_numbers = #tpu.dot_dimension_numbers<[1], [1], [0], [0], [0, 0, 1, 0], [], []>} : vector<8x8xf32>, vector<16x8xf32>, vector<8x16xf32> -> vector<8x16xf32>
    "tpu.trace_stop"() : () -> ()
    %c3 = arith.constant 3 : index
    %c0_71 = arith.constant 0 : index
    %c0_72 = arith.constant 0 : index
    %112 = vector.load %arg13[%c3, %c0_71, %c0_72] : memref<4x16x1xf32, #tpu.memory_space<vmem>>, vector<1x8x1xf32>
    %113 = vector.shape_cast %112 : vector<1x8x1xf32> to vector<8x1xf32>
    %c3_73 = arith.constant 3 : index
    %c0_74 = arith.constant 0 : index
    %c0_75 = arith.constant 0 : index
    %114 = vector.load %arg14[%c3_73, %c0_74, %c0_75] : memref<4x16x1xf32, #tpu.memory_space<vmem>>, vector<1x8x1xf32>
    %115 = vector.shape_cast %114 : vector<1x8x1xf32> to vector<8x1xf32>
    %cst_76 = arith.constant dense<0xFF800000> : vector<8xf32>
    %116 = vector.multi_reduction <maximumf>, %111, %cst_76 [1] : vector<8x16xf32> to vector<8xf32>
    %117 = vector.shape_cast %116 : vector<8xf32> to vector<8x1xf32>
    %118 = arith.maximumf %113, %117 : vector<8x1xf32>
    %119 = arith.subf %113, %118 : vector<8x1xf32>
    %120 = math.exp %119 : vector<8x1xf32>
    %121 = vector.broadcast %118 : vector<8x1xf32> to vector<8x16xf32>
    %122 = arith.subf %111, %121 : vector<8x16xf32>
    %123 = math.exp %122 : vector<8x16xf32>
    %124 = arith.mulf %120, %115 : vector<8x1xf32>
    %cst_77 = arith.constant dense<0.000000e+00> : vector<8xf32>
    %125 = vector.multi_reduction <add>, %123, %cst_77 [1] : vector<8x16xf32> to vector<8xf32>
    %126 = vector.shape_cast %125 : vector<8xf32> to vector<8x1xf32>
    %127 = arith.addf %124, %126 : vector<8x1xf32>
    %cst_78 = arith.constant dense<0.000000e+00> : vector<8x8xf32>
    %128 = tpu.matmul %123, %110, %cst_78 {dimension_numbers = #tpu.dot_dimension_numbers<[1], [0], [0], [1], [0, 0, 1, 1], [], []>} : vector<8x16xf32>, vector<16x8xf32>, vector<8x8xf32> -> vector<8x8xf32>
    %c0_79 = arith.constant 0 : index
    %c24_80 = arith.constant 24 : index
    %129 = vector.load %arg12[%c0_79, %c24_80] : memref<16x32xf32, #tpu.memory_space<vmem>>, vector<8x8xf32>
    %130 = vector.broadcast %120 : vector<8x1xf32> to vector<8x8xf32>
    %131 = arith.mulf %130, %129 : vector<8x8xf32>
    %132 = arith.addf %131, %128 : vector<8x8xf32>
    %c0_81 = arith.constant 0 : index
    %c24_82 = arith.constant 24 : index
    %133 = vector.load %arg12[%c0_81, %c24_82] : memref<16x32xf32, #tpu.memory_space<vmem>>, vector<8x8xf32>
    tpu.vector_store %arg12[%c0_81, %c24_82], %132 {strides = array<i32>} : memref<16x32xf32, #tpu.memory_space<vmem>>, vector<8x8xf32>,
    %c3_83 = arith.constant 3 : index
    %c0_84 = arith.constant 0 : index
    %c0_85 = arith.constant 0 : index
    %134 = vector.load %arg13[%c3_83, %c0_84, %c0_85] : memref<4x16x1xf32, #tpu.memory_space<vmem>>, vector<1x8x1xf32>
    %135 = vector.shape_cast %134 : vector<1x8x1xf32> to vector<8x1xf32>
    %136 = vector.shape_cast %118 : vector<8x1xf32> to vector<1x8x1xf32>
    tpu.vector_store %arg13[%c3_83, %c0_84, %c0_85], %136 {strides = array<i32>} : memref<4x16x1xf32, #tpu.memory_space<vmem>>, vector<1x8x1xf32>,
    %c3_86 = arith.constant 3 : index
    %c0_87 = arith.constant 0 : index
    %c0_88 = arith.constant 0 : index
    %137 = vector.load %arg14[%c3_86, %c0_87, %c0_88] : memref<4x16x1xf32, #tpu.memory_space<vmem>>, vector<1x8x1xf32>
    %138 = vector.shape_cast %137 : vector<1x8x1xf32> to vector<8x1xf32>
    %139 = vector.shape_cast %127 : vector<8x1xf32> to vector<1x8x1xf32>
    tpu.vector_store %arg14[%c3_86, %c0_87, %c0_88], %139 {strides = array<i32>} : memref<4x16x1xf32, #tpu.memory_space<vmem>>, vector<1x8x1xf32>,
    %c8_89 = arith.constant 8 : index
    %c0_90 = arith.constant 0 : index
    %140 = vector.load %arg11[%c8_89, %c0_90] : memref<16x32xf32, #tpu.memory_space<vmem>>, vector<8x8xf32>
    %141 = vector.extract_strided_slice %10 {offsets = [16, 0], sizes = [16, 8], strides = [1, 1]} : vector<32x32xf32> to vector<16x8xf32>
    %142 = vector.extract_strided_slice %11 {offsets = [16, 0], sizes = [16, 8], strides = [1, 1]} : vector<32x32xf32> to vector<16x8xf32>
    "tpu.trace_start"() <{level = 10 : i32, message = "qd,kd->qk"}> : () -> ()
    %cst_91 = arith.constant dense<0.000000e+00> : vector<8x16xf32>
    %143 = tpu.matmul %140, %141, %cst_91 {dimension_numbers = #tpu.dot_dimension_numbers<[1], [1], [0], [0], [0, 0, 1, 0], [], []>} : vector<8x8xf32>, vector<16x8xf32>, vector<8x16xf32> -> vector<8x16xf32>
    "tpu.trace_stop"() : () -> ()
    %c0_92 = arith.constant 0 : index
    %c8_93 = arith.constant 8 : index
    %c0_94 = arith.constant 0 : index
    %144 = vector.load %arg13[%c0_92, %c8_93, %c0_94] : memref<4x16x1xf32, #tpu.memory_space<vmem>>, vector<1x8x1xf32>
    %145 = vector.shape_cast %144 : vector<1x8x1xf32> to vector<8x1xf32>
    %c0_95 = arith.constant 0 : index
    %c8_96 = arith.constant 8 : index
    %c0_97 = arith.constant 0 : index
    %146 = vector.load %arg14[%c0_95, %c8_96, %c0_97] : memref<4x16x1xf32, #tpu.memory_space<vmem>>, vector<1x8x1xf32>
    %147 = vector.shape_cast %146 : vector<1x8x1xf32> to vector<8x1xf32>
    %cst_98 = arith.constant dense<0xFF800000> : vector<8xf32>
    %148 = vector.multi_reduction <maximumf>, %143, %cst_98 [1] : vector<8x16xf32> to vector<8xf32>
    %149 = vector.shape_cast %148 : vector<8xf32> to vector<8x1xf32>
    %150 = arith.maximumf %145, %149 : vector<8x1xf32>
    %151 = arith.subf %145, %150 : vector<8x1xf32>
    %152 = math.exp %151 : vector<8x1xf32>
    %153 = vector.broadcast %150 : vector<8x1xf32> to vector<8x16xf32>
    %154 = arith.subf %143, %153 : vector<8x16xf32>
    %155 = math.exp %154 : vector<8x16xf32>
    %156 = arith.mulf %152, %147 : vector<8x1xf32>
    %cst_99 = arith.constant dense<0.000000e+00> : vector<8xf32>
    %157 = vector.multi_reduction <add>, %155, %cst_99 [1] : vector<8x16xf32> to vector<8xf32>
    %158 = vector.shape_cast %157 : vector<8xf32> to vector<8x1xf32>
    %159 = arith.addf %156, %158 : vector<8x1xf32>
    %cst_100 = arith.constant dense<0.000000e+00> : vector<8x8xf32>
    %160 = tpu.matmul %155, %142, %cst_100 {dimension_numbers = #tpu.dot_dimension_numbers<[1], [0], [0], [1], [0, 0, 1, 1], [], []>} : vector<8x16xf32>, vector<16x8xf32>, vector<8x8xf32> -> vector<8x8xf32>
    %c8_101 = arith.constant 8 : index
    %c0_102 = arith.constant 0 : index
    %161 = vector.load %arg12[%c8_101, %c0_102] : memref<16x32xf32, #tpu.memory_space<vmem>>, vector<8x8xf32>
    %162 = vector.broadcast %152 : vector<8x1xf32> to vector<8x8xf32>
    %163 = arith.mulf %162, %161 : vector<8x8xf32>
    %164 = arith.addf %163, %160 : vector<8x8xf32>
    %c8_103 = arith.constant 8 : index
    %c0_104 = arith.constant 0 : index
    %165 = vector.load %arg12[%c8_103, %c0_104] : memref<16x32xf32, #tpu.memory_space<vmem>>, vector<8x8xf32>
    tpu.vector_store %arg12[%c8_103, %c0_104], %164 {strides = array<i32>} : memref<16x32xf32, #tpu.memory_space<vmem>>, vector<8x8xf32>,
    %c0_105 = arith.constant 0 : index
    %c8_106 = arith.constant 8 : index
    %c0_107 = arith.constant 0 : index
    %166 = vector.load %arg13[%c0_105, %c8_106, %c0_107] : memref<4x16x1xf32, #tpu.memory_space<vmem>>, vector<1x8x1xf32>
    %167 = vector.shape_cast %166 : vector<1x8x1xf32> to vector<8x1xf32>
    %168 = vector.shape_cast %150 : vector<8x1xf32> to vector<1x8x1xf32>
    tpu.vector_store %arg13[%c0_105, %c8_106, %c0_107], %168 {strides = array<i32>} : memref<4x16x1xf32, #tpu.memory_space<vmem>>, vector<1x8x1xf32>,
    %c0_108 = arith.constant 0 : index
    %c8_109 = arith.constant 8 : index
    %c0_110 = arith.constant 0 : index
    %169 = vector.load %arg14[%c0_108, %c8_109, %c0_110] : memref<4x16x1xf32, #tpu.memory_space<vmem>>, vector<1x8x1xf32>
    %170 = vector.shape_cast %169 : vector<1x8x1xf32> to vector<8x1xf32>
    %171 = vector.shape_cast %159 : vector<8x1xf32> to vector<1x8x1xf32>
    tpu.vector_store %arg14[%c0_108, %c8_109, %c0_110], %171 {strides = array<i32>} : memref<4x16x1xf32, #tpu.memory_space<vmem>>, vector<1x8x1xf32>,
    %c8_111 = arith.constant 8 : index
    %c8_112 = arith.constant 8 : index
    %172 = vector.load %arg11[%c8_111, %c8_112] : memref<16x32xf32, #tpu.memory_space<vmem>>, vector<8x8xf32>
    %173 = vector.extract_strided_slice %10 {offsets = [16, 8], sizes = [16, 8], strides = [1, 1]} : vector<32x32xf32> to vector<16x8xf32>
    %174 = vector.extract_strided_slice %11 {offsets = [16, 8], sizes = [16, 8], strides = [1, 1]} : vector<32x32xf32> to vector<16x8xf32>
    "tpu.trace_start"() <{level = 10 : i32, message = "qd,kd->qk"}> : () -> ()
    %cst_113 = arith.constant dense<0.000000e+00> : vector<8x16xf32>
    %175 = tpu.matmul %172, %173, %cst_113 {dimension_numbers = #tpu.dot_dimension_numbers<[1], [1], [0], [0], [0, 0, 1, 0], [], []>} : vector<8x8xf32>, vector<16x8xf32>, vector<8x16xf32> -> vector<8x16xf32>
    "tpu.trace_stop"() : () -> ()
    %c1_114 = arith.constant 1 : index
    %c8_115 = arith.constant 8 : index
    %c0_116 = arith.constant 0 : index
    %176 = vector.load %arg13[%c1_114, %c8_115, %c0_116] : memref<4x16x1xf32, #tpu.memory_space<vmem>>, vector<1x8x1xf32>
    %177 = vector.shape_cast %176 : vector<1x8x1xf32> to vector<8x1xf32>
    %c1_117 = arith.constant 1 : index
    %c8_118 = arith.constant 8 : index
    %c0_119 = arith.constant 0 : index
    %178 = vector.load %arg14[%c1_117, %c8_118, %c0_119] : memref<4x16x1xf32, #tpu.memory_space<vmem>>, vector<1x8x1xf32>
    %179 = vector.shape_cast %178 : vector<1x8x1xf32> to vector<8x1xf32>
    %cst_120 = arith.constant dense<0xFF800000> : vector<8xf32>
    %180 = vector.multi_reduction <maximumf>, %175, %cst_120 [1] : vector<8x16xf32> to vector<8xf32>
    %181 = vector.shape_cast %180 : vector<8xf32> to vector<8x1xf32>
    %182 = arith.maximumf %177, %181 : vector<8x1xf32>
    %183 = arith.subf %177, %182 : vector<8x1xf32>
    %184 = math.exp %183 : vector<8x1xf32>
    %185 = vector.broadcast %182 : vector<8x1xf32> to vector<8x16xf32>
    %186 = arith.subf %175, %185 : vector<8x16xf32>
    %187 = math.exp %186 : vector<8x16xf32>
    %188 = arith.mulf %184, %179 : vector<8x1xf32>
    %cst_121 = arith.constant dense<0.000000e+00> : vector<8xf32>
    %189 = vector.multi_reduction <add>, %187, %cst_121 [1] : vector<8x16xf32> to vector<8xf32>
    %190 = vector.shape_cast %189 : vector<8xf32> to vector<8x1xf32>
    %191 = arith.addf %188, %190 : vector<8x1xf32>
    %cst_122 = arith.constant dense<0.000000e+00> : vector<8x8xf32>
    %192 = tpu.matmul %187, %174, %cst_122 {dimension_numbers = #tpu.dot_dimension_numbers<[1], [0], [0], [1], [0, 0, 1, 1], [], []>} : vector<8x16xf32>, vector<16x8xf32>, vector<8x8xf32> -> vector<8x8xf32>
    %c8_123 = arith.constant 8 : index
    %c8_124 = arith.constant 8 : index
    %193 = vector.load %arg12[%c8_123, %c8_124] : memref<16x32xf32, #tpu.memory_space<vmem>>, vector<8x8xf32>
    %194 = vector.broadcast %184 : vector<8x1xf32> to vector<8x8xf32>
    %195 = arith.mulf %194, %193 : vector<8x8xf32>
    %196 = arith.addf %195, %192 : vector<8x8xf32>
    %c8_125 = arith.constant 8 : index
    %c8_126 = arith.constant 8 : index
    %197 = vector.load %arg12[%c8_125, %c8_126] : memref<16x32xf32, #tpu.memory_space<vmem>>, vector<8x8xf32>
    tpu.vector_store %arg12[%c8_125, %c8_126], %196 {strides = array<i32>} : memref<16x32xf32, #tpu.memory_space<vmem>>, vector<8x8xf32>,
    %c1_127 = arith.constant 1 : index
    %c8_128 = arith.constant 8 : index
    %c0_129 = arith.constant 0 : index
    %198 = vector.load %arg13[%c1_127, %c8_128, %c0_129] : memref<4x16x1xf32, #tpu.memory_space<vmem>>, vector<1x8x1xf32>
    %199 = vector.shape_cast %198 : vector<1x8x1xf32> to vector<8x1xf32>
    %200 = vector.shape_cast %182 : vector<8x1xf32> to vector<1x8x1xf32>
    tpu.vector_store %arg13[%c1_127, %c8_128, %c0_129], %200 {strides = array<i32>} : memref<4x16x1xf32, #tpu.memory_space<vmem>>, vector<1x8x1xf32>,
    %c1_130 = arith.constant 1 : index
    %c8_131 = arith.constant 8 : index
    %c0_132 = arith.constant 0 : index
    %201 = vector.load %arg14[%c1_130, %c8_131, %c0_132] : memref<4x16x1xf32, #tpu.memory_space<vmem>>, vector<1x8x1xf32>
    %202 = vector.shape_cast %201 : vector<1x8x1xf32> to vector<8x1xf32>
    %203 = vector.shape_cast %191 : vector<8x1xf32> to vector<1x8x1xf32>
    tpu.vector_store %arg14[%c1_130, %c8_131, %c0_132], %203 {strides = array<i32>} : memref<4x16x1xf32, #tpu.memory_space<vmem>>, vector<1x8x1xf32>,
    %c8_133 = arith.constant 8 : index
    %c16_134 = arith.constant 16 : index
    %204 = vector.load %arg11[%c8_133, %c16_134] : memref<16x32xf32, #tpu.memory_space<vmem>>, vector<8x8xf32>
    %205 = vector.extract_strided_slice %10 {offsets = [16, 16], sizes = [16, 8], strides = [1, 1]} : vector<32x32xf32> to vector<16x8xf32>
    %206 = vector.extract_strided_slice %11 {offsets = [16, 16], sizes = [16, 8], strides = [1, 1]} : vector<32x32xf32> to vector<16x8xf32>
    "tpu.trace_start"() <{level = 10 : i32, message = "qd,kd->qk"}> : () -> ()
    %cst_135 = arith.constant dense<0.000000e+00> : vector<8x16xf32>
    %207 = tpu.matmul %204, %205, %cst_135 {dimension_numbers = #tpu.dot_dimension_numbers<[1], [1], [0], [0], [0, 0, 1, 0], [], []>} : vector<8x8xf32>, vector<16x8xf32>, vector<8x16xf32> -> vector<8x16xf32>
    "tpu.trace_stop"() : () -> ()
    %c2_136 = arith.constant 2 : index
    %c8_137 = arith.constant 8 : index
    %c0_138 = arith.constant 0 : index
    %208 = vector.load %arg13[%c2_136, %c8_137, %c0_138] : memref<4x16x1xf32, #tpu.memory_space<vmem>>, vector<1x8x1xf32>
    %209 = vector.shape_cast %208 : vector<1x8x1xf32> to vector<8x1xf32>
    %c2_139 = arith.constant 2 : index
    %c8_140 = arith.constant 8 : index
    %c0_141 = arith.constant 0 : index
    %210 = vector.load %arg14[%c2_139, %c8_140, %c0_141] : memref<4x16x1xf32, #tpu.memory_space<vmem>>, vector<1x8x1xf32>
    %211 = vector.shape_cast %210 : vector<1x8x1xf32> to vector<8x1xf32>
    %cst_142 = arith.constant dense<0xFF800000> : vector<8xf32>
    %212 = vector.multi_reduction <maximumf>, %207, %cst_142 [1] : vector<8x16xf32> to vector<8xf32>
    %213 = vector.shape_cast %212 : vector<8xf32> to vector<8x1xf32>
    %214 = arith.maximumf %209, %213 : vector<8x1xf32>
    %215 = arith.subf %209, %214 : vector<8x1xf32>
    %216 = math.exp %215 : vector<8x1xf32>
    %217 = vector.broadcast %214 : vector<8x1xf32> to vector<8x16xf32>
    %218 = arith.subf %207, %217 : vector<8x16xf32>
    %219 = math.exp %218 : vector<8x16xf32>
    %220 = arith.mulf %216, %211 : vector<8x1xf32>
    %cst_143 = arith.constant dense<0.000000e+00> : vector<8xf32>
    %221 = vector.multi_reduction <add>, %219, %cst_143 [1] : vector<8x16xf32> to vector<8xf32>
    %222 = vector.shape_cast %221 : vector<8xf32> to vector<8x1xf32>
    %223 = arith.addf %220, %222 : vector<8x1xf32>
    %cst_144 = arith.constant dense<0.000000e+00> : vector<8x8xf32>
    %224 = tpu.matmul %219, %206, %cst_144 {dimension_numbers = #tpu.dot_dimension_numbers<[1], [0], [0], [1], [0, 0, 1, 1], [], []>} : vector<8x16xf32>, vector<16x8xf32>, vector<8x8xf32> -> vector<8x8xf32>
    %c8_145 = arith.constant 8 : index
    %c16_146 = arith.constant 16 : index
    %225 = vector.load %arg12[%c8_145, %c16_146] : memref<16x32xf32, #tpu.memory_space<vmem>>, vector<8x8xf32>
    %226 = vector.broadcast %216 : vector<8x1xf32> to vector<8x8xf32>
    %227 = arith.mulf %226, %225 : vector<8x8xf32>
    %228 = arith.addf %227, %224 : vector<8x8xf32>
    %c8_147 = arith.constant 8 : index
    %c16_148 = arith.constant 16 : index
    %229 = vector.load %arg12[%c8_147, %c16_148] : memref<16x32xf32, #tpu.memory_space<vmem>>, vector<8x8xf32>
    tpu.vector_store %arg12[%c8_147, %c16_148], %228 {strides = array<i32>} : memref<16x32xf32, #tpu.memory_space<vmem>>, vector<8x8xf32>,
    %c2_149 = arith.constant 2 : index
    %c8_150 = arith.constant 8 : index
    %c0_151 = arith.constant 0 : index
    %230 = vector.load %arg13[%c2_149, %c8_150, %c0_151] : memref<4x16x1xf32, #tpu.memory_space<vmem>>, vector<1x8x1xf32>
    %231 = vector.shape_cast %230 : vector<1x8x1xf32> to vector<8x1xf32>
    %232 = vector.shape_cast %214 : vector<8x1xf32> to vector<1x8x1xf32>
    tpu.vector_store %arg13[%c2_149, %c8_150, %c0_151], %232 {strides = array<i32>} : memref<4x16x1xf32, #tpu.memory_space<vmem>>, vector<1x8x1xf32>,
    %c2_152 = arith.constant 2 : index
    %c8_153 = arith.constant 8 : index
    %c0_154 = arith.constant 0 : index
    %233 = vector.load %arg14[%c2_152, %c8_153, %c0_154] : memref<4x16x1xf32, #tpu.memory_space<vmem>>, vector<1x8x1xf32>
    %234 = vector.shape_cast %233 : vector<1x8x1xf32> to vector<8x1xf32>
    %235 = vector.shape_cast %223 : vector<8x1xf32> to vector<1x8x1xf32>
    tpu.vector_store %arg14[%c2_152, %c8_153, %c0_154], %235 {strides = array<i32>} : memref<4x16x1xf32, #tpu.memory_space<vmem>>, vector<1x8x1xf32>,
    %c8_155 = arith.constant 8 : index
    %c24_156 = arith.constant 24 : index
    %236 = vector.load %arg11[%c8_155, %c24_156] : memref<16x32xf32, #tpu.memory_space<vmem>>, vector<8x8xf32>
    %237 = vector.extract_strided_slice %10 {offsets = [16, 24], sizes = [16, 8], strides = [1, 1]} : vector<32x32xf32> to vector<16x8xf32>
    %238 = vector.extract_strided_slice %11 {offsets = [16, 24], sizes = [16, 8], strides = [1, 1]} : vector<32x32xf32> to vector<16x8xf32>
    "tpu.trace_start"() <{level = 10 : i32, message = "qd,kd->qk"}> : () -> ()
    %cst_157 = arith.constant dense<0.000000e+00> : vector<8x16xf32>
    %239 = tpu.matmul %236, %237, %cst_157 {dimension_numbers = #tpu.dot_dimension_numbers<[1], [1], [0], [0], [0, 0, 1, 0], [], []>} : vector<8x8xf32>, vector<16x8xf32>, vector<8x16xf32> -> vector<8x16xf32>
    "tpu.trace_stop"() : () -> ()
    %c3_158 = arith.constant 3 : index
    %c8_159 = arith.constant 8 : index
    %c0_160 = arith.constant 0 : index
    %240 = vector.load %arg13[%c3_158, %c8_159, %c0_160] : memref<4x16x1xf32, #tpu.memory_space<vmem>>, vector<1x8x1xf32>
    %241 = vector.shape_cast %240 : vector<1x8x1xf32> to vector<8x1xf32>
    %c3_161 = arith.constant 3 : index
    %c8_162 = arith.constant 8 : index
    %c0_163 = arith.constant 0 : index
    %242 = vector.load %arg14[%c3_161, %c8_162, %c0_163] : memref<4x16x1xf32, #tpu.memory_space<vmem>>, vector<1x8x1xf32>
    %243 = vector.shape_cast %242 : vector<1x8x1xf32> to vector<8x1xf32>
    %cst_164 = arith.constant dense<0xFF800000> : vector<8xf32>
    %244 = vector.multi_reduction <maximumf>, %239, %cst_164 [1] : vector<8x16xf32> to vector<8xf32>
    %245 = vector.shape_cast %244 : vector<8xf32> to vector<8x1xf32>
    %246 = arith.maximumf %241, %245 : vector<8x1xf32>
    %247 = arith.subf %241, %246 : vector<8x1xf32>
    %248 = math.exp %247 : vector<8x1xf32>
    %249 = vector.broadcast %246 : vector<8x1xf32> to vector<8x16xf32>
    %250 = arith.subf %239, %249 : vector<8x16xf32>
    %251 = math.exp %250 : vector<8x16xf32>
    %252 = arith.mulf %248, %243 : vector<8x1xf32>
    %cst_165 = arith.constant dense<0.000000e+00> : vector<8xf32>
    %253 = vector.multi_reduction <add>, %251, %cst_165 [1] : vector<8x16xf32> to vector<8xf32>
    %254 = vector.shape_cast %253 : vector<8xf32> to vector<8x1xf32>
    %255 = arith.addf %252, %254 : vector<8x1xf32>
    %cst_166 = arith.constant dense<0.000000e+00> : vector<8x8xf32>
    %256 = tpu.matmul %251, %238, %cst_166 {dimension_numbers = #tpu.dot_dimension_numbers<[1], [0], [0], [1], [0, 0, 1, 1], [], []>} : vector<8x16xf32>, vector<16x8xf32>, vector<8x8xf32> -> vector<8x8xf32>
    %c8_167 = arith.constant 8 : index
    %c24_168 = arith.constant 24 : index
    %257 = vector.load %arg12[%c8_167, %c24_168] : memref<16x32xf32, #tpu.memory_space<vmem>>, vector<8x8xf32>
    %258 = vector.broadcast %248 : vector<8x1xf32> to vector<8x8xf32>
    %259 = arith.mulf %258, %257 : vector<8x8xf32>
    %260 = arith.addf %259, %256 : vector<8x8xf32>
    %c8_169 = arith.constant 8 : index
    %c24_170 = arith.constant 24 : index
    %261 = vector.load %arg12[%c8_169, %c24_170] : memref<16x32xf32, #tpu.memory_space<vmem>>, vector<8x8xf32>
    tpu.vector_store %arg12[%c8_169, %c24_170], %260 {strides = array<i32>} : memref<16x32xf32, #tpu.memory_space<vmem>>, vector<8x8xf32>,
    %c3_171 = arith.constant 3 : index
    %c8_172 = arith.constant 8 : index
    %c0_173 = arith.constant 0 : index
    %262 = vector.load %arg13[%c3_171, %c8_172, %c0_173] : memref<4x16x1xf32, #tpu.memory_space<vmem>>, vector<1x8x1xf32>
    %263 = vector.shape_cast %262 : vector<1x8x1xf32> to vector<8x1xf32>
    %264 = vector.shape_cast %246 : vector<8x1xf32> to vector<1x8x1xf32>
    tpu.vector_store %arg13[%c3_171, %c8_172, %c0_173], %264 {strides = array<i32>} : memref<4x16x1xf32, #tpu.memory_space<vmem>>, vector<1x8x1xf32>,
    %c3_174 = arith.constant 3 : index
    %c8_175 = arith.constant 8 : index
    %c0_176 = arith.constant 0 : index
    %265 = vector.load %arg14[%c3_174, %c8_175, %c0_176] : memref<4x16x1xf32, #tpu.memory_space<vmem>>, vector<1x8x1xf32>
    %266 = vector.shape_cast %265 : vector<1x8x1xf32> to vector<8x1xf32>
    %267 = vector.shape_cast %255 : vector<8x1xf32> to vector<1x8x1xf32>
    tpu.vector_store %arg14[%c3_174, %c8_175, %c0_176], %267 {strides = array<i32>} : memref<4x16x1xf32, #tpu.memory_space<vmem>>, vector<1x8x1xf32>,
    %c0_i32_177 = arith.constant 0 : i32
    %268 = arith.cmpi eq, %arg1, %c0_i32_177 : i32
    %269 = arith.extui %268 : i1 to i32
    %c0_i32_178 = arith.constant 0 : i32
    %270 = arith.cmpi ne, %269, %c0_i32_178 : i32
    scf.if %270 {
      %c0_179 = arith.constant 0 : index
      %c0_180 = arith.constant 0 : index
      %271 = vector.load %arg12[%c0_179, %c0_180] : memref<16x32xf32, #tpu.memory_space<vmem>>, vector<16x8xf32>
      %c0_181 = arith.constant 0 : index
      %c0_182 = arith.constant 0 : index
      %c0_183 = arith.constant 0 : index
      %272 = vector.load %arg14[%c0_181, %c0_182, %c0_183] : memref<4x16x1xf32, #tpu.memory_space<vmem>>, vector<1x16x1xf32>
      %273 = vector.shape_cast %272 : vector<1x16x1xf32> to vector<16x1xf32>
      %274 = tpu.reciprocal %273 : vector<16x1xf32> -> vector<16x1xf32>
      %275 = vector.broadcast %274 : vector<16x1xf32> to vector<16x8xf32>
      %276 = arith.mulf %271, %275 : vector<16x8xf32>
      %c0_184 = arith.constant 0 : index
      %c0_185 = arith.constant 0 : index
      %277 = vector.load %arg12[%c0_184, %c0_185] : memref<16x32xf32, #tpu.memory_space<vmem>>, vector<16x8xf32>
      tpu.vector_store %arg12[%c0_184, %c0_185], %276 {strides = array<i32>} : memref<16x32xf32, #tpu.memory_space<vmem>>, vector<16x8xf32>,
      %c0_186 = arith.constant 0 : index
      %c8_187 = arith.constant 8 : index
      %278 = vector.load %arg12[%c0_186, %c8_187] : memref<16x32xf32, #tpu.memory_space<vmem>>, vector<16x8xf32>
      %c1_188 = arith.constant 1 : index
      %c0_189 = arith.constant 0 : index
      %c0_190 = arith.constant 0 : index
      %279 = vector.load %arg14[%c1_188, %c0_189, %c0_190] : memref<4x16x1xf32, #tpu.memory_space<vmem>>, vector<1x16x1xf32>
      %280 = vector.shape_cast %279 : vector<1x16x1xf32> to vector<16x1xf32>
      %281 = tpu.reciprocal %280 : vector<16x1xf32> -> vector<16x1xf32>
      %282 = vector.broadcast %281 : vector<16x1xf32> to vector<16x8xf32>
      %283 = arith.mulf %278, %282 : vector<16x8xf32>
      %c0_191 = arith.constant 0 : index
      %c8_192 = arith.constant 8 : index
      %284 = vector.load %arg12[%c0_191, %c8_192] : memref<16x32xf32, #tpu.memory_space<vmem>>, vector<16x8xf32>
      tpu.vector_store %arg12[%c0_191, %c8_192], %283 {strides = array<i32>} : memref<16x32xf32, #tpu.memory_space<vmem>>, vector<16x8xf32>,
      %c0_193 = arith.constant 0 : index
      %c16_194 = arith.constant 16 : index
      %285 = vector.load %arg12[%c0_193, %c16_194] : memref<16x32xf32, #tpu.memory_space<vmem>>, vector<16x8xf32>
      %c2_195 = arith.constant 2 : index
      %c0_196 = arith.constant 0 : index
      %c0_197 = arith.constant 0 : index
      %286 = vector.load %arg14[%c2_195, %c0_196, %c0_197] : memref<4x16x1xf32, #tpu.memory_space<vmem>>, vector<1x16x1xf32>
      %287 = vector.shape_cast %286 : vector<1x16x1xf32> to vector<16x1xf32>
      %288 = tpu.reciprocal %287 : vector<16x1xf32> -> vector<16x1xf32>
      %289 = vector.broadcast %288 : vector<16x1xf32> to vector<16x8xf32>
      %290 = arith.mulf %285, %289 : vector<16x8xf32>
      %c0_198 = arith.constant 0 : index
      %c16_199 = arith.constant 16 : index
      %291 = vector.load %arg12[%c0_198, %c16_199] : memref<16x32xf32, #tpu.memory_space<vmem>>, vector<16x8xf32>
      tpu.vector_store %arg12[%c0_198, %c16_199], %290 {strides = array<i32>} : memref<16x32xf32, #tpu.memory_space<vmem>>, vector<16x8xf32>,
      %c0_200 = arith.constant 0 : index
      %c24_201 = arith.constant 24 : index
      %292 = vector.load %arg12[%c0_200, %c24_201] : memref<16x32xf32, #tpu.memory_space<vmem>>, vector<16x8xf32>
      %c3_202 = arith.constant 3 : index
      %c0_203 = arith.constant 0 : index
      %c0_204 = arith.constant 0 : index
      %293 = vector.load %arg14[%c3_202, %c0_203, %c0_204] : memref<4x16x1xf32, #tpu.memory_space<vmem>>, vector<1x16x1xf32>
      %294 = vector.shape_cast %293 : vector<1x16x1xf32> to vector<16x1xf32>
      %295 = tpu.reciprocal %294 : vector<16x1xf32> -> vector<16x1xf32>
      %296 = vector.broadcast %295 : vector<16x1xf32> to vector<16x8xf32>
      %297 = arith.mulf %292, %296 : vector<16x8xf32>
      %c0_205 = arith.constant 0 : index
      %c24_206 = arith.constant 24 : index
      %298 = vector.load %arg12[%c0_205, %c24_206] : memref<16x32xf32, #tpu.memory_space<vmem>>, vector<16x8xf32>
      tpu.vector_store %arg12[%c0_205, %c24_206], %297 {strides = array<i32>} : memref<16x32xf32, #tpu.memory_space<vmem>>, vector<16x8xf32>,
      %c0_207 = arith.constant 0 : index
      %c0_208 = arith.constant 0 : index
      %299 = vector.load %arg12[%c0_207, %c0_208] : memref<16x32xf32, #tpu.memory_space<vmem>>, vector<16x32xf32>
      %c0_209 = arith.constant 0 : index
      %c0_210 = arith.constant 0 : index
      %c0_211 = arith.constant 0 : index
      %300 = vector.load %arg2[%c0_209, %c0_210, %c0_211] : memref<2x8x32xf32, #tpu.memory_space<vmem>>, vector<2x8x32xf32>
      %301 = vector.shape_cast %300 : vector<2x8x32xf32> to vector<16x32xf32>
      %c0_212 = arith.constant 0 : index
      %c0_213 = arith.constant 0 : index
      %302 = vector.load %arg6[%c0_212, %c0_213] : memref<32x32xf32, #tpu.memory_space<vmem>>, vector<32x32xf32>
      %cst_214 = arith.constant dense<0.000000e+00> : vector<16x32xf32>
      %303 = tpu.matmul %299, %302, %cst_214 {dimension_numbers = #tpu.dot_dimension_numbers<[1], [0], [0], [1], [0, 0, 1, 1], [], []>} : vector<16x32xf32>, vector<32x32xf32>, vector<16x32xf32> -> vector<16x32xf32>
      %c0_215 = arith.constant 0 : index
      %c0_216 = arith.constant 0 : index
      %304 = vector.load %arg9[%c0_215, %c0_216] : memref<1x32xf32, #tpu.memory_space<vmem>>, vector<1x32xf32>
      %305 = vector.broadcast %304 : vector<1x32xf32> to vector<16x32xf32>
      %306 = arith.addf %303, %305 : vector<16x32xf32>
      %307 = arith.addf %306, %301 : vector<16x32xf32>
      %308 = vector.shape_cast %307 : vector<16x32xf32> to vector<2x8x32xf32>
      %c0_217 = arith.constant 0 : index
      %c0_218 = arith.constant 0 : index
      %c0_219 = arith.constant 0 : index
      %309 = vector.load %arg10[%c0_217, %c0_218, %c0_219] : memref<2x8x32xf32, #tpu.memory_space<vmem>>, vector<2x8x32xf32>
      tpu.vector_store %arg10[%c0_217, %c0_218, %c0_219], %308 {strides = array<i32>} : memref<2x8x32xf32, #tpu.memory_space<vmem>>, vector<2x8x32xf32>,
    } else {
    }
    return
  }
  func.func @transform_0(%arg0: i32, %arg1: i32) -> (i32, i32, i32) {
    %c0_i32 = arith.constant 0 : i32
    %c0_i32_0 = arith.constant 0 : i32
    %c0_i32_1 = arith.constant 0 : i32
    return %arg0, %c0_i32, %c0_i32_0 : i32, i32, i32
  }
  func.func @transform_1(%arg0: i32, %arg1: i32) -> (i32, i32, i32) {
    %c0_i32 = arith.constant 0 : i32
    %c0_i32_0 = arith.constant 0 : i32
    return %arg0, %arg1, %c0_i32 : i32, i32, i32
  }
  func.func @transform_2(%arg0: i32, %arg1: i32) -> (i32, i32) {
    %c0_i32 = arith.constant 0 : i32
    %c0_i32_0 = arith.constant 0 : i32
    %c0_i32_1 = arith.constant 0 : i32
    return %c0_i32, %c0_i32_0 : i32, i32
  }
  func.func @transform_3(%arg0: i32, %arg1: i32) -> (i32, i32) {
    %c0_i32 = arith.constant 0 : i32
    %c0_i32_0 = arith.constant 0 : i32
    %c0_i32_1 = arith.constant 0 : i32
    return %c0_i32, %c0_i32_0 : i32, i32
  }
  func.func @transform_4(%arg0: i32, %arg1: i32) -> (i32, i32) {
    %c0_i32 = arith.constant 0 : i32
    %c0_i32_0 = arith.constant 0 : i32
    %c0_i32_1 = arith.constant 0 : i32
    return %c0_i32, %c0_i32_0 : i32, i32
  }
  func.func @transform_5(%arg0: i32, %arg1: i32) -> (i32, i32) {
    %c0_i32 = arith.constant 0 : i32
    %c0_i32_0 = arith.constant 0 : i32
    %c0_i32_1 = arith.constant 0 : i32
    return %c0_i32, %c0_i32_0 : i32, i32
  }
  func.func @transform_6(%arg0: i32, %arg1: i32) -> (i32, i32) {
    %c0_i32 = arith.constant 0 : i32
    %c0_i32_0 = arith.constant 0 : i32
    %c0_i32_1 = arith.constant 0 : i32
    return %c0_i32, %c0_i32_0 : i32, i32
  }
  func.func @transform_7(%arg0: i32, %arg1: i32) -> (i32, i32) {
    %c0_i32 = arith.constant 0 : i32
    %c0_i32_0 = arith.constant 0 : i32
    %c0_i32_1 = arith.constant 0 : i32
    return %c0_i32, %c0_i32_0 : i32, i32
  }
  func.func @transform_8(%arg0: i32, %arg1: i32) -> (i32, i32, i32) {
    %c0_i32 = arith.constant 0 : i32
    %c0_i32_0 = arith.constant 0 : i32
    %c0_i32_1 = arith.constant 0 : i32
    return %arg0, %c0_i32, %c0_i32_0 : i32, i32, i32
  }
}

</mosaic_0001>

<llo_original>
// kernel: tpu_custom_call.1
$region0: #{tpu_custom_call.1}
  #allocation0 [shape = 'u32[]', space=smem, size = 0x4, offset = 0x4, fixed_abs, tag = 'smem constant byte address 0x4 - core index']
  #allocation1 [shape = 'u32[144,128]{1,0:T(1,128)}', space=vmem, size = 0x12000, scoped, tag = 'internal scratch']
  #allocation2 [shape = 'f32[16,32]{1,0:T(8,128)}', space=vmem, size = 0x2000, scoped, tag = 'scratch operand']
  #allocation3 [shape = 'f32[16,32]{1,0:T(8,128)}', space=vmem, size = 0x2000, scoped, tag = 'scratch operand']
  #allocation4 [shape = 'f32[4,16,1]{2,1,0:T(8,128)}', space=vmem, size = 0x8000, scoped, tag = 'scratch operand']
  #allocation5 [shape = 'f32[4,16,1]{2,1,0:T(8,128)}', space=vmem, size = 0x8000, scoped, tag = 'scratch operand']
  %s0 = inlined_call_operand.hbm [shape: f32[2,8,32], index: 0, kind: input, shape index: {}]
  %s1 = inlined_call_operand.hbm [shape: f32[2,16,32], index: 1, kind: input, shape index: {}]
  %s2 = inlined_call_operand.hbm [shape: f32[32,32], index: 2, kind: input, shape index: {}]
  %s3 = inlined_call_operand.hbm [shape: f32[32,64], index: 3, kind: input, shape index: {}]
  %s4 = inlined_call_operand.hbm [shape: f32[32,32], index: 4, kind: input, shape index: {}]
  %s5 = inlined_call_operand.vmem [shape: f32[1,32], index: 5, kind: input, shape index: {}]
  %s6 = inlined_call_operand.vmem [shape: f32[1,64], index: 6, kind: input, shape index: {}]
  %s7 = inlined_call_operand.vmem [shape: f32[1,32], index: 7, kind: input, shape index: {}]
  %s8 = inlined_call_operand.hbm [shape: f32[2,8,32], index: 8, kind: output, shape index: {}]
  %s9 = sld [smem:[#allocation0]]
  $region70: #{tpu_custom_call.1} parent=0
    _
  %s11 = ssub.s32 1, %s9
  %s12 = scalar_select 0, %s11, %s9
  $region1: #{tpu_custom_call.1} parent=0
    #allocation6 [shape = 'u8[8192]{0}', space=vmem, size = 0x2000, scoped, tag = 'input window, operand 0, single buffered']
    #allocation7 [shape = 's32[1]{0}', space=sflag, size = 0x4, scoped, tag = 'scoped memory for tpu_custom_call.1']
    #allocation8 [shape = 's32[1]{0}', space=sflag, size = 0x4, scoped, tag = 'scoped memory for tpu_custom_call.1']
    #allocation9 [shape = 'u8[16384]{0}', space=vmem, size = 0x4000, scoped, tag = 'input window, operand 1, single buffered']
    #allocation10 [shape = 's32[1]{0}', space=sflag, size = 0x4, scoped, tag = 'scoped memory for tpu_custom_call.1']
    #allocation11 [shape = 'u8[16384]{0}', space=vmem, size = 0x4000, scoped, tag = 'input window, operand 2, single buffered']
    #allocation12 [shape = 'u8[16384]{0}', space=vmem, size = 0x4000, scoped, tag = 'input window, operand 3, single buffered']
    #allocation13 [shape = 's32[1]{0}', space=sflag, size = 0x4, scoped, tag = 'scoped memory for tpu_custom_call.1']
    #allocation14 [shape = 'u8[16384]{0}', space=vmem, size = 0x4000, scoped, tag = 'input window, operand 4, single buffered']
    #allocation15 [shape = 'u8[8192]{0}', space=vmem, size = 0x2000, scoped, tag = 'output window, operand 0, single buffered']
    %13 = vsyncpa [#allocation7], 0
    %14 = vsyncpa [#allocation10], 0
    %15 = vsyncpa [#allocation13], 0
    %16 = vsyncpa [#allocation8], 0
    // Predicated region
    $region2: #{tpu_custom_call.1} parent=1 // pred_check
      _
    $region3: #{tpu_custom_call.1} parent=1 // pred_check_branch
      %18 = sbr.rel (0) target = $region5
    $region4: #{tpu_custom_call.1} parent=1 // pred_region
      %s20 = ssub.s32 256, 256
      %21 = vsyncadd [#allocation7], %s20
      %s22 = sshll.u32 [#allocation6], 4
      %s23 = int_to_ptr.vmem [resolvable:$true] %s22
      %28 = dma.hbm_to_vmem [thread:$0]  %s0, 256, %s23, [#allocation7], 128, 128, 8
    $region5: #{tpu_custom_call.1} parent=1 // pred_fallthru
      _
    // Predicated region
    $region6: #{tpu_custom_call.1} parent=1 // pred_check
      _
    $region7: #{tpu_custom_call.1} parent=1 // pred_check_branch
      %30 = sbr.rel (0) target = $region9
    $region8: #{tpu_custom_call.1} parent=1 // pred_region
      %s32 = ssub.s32 512, 512
      %33 = vsyncadd [#allocation10], %s32
      %s34 = sshll.u32 [#allocation9], 4
      %s35 = int_to_ptr.vmem [resolvable:$true] %s34
      %40 = dma.hbm_to_vmem [thread:$0]  %s1, 512, %s35, [#allocation10], 128, 128, 8
    $region9: #{tpu_custom_call.1} parent=1 // pred_fallthru
      _
    // Predicated region
    $region10: #{tpu_custom_call.1} parent=1 // pred_check
      _
    $region11: #{tpu_custom_call.1} parent=1 // pred_check_branch
      %42 = sbr.rel (0) target = $region13
    $region12: #{tpu_custom_call.1} parent=1 // pred_region
      %s44 = ssub.s32 512, 512
      %45 = vsyncadd [#allocation10], %s44
      %s46 = sshll.u32 [#allocation11], 4
      %s47 = int_to_ptr.vmem [resolvable:$true] %s46
      %52 = dma.hbm_to_vmem [thread:$0]  %s2, 512, %s47, [#allocation10], 128, 128, 8
    $region13: #{tpu_custom_call.1} parent=1 // pred_fallthru
      _
    // Predicated region
    $region14: #{tpu_custom_call.1} parent=1 // pred_check
      _
    $region15: #{tpu_custom_call.1} parent=1 // pred_check_branch
      %54 = sbr.rel (0) target = $region17
    $region16: #{tpu_custom_call.1} parent=1 // pred_region
      %s56 = ssub.s32 512, 512
      %57 = vsyncadd [#allocation13], %s56
      %s58 = sshll.u32 [#allocation12], 4
      %s59 = int_to_ptr.vmem [resolvable:$true] %s58
      %64 = dma.hbm_to_vmem [thread:$0]  %s3, 512, %s59, [#allocation13], 128, 128, 8
    $region17: #{tpu_custom_call.1} parent=1 // pred_fallthru
      _
    // Predicated region
    $region18: #{tpu_custom_call.1} parent=1 // pred_check
      _
    $region19: #{tpu_custom_call.1} parent=1 // pred_check_branch
      %66 = sbr.rel (0) target = $region21
    $region20: #{tpu_custom_call.1} parent=1 // pred_region
      %s68 = ssub.s32 512, 512
      %69 = vsyncadd [#allocation13], %s68
      %s70 = sshll.u32 [#allocation14], 4
      %s71 = int_to_ptr.vmem [resolvable:$true] %s70
      %76 = dma.hbm_to_vmem [thread:$0]  %s4, 512, %s71, [#allocation13], 128, 128, 8
    $region21: #{tpu_custom_call.1} parent=1 // pred_fallthru
      _
    // Predicated region
    $region22: #{tpu_custom_call.1} parent=1 // pred_check
      _
    $region23: #{tpu_custom_call.1} parent=1 // pred_check_branch
      %78 = sbr.rel (0) target = $region25
    $region24: #{tpu_custom_call.1} parent=1 // pred_region
      _
    $region25: #{tpu_custom_call.1} parent=1 // pred_fallthru
      _
    // Predicated region
    $region26: #{tpu_custom_call.1} parent=1 // pred_check
      _
    $region27: #{tpu_custom_call.1} parent=1 // pred_check_branch
      %80 = sbr.rel (0) target = $region29
    $region28: #{tpu_custom_call.1} parent=1 // pred_region
      _
    $region29: #{tpu_custom_call.1} parent=1 // pred_fallthru
      _
    // Predicated region
    $region30: #{tpu_custom_call.1} parent=1 // pred_check
      _
    $region31: #{tpu_custom_call.1} parent=1 // pred_check_branch
      %82 = sbr.rel (0) target = $region33
    $region32: #{tpu_custom_call.1} parent=1 // pred_region
      _
    $region33: #{tpu_custom_call.1} parent=1 // pred_fallthru
      _
    // Predicated region
    $region34: #{tpu_custom_call.1} parent=1 // pred_check
      _
    $region35: #{tpu_custom_call.1} parent=1 // pred_check_branch
      %84 = sbr.rel (0) target = $region37
    $region36: #{tpu_custom_call.1} parent=1 // pred_region
      %85 = dma.done [#allocation7], 256
    $region37: #{tpu_custom_call.1} parent=1 // pred_fallthru
      _
    // Predicated region
    $region38: #{tpu_custom_call.1} parent=1 // pred_check
      _
    $region39: #{tpu_custom_call.1} parent=1 // pred_check_branch
      %87 = sbr.rel (0) target = $region41
    $region40: #{tpu_custom_call.1} parent=1 // pred_region
      %88 = dma.done [#allocation10], 512
    $region41: #{tpu_custom_call.1} parent=1 // pred_fallthru
      _
    // Predicated region
    $region42: #{tpu_custom_call.1} parent=1 // pred_check
      _
    $region43: #{tpu_custom_call.1} parent=1 // pred_check_branch
      %90 = sbr.rel (0) target = $region45
    $region44: #{tpu_custom_call.1} parent=1 // pred_region
      %91 = dma.done [#allocation10], 512
    $region45: #{tpu_custom_call.1} parent=1 // pred_fallthru
      _
    // Predicated region
    $region46: #{tpu_custom_call.1} parent=1 // pred_check
      _
    $region47: #{tpu_custom_call.1} parent=1 // pred_check_branch
      %93 = sbr.rel (0) target = $region49
    $region48: #{tpu_custom_call.1} parent=1 // pred_region
      %94 = dma.done [#allocation13], 512
    $region49: #{tpu_custom_call.1} parent=1 // pred_fallthru
      _
    // Predicated region
    $region50: #{tpu_custom_call.1} parent=1 // pred_check
      _
    $region51: #{tpu_custom_call.1} parent=1 // pred_check_branch
      %96 = sbr.rel (0) target = $region53
    $region52: #{tpu_custom_call.1} parent=1 // pred_region
      %97 = dma.done [#allocation13], 512
    $region53: #{tpu_custom_call.1} parent=1 // pred_fallthru
      _
    %p98 = scmp.eq.s32.totalorder 0, 0
    // Predicated region
    $region54: #{tpu_custom_call.1} parent=1 // pred_check
      %p99 = pneg %p98
    $region55: #{tpu_custom_call.1} parent=1 // pred_check_branch
      %101 = sbr.rel (%p99) target = $region57
    $region56: #{tpu_custom_call.1} parent=1 // pred_region
      %v102 = vld [vmem:[#allocation6] sm:$0xff]
      %v103 = vld [vmem:[#allocation6 + $0x8] sm:$0xff]
      %v104 = vld [vmem:[#allocation11] sm:$0xff]
      %v105 = vld [vmem:[#allocation11 + $0x8] sm:$0xff]
      %v106 = vld [vmem:[#allocation11 + $0x10] sm:$0xff]
      %v107 = vld [vmem:[#allocation11 + $0x18] sm:$0xff]
      %v108 = vld [vmem:[%s5] sm:$0x1]
      %v110 = vlaneseq
      %v111 = vshrl.u32 %v110, 7
      %v112 = vsub.s32 0, %v111
      %v113 = vrot.slane %v108, %v112
      %vm115 = vcmask 261120
      %v117 = vsel %vm115, %v102, 0
      %v120 = vsel %vm115, %v103, 0
      %122 = vmatprep.subr.mxu0 0.0
      %123 = vmatpush1.msra.mxu0 %v104
      %124 = vmatprep.subr.mxu0 0.0
      %125 = vmatpush1.msra.mxu0 %v105
      %126 = vmatprep.subr.mxu0 0.0
      %127 = vmatpush1.msra.mxu0 %v106
      %128 = vmatprep.subr.mxu0 0.0
      %129 = vmatpush1.msra.mxu0 %v107
      %130 = vmatprep.subr.mxu0 0.0
      %131 = vmatpush1.msra.mxu0 0.0
      %132 = vmatprep.subr.mxu0 0.0
      %133 = vmatpush1.msra.mxu0 0.0
      %134 = vmatprep.subr.mxu0 0.0
      %135 = vmatpush1.msra.mxu0 0.0
      %136 = vmatprep.subr.mxu0 0.0
      %137 = vmatpush1.msra.mxu0 0.0
      %138 = vmatprep.subr.mxu0 0.0
      %139 = vmatpush1.msra.mxu0 0.0
      %140 = vmatprep.subr.mxu0 0.0
      %141 = vmatpush1.msra.mxu0 0.0
      %142 = vmatprep.subr.mxu0 0.0
      %143 = vmatpush1.msra.mxu0 0.0
      %144 = vmatprep.subr.mxu0 0.0
      %145 = vmatpush1.msra.mxu0 0.0
      %146 = vmatprep.subr.mxu0 0.0
      %147 = vmatpush1.msra.mxu0 0.0
      %148 = vmatprep.subr.mxu0 0.0
      %149 = vmatpush1.msra.mxu0 0.0
      %150 = vmatprep.subr.mxu0 0.0
      %151 = vmatpush1.msra.mxu0 0.0
      %152 = vmatprep.subr.mxu0 0.0
      %153 = vmatpush1.msra.mxu0 0.0
      %154 = vmatprep.subr.mxu0 0.0
      %155 = vmatpush1.msra.mxu0 0.0
      %156 = vmatprep.subr.mxu0 0.0
      %157 = vmatpush1.msra.mxu0 0.0
      %158 = vmatprep.subr.mxu0 0.0
      %159 = vmatpush1.msra.mxu0 0.0
      %160 = vmatprep.subr.mxu0 0.0
      %161 = vmatpush1.msra.mxu0 0.0
      %162 = vmatprep.subr.mxu0 0.0
      %163 = vmatpush1.msra.mxu0 0.0
      %164 = vmatprep.subr.mxu0 0.0
      %165 = vmatpush1.msra.mxu0 0.0
      %166 = vmatprep.subr.mxu0 0.0
      %167 = vmatpush1.msra.mxu0 0.0
      %168 = vmatprep.subr.mxu0 0.0
      %169 = vmatpush1.msra.mxu0 0.0
      %170 = vmatprep.subr.mxu0 0.0
      %171 = vmatpush1.msra.mxu0 0.0
      %172 = vmatprep.subr.mxu0 0.0
      %173 = vmatpush1.msra.mxu0 0.0
      %174 = vmatprep.subr.mxu0 0.0
      %175 = vmatpush1.msra.mxu0 0.0
      %176 = vmatprep.subr.mxu0 0.0
      %177 = vmatpush1.msra.mxu0 0.0
      %178 = vmatprep.subr.mxu0 0.0
      %179 = vmatpush1.msra.mxu0 0.0
      %180 = vmatprep.subr.mxu0 0.0
      %181 = vmatpush1.msra.mxu0 0.0
      %182 = vmatprep.subr.mxu0 0.0
      %183 = vmatpush1.msra.mxu0 0.0
      %184 = vmatprep.subr.mxu0 0.0
      %185 = vmatpush1.msra.mxu0 0.0
      %186 = vmatprep.mubr.f32.mxu0 0.0
      %187 = vmatmul.mubr.f32.gmra.mrb[0].mxu0 %v117
      %v188 = vpop.f32.mrb[0].mxu0
      %v189 = vadd.f32 %v113, %v188
      %v190 = vpop.f32.mrb[0].mxu0
      %191 = vmatprep.mubr.f32.mxu0 0.0
      %192 = vmatmul.mubr.f32.gmra.mrb[0].mxu0 %v120
      %v193 = vpop.f32.mrb[0].mxu0
      %v194 = vadd.f32 %v113, %v193
      %v195 = vpop.f32.mrb[0].mxu0
      %196 = vdwg.mxu0
      %197 = vst.msk [vmem:[#allocation2] sm:$0xff] %vm115, %v189
      %198 = vst.msk [vmem:[#allocation2 + $0x8] sm:$0xff] %vm115, %v194
      %199 = vst.msk [vmem:[#allocation3] sm:$0xff] %vm115, 0.0
      %200 = vst.msk [vmem:[#allocation3 + $0x8] sm:$0xff] %vm115, 0.0
      %vm201 = vcmask 7168
      %202 = vst.msk [vmem:[#allocation4] sm:$0xff] %vm201, -inf
      %203 = vst.msk [vmem:[#allocation4 + $0x8] sm:$0xff] %vm201, -inf
      %204 = vst.msk [vmem:[#allocation4 + $0x10] sm:$0xff] %vm201, -inf
      %205 = vst.msk [vmem:[#allocation4 + $0x18] sm:$0xff] %vm201, -inf
      %206 = vst.msk [vmem:[#allocation4 + $0x20] sm:$0xff] %vm201, -inf
      %207 = vst.msk [vmem:[#allocation4 + $0x28] sm:$0xff] %vm201, -inf
      %208 = vst.msk [vmem:[#allocation4 + $0x30] sm:$0xff] %vm201, -inf
      %209 = vst.msk [vmem:[#allocation4 + $0x38] sm:$0xff] %vm201, -inf
      %210 = vst.msk [vmem:[#allocation5] sm:$0xff] %vm201, 0.0
      %211 = vst.msk [vmem:[#allocation5 + $0x8] sm:$0xff] %vm201, 0.0
      %212 = vst.msk [vmem:[#allocation5 + $0x10] sm:$0xff] %vm201, 0.0
      %213 = vst.msk [vmem:[#allocation5 + $0x18] sm:$0xff] %vm201, 0.0
      %214 = vst.msk [vmem:[#allocation5 + $0x20] sm:$0xff] %vm201, 0.0
      %215 = vst.msk [vmem:[#allocation5 + $0x28] sm:$0xff] %vm201, 0.0
      %216 = vst.msk [vmem:[#allocation5 + $0x30] sm:$0xff] %vm201, 0.0
      %217 = vst.msk [vmem:[#allocation5 + $0x38] sm:$0xff] %vm201, 0.0
    $region57: #{tpu_custom_call.1} parent=1 // pred_fallthru
      _
    %v218 = vld [vmem:[#allocation9] sm:$0xff]
    %v219 = vld [vmem:[#allocation9 + $0x8] sm:$0xff]
    %v220 = vld [vmem:[#allocation9 + $0x10] sm:$0xff]
    %v221 = vld [vmem:[#allocation9 + $0x18] sm:$0xff]
    %v222 = vld [vmem:[#allocation12] sm:$0xff]
    %v223 = vld [vmem:[#allocation12 + $0x8] sm:$0xff]
    %v224 = vld [vmem:[#allocation12 + $0x10] sm:$0xff]
    %v225 = vld [vmem:[#allocation12 + $0x18] sm:$0xff]
    %v226 = vld [vmem:[%s6] sm:$0x1]
    %v228 = vlaneseq
    %v229 = vshrl.u32 %v228, 7
    %v230 = vsub.s32 0, %v229
    %v231 = vrot.slane %v226, %v230
    %vm233 = vcmask 261120
    %v235 = vsel %vm233, %v218, 0
    %v238 = vsel %vm233, %v219, 0
    %v241 = vsel %vm233, %v220, 0
    %v244 = vsel %vm233, %v221, 0
    %246 = vmatprep.subr.mxu0 0.0
    %247 = vmatpush1.msra.mxu0 %v222
    %248 = vmatprep.subr.mxu0 0.0
    %249 = vmatpush1.msra.mxu0 %v223
    %250 = vmatprep.subr.mxu0 0.0
    %251 = vmatpush1.msra.mxu0 %v224
    %252 = vmatprep.subr.mxu0 0.0
    %253 = vmatpush1.msra.mxu0 %v225
    %254 = vmatprep.subr.mxu0 0.0
    %255 = vmatpush1.msra.mxu0 0.0
    %256 = vmatprep.subr.mxu0 0.0
    %257 = vmatpush1.msra.mxu0 0.0
    %258 = vmatprep.subr.mxu0 0.0
    %259 = vmatpush1.msra.mxu0 0.0
    %260 = vmatprep.subr.mxu0 0.0
    %261 = vmatpush1.msra.mxu0 0.0
    %262 = vmatprep.subr.mxu0 0.0
    %263 = vmatpush1.msra.mxu0 0.0
    %264 = vmatprep.subr.mxu0 0.0
    %265 = vmatpush1.msra.mxu0 0.0
    %266 = vmatprep.subr.mxu0 0.0
    %267 = vmatpush1.msra.mxu0 0.0
    %268 = vmatprep.subr.mxu0 0.0
    %269 = vmatpush1.msra.mxu0 0.0
    %270 = vmatprep.subr.mxu0 0.0
    %271 = vmatpush1.msra.mxu0 0.0
    %272 = vmatprep.subr.mxu0 0.0
    %273 = vmatpush1.msra.mxu0 0.0
    %274 = vmatprep.subr.mxu0 0.0
    %275 = vmatpush1.msra.mxu0 0.0
    %276 = vmatprep.subr.mxu0 0.0
    %277 = vmatpush1.msra.mxu0 0.0
    %278 = vmatprep.subr.mxu0 0.0
    %279 = vmatpush1.msra.mxu0 0.0
    %280 = vmatprep.subr.mxu0 0.0
    %281 = vmatpush1.msra.mxu0 0.0
    %282 = vmatprep.subr.mxu0 0.0
    %283 = vmatpush1.msra.mxu0 0.0
    %284 = vmatprep.subr.mxu0 0.0
    %285 = vmatpush1.msra.mxu0 0.0
    %286 = vmatprep.subr.mxu0 0.0
    %287 = vmatpush1.msra.mxu0 0.0
    %288 = vmatprep.subr.mxu0 0.0
    %289 = vmatpush1.msra.mxu0 0.0
    %290 = vmatprep.subr.mxu0 0.0
    %291 = vmatpush1.msra.mxu0 0.0
    %292 = vmatprep.subr.mxu0 0.0
    %293 = vmatpush1.msra.mxu0 0.0
    %294 = vmatprep.subr.mxu0 0.0
    %295 = vmatpush1.msra.mxu0 0.0
    %296 = vmatprep.subr.mxu0 0.0
    %297 = vmatpush1.msra.mxu0 0.0
    %298 = vmatprep.subr.mxu0 0.0
    %299 = vmatpush1.msra.mxu0 0.0
    %300 = vmatprep.subr.mxu0 0.0
    %301 = vmatpush1.msra.mxu0 0.0
    %302 = vmatprep.subr.mxu0 0.0
    %303 = vmatpush1.msra.mxu0 0.0
    %304 = vmatprep.subr.mxu0 0.0
    %305 = vmatpush1.msra.mxu0 0.0
    %306 = vmatprep.subr.mxu0 0.0
    %307 = vmatpush1.msra.mxu0 0.0
    %308 = vmatprep.subr.mxu0 0.0
    %309 = vmatpush1.msra.mxu0 0.0
    %310 = vmatprep.mubr.f32.mxu0 0.0
    %311 = vmatmul.mubr.f32.gmra.mrb[0].mxu0 %v235
    %v312 = vpop.f32.mrb[0].mxu0
    %v313 = vadd.f32 %v231, %v312
    %v314 = vpop.f32.mrb[0].mxu0
    %315 = vmatprep.mubr.f32.mxu0 0.0
    %316 = vmatmul.mubr.f32.gmra.mrb[0].mxu0 %v238
    %v317 = vpop.f32.mrb[0].mxu0
    %v318 = vadd.f32 %v231, %v317
    %v319 = vpop.f32.mrb[0].mxu0
    %320 = vmatprep.mubr.f32.mxu0 0.0
    %321 = vmatmul.mubr.f32.gmra.mrb[0].mxu0 %v241
    %v322 = vpop.f32.mrb[0].mxu0
    %v323 = vadd.f32 %v231, %v322
    %v324 = vpop.f32.mrb[0].mxu0
    %325 = vmatprep.mubr.f32.mxu0 0.0
    %326 = vmatmul.mubr.f32.gmra.mrb[0].mxu0 %v244
    %v327 = vpop.f32.mrb[0].mxu0
    %v328 = vadd.f32 %v231, %v327
    %v329 = vpop.f32.mrb[0].mxu0
    %330 = vdwg.mxu0
    %v331 = vld [vmem:[#allocation2] sm:$0xff]
    %vm332 = vcmask 64512
    %v334 = vsel %vm332, %v331, 0
    %v337 = vsel %vm332, %v313, 0
    %v340 = vsel %vm332, %v318, 0
    %342 = vmatprep.subr.mxu0 0.0
    %343 = vmatpush1.xpose.msra.mxu0 %v337
    %344 = vmatprep.subr.mxu0 0.0
    %345 = vmatpush1.xpose.msra.mxu0 %v340
    %346 = vmatprep.subr.mxu0 0.0
    %347 = vmatpush1.xpose.msra.mxu0 0.0
    %348 = vmatprep.subr.mxu0 0.0
    %349 = vmatpush1.xpose.msra.mxu0 0.0
    %350 = vmatprep.subr.mxu0 0.0
    %351 = vmatpush1.xpose.msra.mxu0 0.0
    %352 = vmatprep.subr.mxu0 0.0
    %353 = vmatpush1.xpose.msra.mxu0 0.0
    %354 = vmatprep.subr.mxu0 0.0
    %355 = vmatpush1.xpose.msra.mxu0 0.0
    %356 = vmatprep.subr.mxu0 0.0
    %357 = vmatpush1.xpose.msra.mxu0 0.0
    %358 = vmatprep.subr.mxu0 0.0
    %359 = vmatpush1.xpose.msra.mxu0 0.0
    %360 = vmatprep.subr.mxu0 0.0
    %361 = vmatpush1.xpose.msra.mxu0 0.0
    %362 = vmatprep.subr.mxu0 0.0
    %363 = vmatpush1.xpose.msra.mxu0 0.0
    %364 = vmatprep.subr.mxu0 0.0
    %365 = vmatpush1.xpose.msra.mxu0 0.0
    %366 = vmatprep.subr.mxu0 0.0
    %367 = vmatpush1.xpose.msra.mxu0 0.0
    %368 = vmatprep.subr.mxu0 0.0
    %369 = vmatpush1.xpose.msra.mxu0 0.0
    %370 = vmatprep.subr.mxu0 0.0
    %371 = vmatpush1.xpose.msra.mxu0 0.0
    %372 = vmatprep.subr.mxu0 0.0
    %373 = vmatpush1.xpose.msra.mxu0 0.0
    %374 = vmatprep.subr.mxu0 0.0
    %375 = vmatpush1.xpose.msra.mxu0 0.0
    %376 = vmatprep.subr.mxu0 0.0
    %377 = vmatpush1.xpose.msra.mxu0 0.0
    %378 = vmatprep.subr.mxu0 0.0
    %379 = vmatpush1.xpose.msra.mxu0 0.0
    %380 = vmatprep.subr.mxu0 0.0
    %381 = vmatpush1.xpose.msra.mxu0 0.0
    %382 = vmatprep.subr.mxu0 0.0
    %383 = vmatpush1.xpose.msra.mxu0 0.0
    %384 = vmatprep.subr.mxu0 0.0
    %385 = vmatpush1.xpose.msra.mxu0 0.0
    %386 = vmatprep.subr.mxu0 0.0
    %387 = vmatpush1.xpose.msra.mxu0 0.0
    %388 = vmatprep.subr.mxu0 0.0
    %389 = vmatpush1.xpose.msra.mxu0 0.0
    %390 = vmatprep.subr.mxu0 0.0
    %391 = vmatpush1.xpose.msra.mxu0 0.0
    %392 = vmatprep.subr.mxu0 0.0
    %393 = vmatpush1.xpose.msra.mxu0 0.0
    %394 = vmatprep.subr.mxu0 0.0
    %395 = vmatpush1.xpose.msra.mxu0 0.0
    %396 = vmatprep.subr.mxu0 0.0
    %397 = vmatpush1.xpose.msra.mxu0 0.0
    %398 = vmatprep.subr.mxu0 0.0
    %399 = vmatpush1.xpose.msra.mxu0 0.0
    %400 = vmatprep.subr.mxu0 0.0
    %401 = vmatpush1.xpose.msra.mxu0 0.0
    %402 = vmatprep.subr.mxu0 0.0
    %403 = vmatpush1.xpose.msra.mxu0 0.0
    %404 = vmatprep.subr.mxu0 0.0
    %405 = vmatpush1.xpose.msra.mxu0 0.0
    %406 = vmatprep.mubr.f32.mxu0 0.0
    %407 = vmatmul.mubr.f32.gmra.mrb[0].mxu0 %v334
    %v408 = vpop.f32.mrb[0].mxu0
    %v409 = vadd.f32 0.0, %v408
    %v410 = vpop.f32.mrb[0].mxu0
    %411 = vdwg.mxu0
    %v412 = vld [vmem:[#allocation4] sm:$0xff]
    %v413 = vld [vmem:[#allocation5] sm:$0xff]
    %vm414 = vcmask 130048
    %v415 = vsel %vm414, %v409, -inf
    %416 = vmax.xlane.f32.xlu0 %v415
    %v417 = vpop.xlane.xlu0 %416
    %v418 = vmax.f32 %v412, %v417
    %v419 = vsub.f32 %v412, %v418
    %v420 = vmul.f32 %v419, 1.442695
    %v421 = vpow.pop %v420
    %423 = vset.pattern.permute.xlu0 0
    %424 = vperm.xlu0 %423, %v418
    %v425 = vpop.permute.xlu0 %424
    %v427 = vsub.f32 %v409, %v425
    %v428 = vmul.f32 %v427, 1.442695
    %v429 = vpow.pop %v428
    %v430 = vmul.f32 %v421, %v413
    %v431 = vsel %vm414, %v429, 0.0
    %432 = vadd.xlane.f32.xlu0 %v431
    %v433 = vpop.xlane.xlu0 %432
    %v434 = vadd.f32 %v430, %v433
    %435 = vrot.lane.b32.xlu0 %v313, 96
    %v436 = vpop.permute.xlu0 %435
    %437 = vrot.lane.b32.xlu0 %v318, 96
    %v438 = vpop.permute.xlu0 %437
    %v442 = vsel %vm414, %v429, 0
    %444 = vmatprep.subr.mxu0 0.0
    %445 = vmatpush1.msra.mxu0 %v436
    %446 = vmatprep.subr.mxu0 0.0
    %447 = vmatpush1.msra.mxu0 %v438
    %448 = vmatprep.subr.mxu0 0.0
    %449 = vmatpush1.msra.mxu0 0.0
    %450 = vmatprep.subr.mxu0 0.0
    %451 = vmatpush1.msra.mxu0 0.0
    %452 = vmatprep.subr.mxu0 0.0
    %453 = vmatpush1.msra.mxu0 0.0
    %454 = vmatprep.subr.mxu0 0.0
    %455 = vmatpush1.msra.mxu0 0.0
    %456 = vmatprep.subr.mxu0 0.0
    %457 = vmatpush1.msra.mxu0 0.0
    %458 = vmatprep.subr.mxu0 0.0
    %459 = vmatpush1.msra.mxu0 0.0
    %460 = vmatprep.subr.mxu0 0.0
    %461 = vmatpush1.msra.mxu0 0.0
    %462 = vmatprep.subr.mxu0 0.0
    %463 = vmatpush1.msra.mxu0 0.0
    %464 = vmatprep.subr.mxu0 0.0
    %465 = vmatpush1.msra.mxu0 0.0
    %466 = vmatprep.subr.mxu0 0.0
    %467 = vmatpush1.msra.mxu0 0.0
    %468 = vmatprep.subr.mxu0 0.0
    %469 = vmatpush1.msra.mxu0 0.0
    %470 = vmatprep.subr.mxu0 0.0
    %471 = vmatpush1.msra.mxu0 0.0
    %472 = vmatprep.subr.mxu0 0.0
    %473 = vmatpush1.msra.mxu0 0.0
    %474 = vmatprep.subr.mxu0 0.0
    %475 = vmatpush1.msra.mxu0 0.0
    %476 = vmatprep.subr.mxu0 0.0
    %477 = vmatpush1.msra.mxu0 0.0
    %478 = vmatprep.subr.mxu0 0.0
    %479 = vmatpush1.msra.mxu0 0.0
    %480 = vmatprep.subr.mxu0 0.0
    %481 = vmatpush1.msra.mxu0 0.0
    %482 = vmatprep.subr.mxu0 0.0
    %483 = vmatpush1.msra.mxu0 0.0
    %484 = vmatprep.subr.mxu0 0.0
    %485 = vmatpush1.msra.mxu0 0.0
    %486 = vmatprep.subr.mxu0 0.0
    %487 = vmatpush1.msra.mxu0 0.0
    %488 = vmatprep.subr.mxu0 0.0
    %489 = vmatpush1.msra.mxu0 0.0
    %490 = vmatprep.subr.mxu0 0.0
    %491 = vmatpush1.msra.mxu0 0.0
    %492 = vmatprep.subr.mxu0 0.0
    %493 = vmatpush1.msra.mxu0 0.0
    %494 = vmatprep.subr.mxu0 0.0
    %495 = vmatpush1.msra.mxu0 0.0
    %496 = vmatprep.subr.mxu0 0.0
    %497 = vmatpush1.msra.mxu0 0.0
    %498 = vmatprep.subr.mxu0 0.0
    %499 = vmatpush1.msra.mxu0 0.0
    %500 = vmatprep.subr.mxu0 0.0
    %501 = vmatpush1.msra.mxu0 0.0
    %502 = vmatprep.subr.mxu0 0.0
    %503 = vmatpush1.msra.mxu0 0.0
    %504 = vmatprep.subr.mxu0 0.0
    %505 = vmatpush1.msra.mxu0 0.0
    %506 = vmatprep.subr.mxu0 0.0
    %507 = vmatpush1.msra.mxu0 0.0
    %508 = vmatprep.mubr.f32.mxu0 0.0
    %509 = vmatmul.mubr.f32.gmra.mrb[0].mxu0 %v442
    %v510 = vpop.f32.mrb[0].mxu0
    %v511 = vadd.f32 0.0, %v510
    %v512 = vpop.f32.mrb[0].mxu0
    %513 = vdwg.mxu0
    %v514 = vld [vmem:[#allocation3] sm:$0xff]
    %516 = vset.pattern.permute.xlu0 0
    %517 = vperm.xlu0 %516, %v421
    %v518 = vpop.permute.xlu0 %517
    %v520 = vmul.f32 %v518, %v514
    %v521 = vadd.f32 %v520, %v511
    %522 = vst.msk [vmem:[#allocation3] sm:$0xff] %vm332, %v521
    %vm523 = vcmask 7168
    %524 = vst.msk [vmem:[#allocation4] sm:$0xff] %vm523, %v418
    %525 = vst.msk [vmem:[#allocation5] sm:$0xff] %vm523, %v434
    %v526 = vld [vmem:[#allocation2] sm:$0xff]
    %528 = vrot.lane.b32.xlu0 %v526, 120
    %v529 = vpop.permute.xlu0 %528
    %530 = vrot.lane.b32.xlu0 %v313, 120
    %v531 = vpop.permute.xlu0 %530
    %532 = vrot.lane.b32.xlu0 %v318, 120
    %v533 = vpop.permute.xlu0 %532
    %v534 = vsel %vm332, %v529, 0
    %v536 = vsel %vm332, %v531, 0
    %v538 = vsel %vm332, %v533, 0
    %540 = vmatprep.subr.mxu0 0.0
    %541 = vmatpush1.xpose.msra.mxu0 %v536
    %542 = vmatprep.subr.mxu0 0.0
    %543 = vmatpush1.xpose.msra.mxu0 %v538
    %544 = vmatprep.subr.mxu0 0.0
    %545 = vmatpush1.xpose.msra.mxu0 0.0
    %546 = vmatprep.subr.mxu0 0.0
    %547 = vmatpush1.xpose.msra.mxu0 0.0
    %548 = vmatprep.subr.mxu0 0.0
    %549 = vmatpush1.xpose.msra.mxu0 0.0
    %550 = vmatprep.subr.mxu0 0.0
    %551 = vmatpush1.xpose.msra.mxu0 0.0
    %552 = vmatprep.subr.mxu0 0.0
    %553 = vmatpush1.xpose.msra.mxu0 0.0
    %554 = vmatprep.subr.mxu0 0.0
    %555 = vmatpush1.xpose.msra.mxu0 0.0
    %556 = vmatprep.subr.mxu0 0.0
    %557 = vmatpush1.xpose.msra.mxu0 0.0
    %558 = vmatprep.subr.mxu0 0.0
    %559 = vmatpush1.xpose.msra.mxu0 0.0
    %560 = vmatprep.subr.mxu0 0.0
    %561 = vmatpush1.xpose.msra.mxu0 0.0
    %562 = vmatprep.subr.mxu0 0.0
    %563 = vmatpush1.xpose.msra.mxu0 0.0
    %564 = vmatprep.subr.mxu0 0.0
    %565 = vmatpush1.xpose.msra.mxu0 0.0
    %566 = vmatprep.subr.mxu0 0.0
    %567 = vmatpush1.xpose.msra.mxu0 0.0
    %568 = vmatprep.subr.mxu0 0.0
    %569 = vmatpush1.xpose.msra.mxu0 0.0
    %570 = vmatprep.subr.mxu0 0.0
    %571 = vmatpush1.xpose.msra.mxu0 0.0
    %572 = vmatprep.subr.mxu0 0.0
    %573 = vmatpush1.xpose.msra.mxu0 0.0
    %574 = vmatprep.subr.mxu0 0.0
    %575 = vmatpush1.xpose.msra.mxu0 0.0
    %576 = vmatprep.subr.mxu0 0.0
    %577 = vmatpush1.xpose.msra.mxu0 0.0
    %578 = vmatprep.subr.mxu0 0.0
    %579 = vmatpush1.xpose.msra.mxu0 0.0
    %580 = vmatprep.subr.mxu0 0.0
    %581 = vmatpush1.xpose.msra.mxu0 0.0
    %582 = vmatprep.subr.mxu0 0.0
    %583 = vmatpush1.xpose.msra.mxu0 0.0
    %584 = vmatprep.subr.mxu0 0.0
    %585 = vmatpush1.xpose.msra.mxu0 0.0
    %586 = vmatprep.subr.mxu0 0.0
    %587 = vmatpush1.xpose.msra.mxu0 0.0
    %588 = vmatprep.subr.mxu0 0.0
    %589 = vmatpush1.xpose.msra.mxu0 0.0
    %590 = vmatprep.subr.mxu0 0.0
    %591 = vmatpush1.xpose.msra.mxu0 0.0
    %592 = vmatprep.subr.mxu0 0.0
    %593 = vmatpush1.xpose.msra.mxu0 0.0
    %594 = vmatprep.subr.mxu0 0.0
    %595 = vmatpush1.xpose.msra.mxu0 0.0
    %596 = vmatprep.subr.mxu0 0.0
    %597 = vmatpush1.xpose.msra.mxu0 0.0
    %598 = vmatprep.subr.mxu0 0.0
    %599 = vmatpush1.xpose.msra.mxu0 0.0
    %600 = vmatprep.subr.mxu0 0.0
    %601 = vmatpush1.xpose.msra.mxu0 0.0
    %602 = vmatprep.subr.mxu0 0.0
    %603 = vmatpush1.xpose.msra.mxu0 0.0
    %604 = vmatprep.mubr.f32.mxu0 0.0
    %605 = vmatmul.mubr.f32.gmra.mrb[0].mxu0 %v534
    %v606 = vpop.f32.mrb[0].mxu0
    %v607 = vadd.f32 0.0, %v606
    %v608 = vpop.f32.mrb[0].mxu0
    %609 = vdwg.mxu0
    %s610 = scalar_lea.vmem [#allocation4], 16
    %v611 = vld [vmem:[%s610] sm:$0xff]
    %s612 = scalar_lea.vmem [#allocation5], 16
    %v613 = vld [vmem:[%s612] sm:$0xff]
    %v614 = vsel %vm414, %v607, -inf
    %615 = vmax.xlane.f32.xlu0 %v614
    %v616 = vpop.xlane.xlu0 %615
    %v617 = vmax.f32 %v611, %v616
    %v618 = vsub.f32 %v611, %v617
    %v619 = vmul.f32 %v618, 1.442695
    %v620 = vpow.pop %v619
    %622 = vset.pattern.permute.xlu0 0
    %623 = vperm.xlu0 %622, %v617
    %v624 = vpop.permute.xlu0 %623
    %v626 = vsub.f32 %v607, %v624
    %v627 = vmul.f32 %v626, 1.442695
    %v628 = vpow.pop %v627
    %v629 = vmul.f32 %v620, %v613
    %v630 = vsel %vm414, %v628, 0.0
    %631 = vadd.xlane.f32.xlu0 %v630
    %v632 = vpop.xlane.xlu0 %631
    %v633 = vadd.f32 %v629, %v632
    %634 = vrot.lane.b32.xlu0 %v313, 88
    %v635 = vpop.permute.xlu0 %634
    %636 = vrot.lane.b32.xlu0 %v318, 88
    %v637 = vpop.permute.xlu0 %636
    %v641 = vsel %vm414, %v628, 0
    %643 = vmatprep.subr.mxu0 0.0
    %644 = vmatpush1.msra.mxu0 %v635
    %645 = vmatprep.subr.mxu0 0.0
    %646 = vmatpush1.msra.mxu0 %v637
    %647 = vmatprep.subr.mxu0 0.0
    %648 = vmatpush1.msra.mxu0 0.0
    %649 = vmatprep.subr.mxu0 0.0
    %650 = vmatpush1.msra.mxu0 0.0
    %651 = vmatprep.subr.mxu0 0.0
    %652 = vmatpush1.msra.mxu0 0.0
    %653 = vmatprep.subr.mxu0 0.0
    %654 = vmatpush1.msra.mxu0 0.0
    %655 = vmatprep.subr.mxu0 0.0
    %656 = vmatpush1.msra.mxu0 0.0
    %657 = vmatprep.subr.mxu0 0.0
    %658 = vmatpush1.msra.mxu0 0.0
    %659 = vmatprep.subr.mxu0 0.0
    %660 = vmatpush1.msra.mxu0 0.0
    %661 = vmatprep.subr.mxu0 0.0
    %662 = vmatpush1.msra.mxu0 0.0
    %663 = vmatprep.subr.mxu0 0.0
    %664 = vmatpush1.msra.mxu0 0.0
    %665 = vmatprep.subr.mxu0 0.0
    %666 = vmatpush1.msra.mxu0 0.0
    %667 = vmatprep.subr.mxu0 0.0
    %668 = vmatpush1.msra.mxu0 0.0
    %669 = vmatprep.subr.mxu0 0.0
    %670 = vmatpush1.msra.mxu0 0.0
    %671 = vmatprep.subr.mxu0 0.0
    %672 = vmatpush1.msra.mxu0 0.0
    %673 = vmatprep.subr.mxu0 0.0
    %674 = vmatpush1.msra.mxu0 0.0
    %675 = vmatprep.subr.mxu0 0.0
    %676 = vmatpush1.msra.mxu0 0.0
    %677 = vmatprep.subr.mxu0 0.0
    %678 = vmatpush1.msra.mxu0 0.0
    %679 = vmatprep.subr.mxu0 0.0
    %680 = vmatpush1.msra.mxu0 0.0
    %681 = vmatprep.subr.mxu0 0.0
    %682 = vmatpush1.msra.mxu0 0.0
    %683 = vmatprep.subr.mxu0 0.0
    %684 = vmatpush1.msra.mxu0 0.0
    %685 = vmatprep.subr.mxu0 0.0
    %686 = vmatpush1.msra.mxu0 0.0
    %687 = vmatprep.subr.mxu0 0.0
    %688 = vmatpush1.msra.mxu0 0.0
    %689 = vmatprep.subr.mxu0 0.0
    %690 = vmatpush1.msra.mxu0 0.0
    %691 = vmatprep.subr.mxu0 0.0
    %692 = vmatpush1.msra.mxu0 0.0
    %693 = vmatprep.subr.mxu0 0.0
    %694 = vmatpush1.msra.mxu0 0.0
    %695 = vmatprep.subr.mxu0 0.0
    %696 = vmatpush1.msra.mxu0 0.0
    %697 = vmatprep.subr.mxu0 0.0
    %698 = vmatpush1.msra.mxu0 0.0
    %699 = vmatprep.subr.mxu0 0.0
    %700 = vmatpush1.msra.mxu0 0.0
    %701 = vmatprep.subr.mxu0 0.0
    %702 = vmatpush1.msra.mxu0 0.0
    %703 = vmatprep.subr.mxu0 0.0
    %704 = vmatpush1.msra.mxu0 0.0
    %705 = vmatprep.subr.mxu0 0.0
    %706 = vmatpush1.msra.mxu0 0.0
    %707 = vmatprep.mubr.f32.mxu0 0.0
    %708 = vmatmul.mubr.f32.gmra.mrb[0].mxu0 %v641
    %v709 = vpop.f32.mrb[0].mxu0
    %v710 = vadd.f32 0.0, %v709
    %v711 = vpop.f32.mrb[0].mxu0
    %712 = vdwg.mxu0
    %v713 = vld [vmem:[#allocation3] sm:$0xff]
    %715 = vset.pattern.permute.xlu0 0
    %716 = vperm.xlu0 %715, %v620
    %v717 = vpop.permute.xlu0 %716
    %v719 = vmul.f32 %v717, %v713
    %721 = vrot.lane.b32.xlu0 %v710, 8
    %v722 = vpop.permute.xlu0 %721
    %v724 = vadd.f32 %v719, %v722
    %vm725 = vcmask 130112
    %726 = vst.msk [vmem:[#allocation3] sm:$0xff] %vm725, %v724
    %727 = vst.msk [vmem:[%s610] sm:$0xff] %vm523, %v617
    %728 = vst.msk [vmem:[%s612] sm:$0xff] %vm523, %v633
    %v729 = vld [vmem:[#allocation2] sm:$0xff]
    %731 = vrot.lane.b32.xlu0 %v729, 112
    %v732 = vpop.permute.xlu0 %731
    %733 = vrot.lane.b32.xlu0 %v313, 112
    %v734 = vpop.permute.xlu0 %733
    %735 = vrot.lane.b32.xlu0 %v318, 112
    %v736 = vpop.permute.xlu0 %735
    %v737 = vsel %vm332, %v732, 0
    %v739 = vsel %vm332, %v734, 0
    %v741 = vsel %vm332, %v736, 0
    %743 = vmatprep.subr.mxu0 0.0
    %744 = vmatpush1.xpose.msra.mxu0 %v739
    %745 = vmatprep.subr.mxu0 0.0
    %746 = vmatpush1.xpose.msra.mxu0 %v741
    %747 = vmatprep.subr.mxu0 0.0
    %748 = vmatpush1.xpose.msra.mxu0 0.0
    %749 = vmatprep.subr.mxu0 0.0
    %750 = vmatpush1.xpose.msra.mxu0 0.0
    %751 = vmatprep.subr.mxu0 0.0
    %752 = vmatpush1.xpose.msra.mxu0 0.0
    %753 = vmatprep.subr.mxu0 0.0
    %754 = vmatpush1.xpose.msra.mxu0 0.0
    %755 = vmatprep.subr.mxu0 0.0
    %756 = vmatpush1.xpose.msra.mxu0 0.0
    %757 = vmatprep.subr.mxu0 0.0
    %758 = vmatpush1.xpose.msra.mxu0 0.0
    %759 = vmatprep.subr.mxu0 0.0
    %760 = vmatpush1.xpose.msra.mxu0 0.0
    %761 = vmatprep.subr.mxu0 0.0
    %762 = vmatpush1.xpose.msra.mxu0 0.0
    %763 = vmatprep.subr.mxu0 0.0
    %764 = vmatpush1.xpose.msra.mxu0 0.0
    %765 = vmatprep.subr.mxu0 0.0
    %766 = vmatpush1.xpose.msra.mxu0 0.0
    %767 = vmatprep.subr.mxu0 0.0
    %768 = vmatpush1.xpose.msra.mxu0 0.0
    %769 = vmatprep.subr.mxu0 0.0
    %770 = vmatpush1.xpose.msra.mxu0 0.0
    %771 = vmatprep.subr.mxu0 0.0
    %772 = vmatpush1.xpose.msra.mxu0 0.0
    %773 = vmatprep.subr.mxu0 0.0
    %774 = vmatpush1.xpose.msra.mxu0 0.0
    %775 = vmatprep.subr.mxu0 0.0
    %776 = vmatpush1.xpose.msra.mxu0 0.0
    %777 = vmatprep.subr.mxu0 0.0
    %778 = vmatpush1.xpose.msra.mxu0 0.0
    %779 = vmatprep.subr.mxu0 0.0
    %780 = vmatpush1.xpose.msra.mxu0 0.0
    %781 = vmatprep.subr.mxu0 0.0
    %782 = vmatpush1.xpose.msra.mxu0 0.0
    %783 = vmatprep.subr.mxu0 0.0
    %784 = vmatpush1.xpose.msra.mxu0 0.0
    %785 = vmatprep.subr.mxu0 0.0
    %786 = vmatpush1.xpose.msra.mxu0 0.0
    %787 = vmatprep.subr.mxu0 0.0
    %788 = vmatpush1.xpose.msra.mxu0 0.0
    %789 = vmatprep.subr.mxu0 0.0
    %790 = vmatpush1.xpose.msra.mxu0 0.0
    %791 = vmatprep.subr.mxu0 0.0
    %792 = vmatpush1.xpose.msra.mxu0 0.0
    %793 = vmatprep.subr.mxu0 0.0
    %794 = vmatpush1.xpose.msra.mxu0 0.0
    %795 = vmatprep.subr.mxu0 0.0
    %796 = vmatpush1.xpose.msra.mxu0 0.0
    %797 = vmatprep.subr.mxu0 0.0
    %798 = vmatpush1.xpose.msra.mxu0 0.0
    %799 = vmatprep.subr.mxu0 0.0
    %800 = vmatpush1.xpose.msra.mxu0 0.0
    %801 = vmatprep.subr.mxu0 0.0
    %802 = vmatpush1.xpose.msra.mxu0 0.0
    %803 = vmatprep.subr.mxu0 0.0
    %804 = vmatpush1.xpose.msra.mxu0 0.0
    %805 = vmatprep.subr.mxu0 0.0
    %806 = vmatpush1.xpose.msra.mxu0 0.0
    %807 = vmatprep.mubr.f32.mxu0 0.0
    %808 = vmatmul.mubr.f32.gmra.mrb[0].mxu0 %v737
    %v809 = vpop.f32.mrb[0].mxu0
    %v810 = vadd.f32 0.0, %v809
    %v811 = vpop.f32.mrb[0].mxu0
    %812 = vdwg.mxu0
    %s813 = scalar_lea.vmem [#allocation4], 32
    %v814 = vld [vmem:[%s813] sm:$0xff]
    %s815 = scalar_lea.vmem [#allocation5], 32
    %v816 = vld [vmem:[%s815] sm:$0xff]
    %v817 = vsel %vm414, %v810, -inf
    %818 = vmax.xlane.f32.xlu0 %v817
    %v819 = vpop.xlane.xlu0 %818
    %v820 = vmax.f32 %v814, %v819
    %v821 = vsub.f32 %v814, %v820
    %v822 = vmul.f32 %v821, 1.442695
    %v823 = vpow.pop %v822
    %825 = vset.pattern.permute.xlu0 0
    %826 = vperm.xlu0 %825, %v820
    %v827 = vpop.permute.xlu0 %826
    %v829 = vsub.f32 %v810, %v827
    %v830 = vmul.f32 %v829, 1.442695
    %v831 = vpow.pop %v830
    %v832 = vmul.f32 %v823, %v816
    %v833 = vsel %vm414, %v831, 0.0
    %834 = vadd.xlane.f32.xlu0 %v833
    %v835 = vpop.xlane.xlu0 %834
    %v836 = vadd.f32 %v832, %v835
    %837 = vrot.lane.b32.xlu0 %v313, 80
    %v838 = vpop.permute.xlu0 %837
    %839 = vrot.lane.b32.xlu0 %v318, 80
    %v840 = vpop.permute.xlu0 %839
    %v844 = vsel %vm414, %v831, 0
    %846 = vmatprep.subr.mxu0 0.0
    %847 = vmatpush1.msra.mxu0 %v838
    %848 = vmatprep.subr.mxu0 0.0
    %849 = vmatpush1.msra.mxu0 %v840
    %850 = vmatprep.subr.mxu0 0.0
    %851 = vmatpush1.msra.mxu0 0.0
    %852 = vmatprep.subr.mxu0 0.0
    %853 = vmatpush1.msra.mxu0 0.0
    %854 = vmatprep.subr.mxu0 0.0
    %855 = vmatpush1.msra.mxu0 0.0
    %856 = vmatprep.subr.mxu0 0.0
    %857 = vmatpush1.msra.mxu0 0.0
    %858 = vmatprep.subr.mxu0 0.0
    %859 = vmatpush1.msra.mxu0 0.0
    %860 = vmatprep.subr.mxu0 0.0
    %861 = vmatpush1.msra.mxu0 0.0
    %862 = vmatprep.subr.mxu0 0.0
    %863 = vmatpush1.msra.mxu0 0.0
    %864 = vmatprep.subr.mxu0 0.0
    %865 = vmatpush1.msra.mxu0 0.0
    %866 = vmatprep.subr.mxu0 0.0
    %867 = vmatpush1.msra.mxu0 0.0
    %868 = vmatprep.subr.mxu0 0.0
    %869 = vmatpush1.msra.mxu0 0.0
    %870 = vmatprep.subr.mxu0 0.0
    %871 = vmatpush1.msra.mxu0 0.0
    %872 = vmatprep.subr.mxu0 0.0
    %873 = vmatpush1.msra.mxu0 0.0
    %874 = vmatprep.subr.mxu0 0.0
    %875 = vmatpush1.msra.mxu0 0.0
    %876 = vmatprep.subr.mxu0 0.0
    %877 = vmatpush1.msra.mxu0 0.0
    %878 = vmatprep.subr.mxu0 0.0
    %879 = vmatpush1.msra.mxu0 0.0
    %880 = vmatprep.subr.mxu0 0.0
    %881 = vmatpush1.msra.mxu0 0.0
    %882 = vmatprep.subr.mxu0 0.0
    %883 = vmatpush1.msra.mxu0 0.0
    %884 = vmatprep.subr.mxu0 0.0
    %885 = vmatpush1.msra.mxu0 0.0
    %886 = vmatprep.subr.mxu0 0.0
    %887 = vmatpush1.msra.mxu0 0.0
    %888 = vmatprep.subr.mxu0 0.0
    %889 = vmatpush1.msra.mxu0 0.0
    %890 = vmatprep.subr.mxu0 0.0
    %891 = vmatpush1.msra.mxu0 0.0
    %892 = vmatprep.subr.mxu0 0.0
    %893 = vmatpush1.msra.mxu0 0.0
    %894 = vmatprep.subr.mxu0 0.0
    %895 = vmatpush1.msra.mxu0 0.0
    %896 = vmatprep.subr.mxu0 0.0
    %897 = vmatpush1.msra.mxu0 0.0
    %898 = vmatprep.subr.mxu0 0.0
    %899 = vmatpush1.msra.mxu0 0.0
    %900 = vmatprep.subr.mxu0 0.0
    %901 = vmatpush1.msra.mxu0 0.0
    %902 = vmatprep.subr.mxu0 0.0
    %903 = vmatpush1.msra.mxu0 0.0
    %904 = vmatprep.subr.mxu0 0.0
    %905 = vmatpush1.msra.mxu0 0.0
    %906 = vmatprep.subr.mxu0 0.0
    %907 = vmatpush1.msra.mxu0 0.0
    %908 = vmatprep.subr.mxu0 0.0
    %909 = vmatpush1.msra.mxu0 0.0
    %910 = vmatprep.mubr.f32.mxu0 0.0
    %911 = vmatmul.mubr.f32.gmra.mrb[0].mxu0 %v844
    %v912 = vpop.f32.mrb[0].mxu0
    %v913 = vadd.f32 0.0, %v912
    %v914 = vpop.f32.mrb[0].mxu0
    %915 = vdwg.mxu0
    %v916 = vld [vmem:[#allocation3] sm:$0xff]
    %918 = vset.pattern.permute.xlu0 0
    %919 = vperm.xlu0 %918, %v823
    %v920 = vpop.permute.xlu0 %919
    %v922 = vmul.f32 %v920, %v916
    %924 = vrot.lane.b32.xlu0 %v913, 16
    %v925 = vpop.permute.xlu0 %924
    %v927 = vadd.f32 %v922, %v925
    %vm928 = vcmask 195712
    %929 = vst.msk [vmem:[#allocation3] sm:$0xff] %vm928, %v927
    %930 = vst.msk [vmem:[%s813] sm:$0xff] %vm523, %v820
    %931 = vst.msk [vmem:[%s815] sm:$0xff] %vm523, %v836
    %v932 = vld [vmem:[#allocation2] sm:$0xff]
    %934 = vrot.lane.b32.xlu0 %v932, 104
    %v935 = vpop.permute.xlu0 %934
    %936 = vrot.lane.b32.xlu0 %v313, 104
    %v937 = vpop.permute.xlu0 %936
    %938 = vrot.lane.b32.xlu0 %v318, 104
    %v939 = vpop.permute.xlu0 %938
    %v940 = vsel %vm332, %v935, 0
    %v942 = vsel %vm332, %v937, 0
    %v944 = vsel %vm332, %v939, 0
    %946 = vmatprep.subr.mxu0 0.0
    %947 = vmatpush1.xpose.msra.mxu0 %v942
    %948 = vmatprep.subr.mxu0 0.0
    %949 = vmatpush1.xpose.msra.mxu0 %v944
    %950 = vmatprep.subr.mxu0 0.0
    %951 = vmatpush1.xpose.msra.mxu0 0.0
    %952 = vmatprep.subr.mxu0 0.0
    %953 = vmatpush1.xpose.msra.mxu0 0.0
    %954 = vmatprep.subr.mxu0 0.0
    %955 = vmatpush1.xpose.msra.mxu0 0.0
    %956 = vmatprep.subr.mxu0 0.0
    %957 = vmatpush1.xpose.msra.mxu0 0.0
    %958 = vmatprep.subr.mxu0 0.0
    %959 = vmatpush1.xpose.msra.mxu0 0.0
    %960 = vmatprep.subr.mxu0 0.0
    %961 = vmatpush1.xpose.msra.mxu0 0.0
    %962 = vmatprep.subr.mxu0 0.0
    %963 = vmatpush1.xpose.msra.mxu0 0.0
    %964 = vmatprep.subr.mxu0 0.0
    %965 = vmatpush1.xpose.msra.mxu0 0.0
    %966 = vmatprep.subr.mxu0 0.0
    %967 = vmatpush1.xpose.msra.mxu0 0.0
    %968 = vmatprep.subr.mxu0 0.0
    %969 = vmatpush1.xpose.msra.mxu0 0.0
    %970 = vmatprep.subr.mxu0 0.0
    %971 = vmatpush1.xpose.msra.mxu0 0.0
    %972 = vmatprep.subr.mxu0 0.0
    %973 = vmatpush1.xpose.msra.mxu0 0.0
    %974 = vmatprep.subr.mxu0 0.0
    %975 = vmatpush1.xpose.msra.mxu0 0.0
    %976 = vmatprep.subr.mxu0 0.0
    %977 = vmatpush1.xpose.msra.mxu0 0.0
    %978 = vmatprep.subr.mxu0 0.0
    %979 = vmatpush1.xpose.msra.mxu0 0.0
    %980 = vmatprep.subr.mxu0 0.0
    %981 = vmatpush1.xpose.msra.mxu0 0.0
    %982 = vmatprep.subr.mxu0 0.0
    %983 = vmatpush1.xpose.msra.mxu0 0.0
    %984 = vmatprep.subr.mxu0 0.0
    %985 = vmatpush1.xpose.msra.mxu0 0.0
    %986 = vmatprep.subr.mxu0 0.0
    %987 = vmatpush1.xpose.msra.mxu0 0.0
    %988 = vmatprep.subr.mxu0 0.0
    %989 = vmatpush1.xpose.msra.mxu0 0.0
    %990 = vmatprep.subr.mxu0 0.0
    %991 = vmatpush1.xpose.msra.mxu0 0.0
    %992 = vmatprep.subr.mxu0 0.0
    %993 = vmatpush1.xpose.msra.mxu0 0.0
    %994 = vmatprep.subr.mxu0 0.0
    %995 = vmatpush1.xpose.msra.mxu0 0.0
    %996 = vmatprep.subr.mxu0 0.0
    %997 = vmatpush1.xpose.msra.mxu0 0.0
    %998 = vmatprep.subr.mxu0 0.0
    %999 = vmatpush1.xpose.msra.mxu0 0.0
    %1000 = vmatprep.subr.mxu0 0.0
    %1001 = vmatpush1.xpose.msra.mxu0 0.0
    %1002 = vmatprep.subr.mxu0 0.0
    %1003 = vmatpush1.xpose.msra.mxu0 0.0
    %1004 = vmatprep.subr.mxu0 0.0
    %1005 = vmatpush1.xpose.msra.mxu0 0.0
    %1006 = vmatprep.subr.mxu0 0.0
    %1007 = vmatpush1.xpose.msra.mxu0 0.0
    %1008 = vmatprep.subr.mxu0 0.0
    %1009 = vmatpush1.xpose.msra.mxu0 0.0
    %1010 = vmatprep.mubr.f32.mxu0 0.0
    %1011 = vmatmul.mubr.f32.gmra.mrb[0].mxu0 %v940
    %v1012 = vpop.f32.mrb[0].mxu0
    %v1013 = vadd.f32 0.0, %v1012
    %v1014 = vpop.f32.mrb[0].mxu0
    %1015 = vdwg.mxu0
    %s1016 = scalar_lea.vmem [#allocation4], 48
    %v1017 = vld [vmem:[%s1016] sm:$0xff]
    %s1018 = scalar_lea.vmem [#allocation5], 48
    %v1019 = vld [vmem:[%s1018] sm:$0xff]
    %v1020 = vsel %vm414, %v1013, -inf
    %1021 = vmax.xlane.f32.xlu0 %v1020
    %v1022 = vpop.xlane.xlu0 %1021
    %v1023 = vmax.f32 %v1017, %v1022
    %v1024 = vsub.f32 %v1017, %v1023
    %v1025 = vmul.f32 %v1024, 1.442695
    %v1026 = vpow.pop %v1025
    %1028 = vset.pattern.permute.xlu0 0
    %1029 = vperm.xlu0 %1028, %v1023
    %v1030 = vpop.permute.xlu0 %1029
    %v1032 = vsub.f32 %v1013, %v1030
    %v1033 = vmul.f32 %v1032, 1.442695
    %v1034 = vpow.pop %v1033
    %v1035 = vmul.f32 %v1026, %v1019
    %v1036 = vsel %vm414, %v1034, 0.0
    %1037 = vadd.xlane.f32.xlu0 %v1036
    %v1038 = vpop.xlane.xlu0 %1037
    %v1039 = vadd.f32 %v1035, %v1038
    %1040 = vrot.lane.b32.xlu0 %v313, 72
    %v1041 = vpop.permute.xlu0 %1040
    %1042 = vrot.lane.b32.xlu0 %v318, 72
    %v1043 = vpop.permute.xlu0 %1042
    %v1047 = vsel %vm414, %v1034, 0
    %1049 = vmatprep.subr.mxu0 0.0
    %1050 = vmatpush1.msra.mxu0 %v1041
    %1051 = vmatprep.subr.mxu0 0.0
    %1052 = vmatpush1.msra.mxu0 %v1043
    %1053 = vmatprep.subr.mxu0 0.0
    %1054 = vmatpush1.msra.mxu0 0.0
    %1055 = vmatprep.subr.mxu0 0.0
    %1056 = vmatpush1.msra.mxu0 0.0
    %1057 = vmatprep.subr.mxu0 0.0
    %1058 = vmatpush1.msra.mxu0 0.0
    %1059 = vmatprep.subr.mxu0 0.0
    %1060 = vmatpush1.msra.mxu0 0.0
    %1061 = vmatprep.subr.mxu0 0.0
    %1062 = vmatpush1.msra.mxu0 0.0
    %1063 = vmatprep.subr.mxu0 0.0
    %1064 = vmatpush1.msra.mxu0 0.0
    %1065 = vmatprep.subr.mxu0 0.0
    %1066 = vmatpush1.msra.mxu0 0.0
    %1067 = vmatprep.subr.mxu0 0.0
    %1068 = vmatpush1.msra.mxu0 0.0
    %1069 = vmatprep.subr.mxu0 0.0
    %1070 = vmatpush1.msra.mxu0 0.0
    %1071 = vmatprep.subr.mxu0 0.0
    %1072 = vmatpush1.msra.mxu0 0.0
    %1073 = vmatprep.subr.mxu0 0.0
    %1074 = vmatpush1.msra.mxu0 0.0
    %1075 = vmatprep.subr.mxu0 0.0
    %1076 = vmatpush1.msra.mxu0 0.0
    %1077 = vmatprep.subr.mxu0 0.0
    %1078 = vmatpush1.msra.mxu0 0.0
    %1079 = vmatprep.subr.mxu0 0.0
    %1080 = vmatpush1.msra.mxu0 0.0
    %1081 = vmatprep.subr.mxu0 0.0
    %1082 = vmatpush1.msra.mxu0 0.0
    %1083 = vmatprep.subr.mxu0 0.0
    %1084 = vmatpush1.msra.mxu0 0.0
    %1085 = vmatprep.subr.mxu0 0.0
    %1086 = vmatpush1.msra.mxu0 0.0
    %1087 = vmatprep.subr.mxu0 0.0
    %1088 = vmatpush1.msra.mxu0 0.0
    %1089 = vmatprep.subr.mxu0 0.0
    %1090 = vmatpush1.msra.mxu0 0.0
    %1091 = vmatprep.subr.mxu0 0.0
    %1092 = vmatpush1.msra.mxu0 0.0
    %1093 = vmatprep.subr.mxu0 0.0
    %1094 = vmatpush1.msra.mxu0 0.0
    %1095 = vmatprep.subr.mxu0 0.0
    %1096 = vmatpush1.msra.mxu0 0.0
    %1097 = vmatprep.subr.mxu0 0.0
    %1098 = vmatpush1.msra.mxu0 0.0
    %1099 = vmatprep.subr.mxu0 0.0
    %1100 = vmatpush1.msra.mxu0 0.0
    %1101 = vmatprep.subr.mxu0 0.0
    %1102 = vmatpush1.msra.mxu0 0.0
    %1103 = vmatprep.subr.mxu0 0.0
    %1104 = vmatpush1.msra.mxu0 0.0
    %1105 = vmatprep.subr.mxu0 0.0
    %1106 = vmatpush1.msra.mxu0 0.0
    %1107 = vmatprep.subr.mxu0 0.0
    %1108 = vmatpush1.msra.mxu0 0.0
    %1109 = vmatprep.subr.mxu0 0.0
    %1110 = vmatpush1.msra.mxu0 0.0
    %1111 = vmatprep.subr.mxu0 0.0
    %1112 = vmatpush1.msra.mxu0 0.0
    %1113 = vmatprep.mubr.f32.mxu0 0.0
    %1114 = vmatmul.mubr.f32.gmra.mrb[0].mxu0 %v1047
    %v1115 = vpop.f32.mrb[0].mxu0
    %v1116 = vadd.f32 0.0, %v1115
    %v1117 = vpop.f32.mrb[0].mxu0
    %1118 = vdwg.mxu0
    %v1119 = vld [vmem:[#allocation3] sm:$0xff]
    %1121 = vset.pattern.permute.xlu0 0
    %1122 = vperm.xlu0 %1121, %v1026
    %v1123 = vpop.permute.xlu0 %1122
    %v1125 = vmul.f32 %v1123, %v1119
    %1127 = vrot.lane.b32.xlu0 %v1116, 24
    %v1128 = vpop.permute.xlu0 %1127
    %v1130 = vadd.f32 %v1125, %v1128
    %vm1131 = vcmask 261312
    %1132 = vst.msk [vmem:[#allocation3] sm:$0xff] %vm1131, %v1130
    %1133 = vst.msk [vmem:[%s1016] sm:$0xff] %vm523, %v1023
    %1134 = vst.msk [vmem:[%s1018] sm:$0xff] %vm523, %v1039
    %v1135 = vld [vmem:[#allocation2 + $0x8] sm:$0xff]
    %v1137 = vsel %vm332, %v1135, 0
    %v1140 = vsel %vm332, %v323, 0
    %v1143 = vsel %vm332, %v328, 0
    %1145 = vmatprep.subr.mxu0 0.0
    %1146 = vmatpush1.xpose.msra.mxu0 %v1140
    %1147 = vmatprep.subr.mxu0 0.0
    %1148 = vmatpush1.xpose.msra.mxu0 %v1143
    %1149 = vmatprep.subr.mxu0 0.0
    %1150 = vmatpush1.xpose.msra.mxu0 0.0
    %1151 = vmatprep.subr.mxu0 0.0
    %1152 = vmatpush1.xpose.msra.mxu0 0.0
    %1153 = vmatprep.subr.mxu0 0.0
    %1154 = vmatpush1.xpose.msra.mxu0 0.0
    %1155 = vmatprep.subr.mxu0 0.0
    %1156 = vmatpush1.xpose.msra.mxu0 0.0
    %1157 = vmatprep.subr.mxu0 0.0
    %1158 = vmatpush1.xpose.msra.mxu0 0.0
    %1159 = vmatprep.subr.mxu0 0.0
    %1160 = vmatpush1.xpose.msra.mxu0 0.0
    %1161 = vmatprep.subr.mxu0 0.0
    %1162 = vmatpush1.xpose.msra.mxu0 0.0
    %1163 = vmatprep.subr.mxu0 0.0
    %1164 = vmatpush1.xpose.msra.mxu0 0.0
    %1165 = vmatprep.subr.mxu0 0.0
    %1166 = vmatpush1.xpose.msra.mxu0 0.0
    %1167 = vmatprep.subr.mxu0 0.0
    %1168 = vmatpush1.xpose.msra.mxu0 0.0
    %1169 = vmatprep.subr.mxu0 0.0
    %1170 = vmatpush1.xpose.msra.mxu0 0.0
    %1171 = vmatprep.subr.mxu0 0.0
    %1172 = vmatpush1.xpose.msra.mxu0 0.0
    %1173 = vmatprep.subr.mxu0 0.0
    %1174 = vmatpush1.xpose.msra.mxu0 0.0
    %1175 = vmatprep.subr.mxu0 0.0
    %1176 = vmatpush1.xpose.msra.mxu0 0.0
    %1177 = vmatprep.subr.mxu0 0.0
    %1178 = vmatpush1.xpose.msra.mxu0 0.0
    %1179 = vmatprep.subr.mxu0 0.0
    %1180 = vmatpush1.xpose.msra.mxu0 0.0
    %1181 = vmatprep.subr.mxu0 0.0
    %1182 = vmatpush1.xpose.msra.mxu0 0.0
    %1183 = vmatprep.subr.mxu0 0.0
    %1184 = vmatpush1.xpose.msra.mxu0 0.0
    %1185 = vmatprep.subr.mxu0 0.0
    %1186 = vmatpush1.xpose.msra.mxu0 0.0
    %1187 = vmatprep.subr.mxu0 0.0
    %1188 = vmatpush1.xpose.msra.mxu0 0.0
    %1189 = vmatprep.subr.mxu0 0.0
    %1190 = vmatpush1.xpose.msra.mxu0 0.0
    %1191 = vmatprep.subr.mxu0 0.0
    %1192 = vmatpush1.xpose.msra.mxu0 0.0
    %1193 = vmatprep.subr.mxu0 0.0
    %1194 = vmatpush1.xpose.msra.mxu0 0.0
    %1195 = vmatprep.subr.mxu0 0.0
    %1196 = vmatpush1.xpose.msra.mxu0 0.0
    %1197 = vmatprep.subr.mxu0 0.0
    %1198 = vmatpush1.xpose.msra.mxu0 0.0
    %1199 = vmatprep.subr.mxu0 0.0
    %1200 = vmatpush1.xpose.msra.mxu0 0.0
    %1201 = vmatprep.subr.mxu0 0.0
    %1202 = vmatpush1.xpose.msra.mxu0 0.0
    %1203 = vmatprep.subr.mxu0 0.0
    %1204 = vmatpush1.xpose.msra.mxu0 0.0
    %1205 = vmatprep.subr.mxu0 0.0
    %1206 = vmatpush1.xpose.msra.mxu0 0.0
    %1207 = vmatprep.subr.mxu0 0.0
    %1208 = vmatpush1.xpose.msra.mxu0 0.0
    %1209 = vmatprep.mubr.f32.mxu0 0.0
    %1210 = vmatmul.mubr.f32.gmra.mrb[0].mxu0 %v1137
    %v1211 = vpop.f32.mrb[0].mxu0
    %v1212 = vadd.f32 0.0, %v1211
    %v1213 = vpop.f32.mrb[0].mxu0
    %1214 = vdwg.mxu0
    %v1215 = vld [vmem:[#allocation4 + $0x8] sm:$0xff]
    %v1216 = vld [vmem:[#allocation5 + $0x8] sm:$0xff]
    %v1217 = vsel %vm414, %v1212, -inf
    %1218 = vmax.xlane.f32.xlu0 %v1217
    %v1219 = vpop.xlane.xlu0 %1218
    %v1220 = vmax.f32 %v1215, %v1219
    %v1221 = vsub.f32 %v1215, %v1220
    %v1222 = vmul.f32 %v1221, 1.442695
    %v1223 = vpow.pop %v1222
    %1225 = vset.pattern.permute.xlu0 0
    %1226 = vperm.xlu0 %1225, %v1220
    %v1227 = vpop.permute.xlu0 %1226
    %v1229 = vsub.f32 %v1212, %v1227
    %v1230 = vmul.f32 %v1229, 1.442695
    %v1231 = vpow.pop %v1230
    %v1232 = vmul.f32 %v1223, %v1216
    %v1233 = vsel %vm414, %v1231, 0.0
    %1234 = vadd.xlane.f32.xlu0 %v1233
    %v1235 = vpop.xlane.xlu0 %1234
    %v1236 = vadd.f32 %v1232, %v1235
    %1237 = vrot.lane.b32.xlu0 %v323, 96
    %v1238 = vpop.permute.xlu0 %1237
    %1239 = vrot.lane.b32.xlu0 %v328, 96
    %v1240 = vpop.permute.xlu0 %1239
    %v1244 = vsel %vm414, %v1231, 0
    %1246 = vmatprep.subr.mxu0 0.0
    %1247 = vmatpush1.msra.mxu0 %v1238
    %1248 = vmatprep.subr.mxu0 0.0
    %1249 = vmatpush1.msra.mxu0 %v1240
    %1250 = vmatprep.subr.mxu0 0.0
    %1251 = vmatpush1.msra.mxu0 0.0
    %1252 = vmatprep.subr.mxu0 0.0
    %1253 = vmatpush1.msra.mxu0 0.0
    %1254 = vmatprep.subr.mxu0 0.0
    %1255 = vmatpush1.msra.mxu0 0.0
    %1256 = vmatprep.subr.mxu0 0.0
    %1257 = vmatpush1.msra.mxu0 0.0
    %1258 = vmatprep.subr.mxu0 0.0
    %1259 = vmatpush1.msra.mxu0 0.0
    %1260 = vmatprep.subr.mxu0 0.0
    %1261 = vmatpush1.msra.mxu0 0.0
    %1262 = vmatprep.subr.mxu0 0.0
    %1263 = vmatpush1.msra.mxu0 0.0
    %1264 = vmatprep.subr.mxu0 0.0
    %1265 = vmatpush1.msra.mxu0 0.0
    %1266 = vmatprep.subr.mxu0 0.0
    %1267 = vmatpush1.msra.mxu0 0.0
    %1268 = vmatprep.subr.mxu0 0.0
    %1269 = vmatpush1.msra.mxu0 0.0
    %1270 = vmatprep.subr.mxu0 0.0
    %1271 = vmatpush1.msra.mxu0 0.0
    %1272 = vmatprep.subr.mxu0 0.0
    %1273 = vmatpush1.msra.mxu0 0.0
    %1274 = vmatprep.subr.mxu0 0.0
    %1275 = vmatpush1.msra.mxu0 0.0
    %1276 = vmatprep.subr.mxu0 0.0
    %1277 = vmatpush1.msra.mxu0 0.0
    %1278 = vmatprep.subr.mxu0 0.0
    %1279 = vmatpush1.msra.mxu0 0.0
    %1280 = vmatprep.subr.mxu0 0.0
    %1281 = vmatpush1.msra.mxu0 0.0
    %1282 = vmatprep.subr.mxu0 0.0
    %1283 = vmatpush1.msra.mxu0 0.0
    %1284 = vmatprep.subr.mxu0 0.0
    %1285 = vmatpush1.msra.mxu0 0.0
    %1286 = vmatprep.subr.mxu0 0.0
    %1287 = vmatpush1.msra.mxu0 0.0
    %1288 = vmatprep.subr.mxu0 0.0
    %1289 = vmatpush1.msra.mxu0 0.0
    %1290 = vmatprep.subr.mxu0 0.0
    %1291 = vmatpush1.msra.mxu0 0.0
    %1292 = vmatprep.subr.mxu0 0.0
    %1293 = vmatpush1.msra.mxu0 0.0
    %1294 = vmatprep.subr.mxu0 0.0
    %1295 = vmatpush1.msra.mxu0 0.0
    %1296 = vmatprep.subr.mxu0 0.0
    %1297 = vmatpush1.msra.mxu0 0.0
    %1298 = vmatprep.subr.mxu0 0.0
    %1299 = vmatpush1.msra.mxu0 0.0
    %1300 = vmatprep.subr.mxu0 0.0
    %1301 = vmatpush1.msra.mxu0 0.0
    %1302 = vmatprep.subr.mxu0 0.0
    %1303 = vmatpush1.msra.mxu0 0.0
    %1304 = vmatprep.subr.mxu0 0.0
    %1305 = vmatpush1.msra.mxu0 0.0
    %1306 = vmatprep.subr.mxu0 0.0
    %1307 = vmatpush1.msra.mxu0 0.0
    %1308 = vmatprep.subr.mxu0 0.0
    %1309 = vmatpush1.msra.mxu0 0.0
    %1310 = vmatprep.mubr.f32.mxu0 0.0
    %1311 = vmatmul.mubr.f32.gmra.mrb[0].mxu0 %v1244
    %v1312 = vpop.f32.mrb[0].mxu0
    %v1313 = vadd.f32 0.0, %v1312
    %v1314 = vpop.f32.mrb[0].mxu0
    %1315 = vdwg.mxu0
    %v1316 = vld [vmem:[#allocation3 + $0x8] sm:$0xff]
    %1318 = vset.pattern.permute.xlu0 0
    %1319 = vperm.xlu0 %1318, %v1223
    %v1320 = vpop.permute.xlu0 %1319
    %v1322 = vmul.f32 %v1320, %v1316
    %v1323 = vadd.f32 %v1322, %v1313
    %1324 = vst.msk [vmem:[#allocation3 + $0x8] sm:$0xff] %vm332, %v1323
    %1325 = vst.msk [vmem:[#allocation4 + $0x8] sm:$0xff] %vm523, %v1220
    %1326 = vst.msk [vmem:[#allocation5 + $0x8] sm:$0xff] %vm523, %v1236
    %v1327 = vld [vmem:[#allocation2 + $0x8] sm:$0xff]
    %1329 = vrot.lane.b32.xlu0 %v1327, 120
    %v1330 = vpop.permute.xlu0 %1329
    %1331 = vrot.lane.b32.xlu0 %v323, 120
    %v1332 = vpop.permute.xlu0 %1331
    %1333 = vrot.lane.b32.xlu0 %v328, 120
    %v1334 = vpop.permute.xlu0 %1333
    %v1335 = vsel %vm332, %v1330, 0
    %v1337 = vsel %vm332, %v1332, 0
    %v1339 = vsel %vm332, %v1334, 0
    %1341 = vmatprep.subr.mxu0 0.0
    %1342 = vmatpush1.xpose.msra.mxu0 %v1337
    %1343 = vmatprep.subr.mxu0 0.0
    %1344 = vmatpush1.xpose.msra.mxu0 %v1339
    %1345 = vmatprep.subr.mxu0 0.0
    %1346 = vmatpush1.xpose.msra.mxu0 0.0
    %1347 = vmatprep.subr.mxu0 0.0
    %1348 = vmatpush1.xpose.msra.mxu0 0.0
    %1349 = vmatprep.subr.mxu0 0.0
    %1350 = vmatpush1.xpose.msra.mxu0 0.0
    %1351 = vmatprep.subr.mxu0 0.0
    %1352 = vmatpush1.xpose.msra.mxu0 0.0
    %1353 = vmatprep.subr.mxu0 0.0
    %1354 = vmatpush1.xpose.msra.mxu0 0.0
    %1355 = vmatprep.subr.mxu0 0.0
    %1356 = vmatpush1.xpose.msra.mxu0 0.0
    %1357 = vmatprep.subr.mxu0 0.0
    %1358 = vmatpush1.xpose.msra.mxu0 0.0
    %1359 = vmatprep.subr.mxu0 0.0
    %1360 = vmatpush1.xpose.msra.mxu0 0.0
    %1361 = vmatprep.subr.mxu0 0.0
    %1362 = vmatpush1.xpose.msra.mxu0 0.0
    %1363 = vmatprep.subr.mxu0 0.0
    %1364 = vmatpush1.xpose.msra.mxu0 0.0
    %1365 = vmatprep.subr.mxu0 0.0
    %1366 = vmatpush1.xpose.msra.mxu0 0.0
    %1367 = vmatprep.subr.mxu0 0.0
    %1368 = vmatpush1.xpose.msra.mxu0 0.0
    %1369 = vmatprep.subr.mxu0 0.0
    %1370 = vmatpush1.xpose.msra.mxu0 0.0
    %1371 = vmatprep.subr.mxu0 0.0
    %1372 = vmatpush1.xpose.msra.mxu0 0.0
    %1373 = vmatprep.subr.mxu0 0.0
    %1374 = vmatpush1.xpose.msra.mxu0 0.0
    %1375 = vmatprep.subr.mxu0 0.0
    %1376 = vmatpush1.xpose.msra.mxu0 0.0
    %1377 = vmatprep.subr.mxu0 0.0
    %1378 = vmatpush1.xpose.msra.mxu0 0.0
    %1379 = vmatprep.subr.mxu0 0.0
    %1380 = vmatpush1.xpose.msra.mxu0 0.0
    %1381 = vmatprep.subr.mxu0 0.0
    %1382 = vmatpush1.xpose.msra.mxu0 0.0
    %1383 = vmatprep.subr.mxu0 0.0
    %1384 = vmatpush1.xpose.msra.mxu0 0.0
    %1385 = vmatprep.subr.mxu0 0.0
    %1386 = vmatpush1.xpose.msra.mxu0 0.0
    %1387 = vmatprep.subr.mxu0 0.0
    %1388 = vmatpush1.xpose.msra.mxu0 0.0
    %1389 = vmatprep.subr.mxu0 0.0
    %1390 = vmatpush1.xpose.msra.mxu0 0.0
    %1391 = vmatprep.subr.mxu0 0.0
    %1392 = vmatpush1.xpose.msra.mxu0 0.0
    %1393 = vmatprep.subr.mxu0 0.0
    %1394 = vmatpush1.xpose.msra.mxu0 0.0
    %1395 = vmatprep.subr.mxu0 0.0
    %1396 = vmatpush1.xpose.msra.mxu0 0.0
    %1397 = vmatprep.subr.mxu0 0.0
    %1398 = vmatpush1.xpose.msra.mxu0 0.0
    %1399 = vmatprep.subr.mxu0 0.0
    %1400 = vmatpush1.xpose.msra.mxu0 0.0
    %1401 = vmatprep.subr.mxu0 0.0
    %1402 = vmatpush1.xpose.msra.mxu0 0.0
    %1403 = vmatprep.subr.mxu0 0.0
    %1404 = vmatpush1.xpose.msra.mxu0 0.0
    %1405 = vmatprep.mubr.f32.mxu0 0.0
    %1406 = vmatmul.mubr.f32.gmra.mrb[0].mxu0 %v1335
    %v1407 = vpop.f32.mrb[0].mxu0
    %v1408 = vadd.f32 0.0, %v1407
    %v1409 = vpop.f32.mrb[0].mxu0
    %1410 = vdwg.mxu0
    %v1411 = vld [vmem:[%s610 + $0x8] sm:$0xff]
    %v1412 = vld [vmem:[%s612 + $0x8] sm:$0xff]
    %v1413 = vsel %vm414, %v1408, -inf
    %1414 = vmax.xlane.f32.xlu0 %v1413
    %v1415 = vpop.xlane.xlu0 %1414
    %v1416 = vmax.f32 %v1411, %v1415
    %v1417 = vsub.f32 %v1411, %v1416
    %v1418 = vmul.f32 %v1417, 1.442695
    %v1419 = vpow.pop %v1418
    %1421 = vset.pattern.permute.xlu0 0
    %1422 = vperm.xlu0 %1421, %v1416
    %v1423 = vpop.permute.xlu0 %1422
    %v1425 = vsub.f32 %v1408, %v1423
    %v1426 = vmul.f32 %v1425, 1.442695
    %v1427 = vpow.pop %v1426
    %v1428 = vmul.f32 %v1419, %v1412
    %v1429 = vsel %vm414, %v1427, 0.0
    %1430 = vadd.xlane.f32.xlu0 %v1429
    %v1431 = vpop.xlane.xlu0 %1430
    %v1432 = vadd.f32 %v1428, %v1431
    %1433 = vrot.lane.b32.xlu0 %v323, 88
    %v1434 = vpop.permute.xlu0 %1433
    %1435 = vrot.lane.b32.xlu0 %v328, 88
    %v1436 = vpop.permute.xlu0 %1435
    %v1440 = vsel %vm414, %v1427, 0
    %1442 = vmatprep.subr.mxu0 0.0
    %1443 = vmatpush1.msra.mxu0 %v1434
    %1444 = vmatprep.subr.mxu0 0.0
    %1445 = vmatpush1.msra.mxu0 %v1436
    %1446 = vmatprep.subr.mxu0 0.0
    %1447 = vmatpush1.msra.mxu0 0.0
    %1448 = vmatprep.subr.mxu0 0.0
    %1449 = vmatpush1.msra.mxu0 0.0
    %1450 = vmatprep.subr.mxu0 0.0
    %1451 = vmatpush1.msra.mxu0 0.0
    %1452 = vmatprep.subr.mxu0 0.0
    %1453 = vmatpush1.msra.mxu0 0.0
    %1454 = vmatprep.subr.mxu0 0.0
    %1455 = vmatpush1.msra.mxu0 0.0
    %1456 = vmatprep.subr.mxu0 0.0
    %1457 = vmatpush1.msra.mxu0 0.0
    %1458 = vmatprep.subr.mxu0 0.0
    %1459 = vmatpush1.msra.mxu0 0.0
    %1460 = vmatprep.subr.mxu0 0.0
    %1461 = vmatpush1.msra.mxu0 0.0
    %1462 = vmatprep.subr.mxu0 0.0
    %1463 = vmatpush1.msra.mxu0 0.0
    %1464 = vmatprep.subr.mxu0 0.0
    %1465 = vmatpush1.msra.mxu0 0.0
    %1466 = vmatprep.subr.mxu0 0.0
    %1467 = vmatpush1.msra.mxu0 0.0
    %1468 = vmatprep.subr.mxu0 0.0
    %1469 = vmatpush1.msra.mxu0 0.0
    %1470 = vmatprep.subr.mxu0 0.0
    %1471 = vmatpush1.msra.mxu0 0.0
    %1472 = vmatprep.subr.mxu0 0.0
    %1473 = vmatpush1.msra.mxu0 0.0
    %1474 = vmatprep.subr.mxu0 0.0
    %1475 = vmatpush1.msra.mxu0 0.0
    %1476 = vmatprep.subr.mxu0 0.0
    %1477 = vmatpush1.msra.mxu0 0.0
    %1478 = vmatprep.subr.mxu0 0.0
    %1479 = vmatpush1.msra.mxu0 0.0
    %1480 = vmatprep.subr.mxu0 0.0
    %1481 = vmatpush1.msra.mxu0 0.0
    %1482 = vmatprep.subr.mxu0 0.0
    %1483 = vmatpush1.msra.mxu0 0.0
    %1484 = vmatprep.subr.mxu0 0.0
    %1485 = vmatpush1.msra.mxu0 0.0
    %1486 = vmatprep.subr.mxu0 0.0
    %1487 = vmatpush1.msra.mxu0 0.0
    %1488 = vmatprep.subr.mxu0 0.0
    %1489 = vmatpush1.msra.mxu0 0.0
    %1490 = vmatprep.subr.mxu0 0.0
    %1491 = vmatpush1.msra.mxu0 0.0
    %1492 = vmatprep.subr.mxu0 0.0
    %1493 = vmatpush1.msra.mxu0 0.0
    %1494 = vmatprep.subr.mxu0 0.0
    %1495 = vmatpush1.msra.mxu0 0.0
    %1496 = vmatprep.subr.mxu0 0.0
    %1497 = vmatpush1.msra.mxu0 0.0
    %1498 = vmatprep.subr.mxu0 0.0
    %1499 = vmatpush1.msra.mxu0 0.0
    %1500 = vmatprep.subr.mxu0 0.0
    %1501 = vmatpush1.msra.mxu0 0.0
    %1502 = vmatprep.subr.mxu0 0.0
    %1503 = vmatpush1.msra.mxu0 0.0
    %1504 = vmatprep.subr.mxu0 0.0
    %1505 = vmatpush1.msra.mxu0 0.0
    %1506 = vmatprep.mubr.f32.mxu0 0.0
    %1507 = vmatmul.mubr.f32.gmra.mrb[0].mxu0 %v1440
    %v1508 = vpop.f32.mrb[0].mxu0
    %v1509 = vadd.f32 0.0, %v1508
    %v1510 = vpop.f32.mrb[0].mxu0
    %1511 = vdwg.mxu0
    %v1512 = vld [vmem:[#allocation3 + $0x8] sm:$0xff]
    %1514 = vset.pattern.permute.xlu0 0
    %1515 = vperm.xlu0 %1514, %v1419
    %v1516 = vpop.permute.xlu0 %1515
    %v1518 = vmul.f32 %v1516, %v1512
    %1520 = vrot.lane.b32.xlu0 %v1509, 8
    %v1521 = vpop.permute.xlu0 %1520
    %v1523 = vadd.f32 %v1518, %v1521
    %1524 = vst.msk [vmem:[#allocation3 + $0x8] sm:$0xff] %vm725, %v1523
    %1525 = vst.msk [vmem:[%s610 + $0x8] sm:$0xff] %vm523, %v1416
    %1526 = vst.msk [vmem:[%s612 + $0x8] sm:$0xff] %vm523, %v1432
    %v1527 = vld [vmem:[#allocation2 + $0x8] sm:$0xff]
    %1529 = vrot.lane.b32.xlu0 %v1527, 112
    %v1530 = vpop.permute.xlu0 %1529
    %1531 = vrot.lane.b32.xlu0 %v323, 112
    %v1532 = vpop.permute.xlu0 %1531
    %1533 = vrot.lane.b32.xlu0 %v328, 112
    %v1534 = vpop.permute.xlu0 %1533
    %v1535 = vsel %vm332, %v1530, 0
    %v1537 = vsel %vm332, %v1532, 0
    %v1539 = vsel %vm332, %v1534, 0
    %1541 = vmatprep.subr.mxu0 0.0
    %1542 = vmatpush1.xpose.msra.mxu0 %v1537
    %1543 = vmatprep.subr.mxu0 0.0
    %1544 = vmatpush1.xpose.msra.mxu0 %v1539
    %1545 = vmatprep.subr.mxu0 0.0
    %1546 = vmatpush1.xpose.msra.mxu0 0.0
    %1547 = vmatprep.subr.mxu0 0.0
    %1548 = vmatpush1.xpose.msra.mxu0 0.0
    %1549 = vmatprep.subr.mxu0 0.0
    %1550 = vmatpush1.xpose.msra.mxu0 0.0
    %1551 = vmatprep.subr.mxu0 0.0
    %1552 = vmatpush1.xpose.msra.mxu0 0.0
    %1553 = vmatprep.subr.mxu0 0.0
    %1554 = vmatpush1.xpose.msra.mxu0 0.0
    %1555 = vmatprep.subr.mxu0 0.0
    %1556 = vmatpush1.xpose.msra.mxu0 0.0
    %1557 = vmatprep.subr.mxu0 0.0
    %1558 = vmatpush1.xpose.msra.mxu0 0.0
    %1559 = vmatprep.subr.mxu0 0.0
    %1560 = vmatpush1.xpose.msra.mxu0 0.0
    %1561 = vmatprep.subr.mxu0 0.0
    %1562 = vmatpush1.xpose.msra.mxu0 0.0
    %1563 = vmatprep.subr.mxu0 0.0
    %1564 = vmatpush1.xpose.msra.mxu0 0.0
    %1565 = vmatprep.subr.mxu0 0.0
    %1566 = vmatpush1.xpose.msra.mxu0 0.0
    %1567 = vmatprep.subr.mxu0 0.0
    %1568 = vmatpush1.xpose.msra.mxu0 0.0
    %1569 = vmatprep.subr.mxu0 0.0
    %1570 = vmatpush1.xpose.msra.mxu0 0.0
    %1571 = vmatprep.subr.mxu0 0.0
    %1572 = vmatpush1.xpose.msra.mxu0 0.0
    %1573 = vmatprep.subr.mxu0 0.0
    %1574 = vmatpush1.xpose.msra.mxu0 0.0
    %1575 = vmatprep.subr.mxu0 0.0
    %1576 = vmatpush1.xpose.msra.mxu0 0.0
    %1577 = vmatprep.subr.mxu0 0.0
    %1578 = vmatpush1.xpose.msra.mxu0 0.0
    %1579 = vmatprep.subr.mxu0 0.0
    %1580 = vmatpush1.xpose.msra.mxu0 0.0
    %1581 = vmatprep.subr.mxu0 0.0
    %1582 = vmatpush1.xpose.msra.mxu0 0.0
    %1583 = vmatprep.subr.mxu0 0.0
    %1584 = vmatpush1.xpose.msra.mxu0 0.0
    %1585 = vmatprep.subr.mxu0 0.0
    %1586 = vmatpush1.xpose.msra.mxu0 0.0
    %1587 = vmatprep.subr.mxu0 0.0
    %1588 = vmatpush1.xpose.msra.mxu0 0.0
    %1589 = vmatprep.subr.mxu0 0.0
    %1590 = vmatpush1.xpose.msra.mxu0 0.0
    %1591 = vmatprep.subr.mxu0 0.0
    %1592 = vmatpush1.xpose.msra.mxu0 0.0
    %1593 = vmatprep.subr.mxu0 0.0
    %1594 = vmatpush1.xpose.msra.mxu0 0.0
    %1595 = vmatprep.subr.mxu0 0.0
    %1596 = vmatpush1.xpose.msra.mxu0 0.0
    %1597 = vmatprep.subr.mxu0 0.0
    %1598 = vmatpush1.xpose.msra.mxu0 0.0
    %1599 = vmatprep.subr.mxu0 0.0
    %1600 = vmatpush1.xpose.msra.mxu0 0.0
    %1601 = vmatprep.subr.mxu0 0.0
    %1602 = vmatpush1.xpose.msra.mxu0 0.0
    %1603 = vmatprep.subr.mxu0 0.0
    %1604 = vmatpush1.xpose.msra.mxu0 0.0
    %1605 = vmatprep.mubr.f32.mxu0 0.0
    %1606 = vmatmul.mubr.f32.gmra.mrb[0].mxu0 %v1535
    %v1607 = vpop.f32.mrb[0].mxu0
    %v1608 = vadd.f32 0.0, %v1607
    %v1609 = vpop.f32.mrb[0].mxu0
    %1610 = vdwg.mxu0
    %v1611 = vld [vmem:[%s813 + $0x8] sm:$0xff]
    %v1612 = vld [vmem:[%s815 + $0x8] sm:$0xff]
    %v1613 = vsel %vm414, %v1608, -inf
    %1614 = vmax.xlane.f32.xlu0 %v1613
    %v1615 = vpop.xlane.xlu0 %1614
    %v1616 = vmax.f32 %v1611, %v1615
    %v1617 = vsub.f32 %v1611, %v1616
    %v1618 = vmul.f32 %v1617, 1.442695
    %v1619 = vpow.pop %v1618
    %1621 = vset.pattern.permute.xlu0 0
    %1622 = vperm.xlu0 %1621, %v1616
    %v1623 = vpop.permute.xlu0 %1622
    %v1625 = vsub.f32 %v1608, %v1623
    %v1626 = vmul.f32 %v1625, 1.442695
    %v1627 = vpow.pop %v1626
    %v1628 = vmul.f32 %v1619, %v1612
    %v1629 = vsel %vm414, %v1627, 0.0
    %1630 = vadd.xlane.f32.xlu0 %v1629
    %v1631 = vpop.xlane.xlu0 %1630
    %v1632 = vadd.f32 %v1628, %v1631
    %1633 = vrot.lane.b32.xlu0 %v323, 80
    %v1634 = vpop.permute.xlu0 %1633
    %1635 = vrot.lane.b32.xlu0 %v328, 80
    %v1636 = vpop.permute.xlu0 %1635
    %v1640 = vsel %vm414, %v1627, 0
    %1642 = vmatprep.subr.mxu0 0.0
    %1643 = vmatpush1.msra.mxu0 %v1634
    %1644 = vmatprep.subr.mxu0 0.0
    %1645 = vmatpush1.msra.mxu0 %v1636
    %1646 = vmatprep.subr.mxu0 0.0
    %1647 = vmatpush1.msra.mxu0 0.0
    %1648 = vmatprep.subr.mxu0 0.0
    %1649 = vmatpush1.msra.mxu0 0.0
    %1650 = vmatprep.subr.mxu0 0.0
    %1651 = vmatpush1.msra.mxu0 0.0
    %1652 = vmatprep.subr.mxu0 0.0
    %1653 = vmatpush1.msra.mxu0 0.0
    %1654 = vmatprep.subr.mxu0 0.0
    %1655 = vmatpush1.msra.mxu0 0.0
    %1656 = vmatprep.subr.mxu0 0.0
    %1657 = vmatpush1.msra.mxu0 0.0
    %1658 = vmatprep.subr.mxu0 0.0
    %1659 = vmatpush1.msra.mxu0 0.0
    %1660 = vmatprep.subr.mxu0 0.0
    %1661 = vmatpush1.msra.mxu0 0.0
    %1662 = vmatprep.subr.mxu0 0.0
    %1663 = vmatpush1.msra.mxu0 0.0
    %1664 = vmatprep.subr.mxu0 0.0
    %1665 = vmatpush1.msra.mxu0 0.0
    %1666 = vmatprep.subr.mxu0 0.0
    %1667 = vmatpush1.msra.mxu0 0.0
    %1668 = vmatprep.subr.mxu0 0.0
    %1669 = vmatpush1.msra.mxu0 0.0
    %1670 = vmatprep.subr.mxu0 0.0
    %1671 = vmatpush1.msra.mxu0 0.0
    %1672 = vmatprep.subr.mxu0 0.0
    %1673 = vmatpush1.msra.mxu0 0.0
    %1674 = vmatprep.subr.mxu0 0.0
    %1675 = vmatpush1.msra.mxu0 0.0
    %1676 = vmatprep.subr.mxu0 0.0
    %1677 = vmatpush1.msra.mxu0 0.0
    %1678 = vmatprep.subr.mxu0 0.0
    %1679 = vmatpush1.msra.mxu0 0.0
    %1680 = vmatprep.subr.mxu0 0.0
    %1681 = vmatpush1.msra.mxu0 0.0
    %1682 = vmatprep.subr.mxu0 0.0
    %1683 = vmatpush1.msra.mxu0 0.0
    %1684 = vmatprep.subr.mxu0 0.0
    %1685 = vmatpush1.msra.mxu0 0.0
    %1686 = vmatprep.subr.mxu0 0.0
    %1687 = vmatpush1.msra.mxu0 0.0
    %1688 = vmatprep.subr.mxu0 0.0
    %1689 = vmatpush1.msra.mxu0 0.0
    %1690 = vmatprep.subr.mxu0 0.0
    %1691 = vmatpush1.msra.mxu0 0.0
    %1692 = vmatprep.subr.mxu0 0.0
    %1693 = vmatpush1.msra.mxu0 0.0
    %1694 = vmatprep.subr.mxu0 0.0
    %1695 = vmatpush1.msra.mxu0 0.0
    %1696 = vmatprep.subr.mxu0 0.0
    %1697 = vmatpush1.msra.mxu0 0.0
    %1698 = vmatprep.subr.mxu0 0.0
    %1699 = vmatpush1.msra.mxu0 0.0
    %1700 = vmatprep.subr.mxu0 0.0
    %1701 = vmatpush1.msra.mxu0 0.0
    %1702 = vmatprep.subr.mxu0 0.0
    %1703 = vmatpush1.msra.mxu0 0.0
    %1704 = vmatprep.subr.mxu0 0.0
    %1705 = vmatpush1.msra.mxu0 0.0
    %1706 = vmatprep.mubr.f32.mxu0 0.0
    %1707 = vmatmul.mubr.f32.gmra.mrb[0].mxu0 %v1640
    %v1708 = vpop.f32.mrb[0].mxu0
    %v1709 = vadd.f32 0.0, %v1708
    %v1710 = vpop.f32.mrb[0].mxu0
    %1711 = vdwg.mxu0
    %v1712 = vld [vmem:[#allocation3 + $0x8] sm:$0xff]
    %1714 = vset.pattern.permute.xlu0 0
    %1715 = vperm.xlu0 %1714, %v1619
    %v1716 = vpop.permute.xlu0 %1715
    %v1718 = vmul.f32 %v1716, %v1712
    %1720 = vrot.lane.b32.xlu0 %v1709, 16
    %v1721 = vpop.permute.xlu0 %1720
    %v1723 = vadd.f32 %v1718, %v1721
    %1724 = vst.msk [vmem:[#allocation3 + $0x8] sm:$0xff] %vm928, %v1723
    %1725 = vst.msk [vmem:[%s813 + $0x8] sm:$0xff] %vm523, %v1616
    %1726 = vst.msk [vmem:[%s815 + $0x8] sm:$0xff] %vm523, %v1632
    %v1727 = vld [vmem:[#allocation2 + $0x8] sm:$0xff]
    %1729 = vrot.lane.b32.xlu0 %v1727, 104
    %v1730 = vpop.permute.xlu0 %1729
    %1731 = vrot.lane.b32.xlu0 %v323, 104
    %v1732 = vpop.permute.xlu0 %1731
    %1733 = vrot.lane.b32.xlu0 %v328, 104
    %v1734 = vpop.permute.xlu0 %1733
    %v1735 = vsel %vm332, %v1730, 0
    %v1737 = vsel %vm332, %v1732, 0
    %v1739 = vsel %vm332, %v1734, 0
    %1741 = vmatprep.subr.mxu0 0.0
    %1742 = vmatpush1.xpose.msra.mxu0 %v1737
    %1743 = vmatprep.subr.mxu0 0.0
    %1744 = vmatpush1.xpose.msra.mxu0 %v1739
    %1745 = vmatprep.subr.mxu0 0.0
    %1746 = vmatpush1.xpose.msra.mxu0 0.0
    %1747 = vmatprep.subr.mxu0 0.0
    %1748 = vmatpush1.xpose.msra.mxu0 0.0
    %1749 = vmatprep.subr.mxu0 0.0
    %1750 = vmatpush1.xpose.msra.mxu0 0.0
    %1751 = vmatprep.subr.mxu0 0.0
    %1752 = vmatpush1.xpose.msra.mxu0 0.0
    %1753 = vmatprep.subr.mxu0 0.0
    %1754 = vmatpush1.xpose.msra.mxu0 0.0
    %1755 = vmatprep.subr.mxu0 0.0
    %1756 = vmatpush1.xpose.msra.mxu0 0.0
    %1757 = vmatprep.subr.mxu0 0.0
    %1758 = vmatpush1.xpose.msra.mxu0 0.0
    %1759 = vmatprep.subr.mxu0 0.0
    %1760 = vmatpush1.xpose.msra.mxu0 0.0
    %1761 = vmatprep.subr.mxu0 0.0
    %1762 = vmatpush1.xpose.msra.mxu0 0.0
    %1763 = vmatprep.subr.mxu0 0.0
    %1764 = vmatpush1.xpose.msra.mxu0 0.0
    %1765 = vmatprep.subr.mxu0 0.0
    %1766 = vmatpush1.xpose.msra.mxu0 0.0
    %1767 = vmatprep.subr.mxu0 0.0
    %1768 = vmatpush1.xpose.msra.mxu0 0.0
    %1769 = vmatprep.subr.mxu0 0.0
    %1770 = vmatpush1.xpose.msra.mxu0 0.0
    %1771 = vmatprep.subr.mxu0 0.0
    %1772 = vmatpush1.xpose.msra.mxu0 0.0
    %1773 = vmatprep.subr.mxu0 0.0
    %1774 = vmatpush1.xpose.msra.mxu0 0.0
    %1775 = vmatprep.subr.mxu0 0.0
    %1776 = vmatpush1.xpose.msra.mxu0 0.0
    %1777 = vmatprep.subr.mxu0 0.0
    %1778 = vmatpush1.xpose.msra.mxu0 0.0
    %1779 = vmatprep.subr.mxu0 0.0
    %1780 = vmatpush1.xpose.msra.mxu0 0.0
    %1781 = vmatprep.subr.mxu0 0.0
    %1782 = vmatpush1.xpose.msra.mxu0 0.0
    %1783 = vmatprep.subr.mxu0 0.0
    %1784 = vmatpush1.xpose.msra.mxu0 0.0
    %1785 = vmatprep.subr.mxu0 0.0
    %1786 = vmatpush1.xpose.msra.mxu0 0.0
    %1787 = vmatprep.subr.mxu0 0.0
    %1788 = vmatpush1.xpose.msra.mxu0 0.0
    %1789 = vmatprep.subr.mxu0 0.0
    %1790 = vmatpush1.xpose.msra.mxu0 0.0
    %1791 = vmatprep.subr.mxu0 0.0
    %1792 = vmatpush1.xpose.msra.mxu0 0.0
    %1793 = vmatprep.subr.mxu0 0.0
    %1794 = vmatpush1.xpose.msra.mxu0 0.0
    %1795 = vmatprep.subr.mxu0 0.0
    %1796 = vmatpush1.xpose.msra.mxu0 0.0
    %1797 = vmatprep.subr.mxu0 0.0
    %1798 = vmatpush1.xpose.msra.mxu0 0.0
    %1799 = vmatprep.subr.mxu0 0.0
    %1800 = vmatpush1.xpose.msra.mxu0 0.0
    %1801 = vmatprep.subr.mxu0 0.0
    %1802 = vmatpush1.xpose.msra.mxu0 0.0
    %1803 = vmatprep.subr.mxu0 0.0
    %1804 = vmatpush1.xpose.msra.mxu0 0.0
    %1805 = vmatprep.mubr.f32.mxu0 0.0
    %1806 = vmatmul.mubr.f32.gmra.mrb[0].mxu0 %v1735
    %v1807 = vpop.f32.mrb[0].mxu0
    %v1808 = vadd.f32 0.0, %v1807
    %v1809 = vpop.f32.mrb[0].mxu0
    %1810 = vdwg.mxu0
    %v1811 = vld [vmem:[%s1016 + $0x8] sm:$0xff]
    %v1812 = vld [vmem:[%s1018 + $0x8] sm:$0xff]
    %v1813 = vsel %vm414, %v1808, -inf
    %1814 = vmax.xlane.f32.xlu0 %v1813
    %v1815 = vpop.xlane.xlu0 %1814
    %v1816 = vmax.f32 %v1811, %v1815
    %v1817 = vsub.f32 %v1811, %v1816
    %v1818 = vmul.f32 %v1817, 1.442695
    %v1819 = vpow.pop %v1818
    %1821 = vset.pattern.permute.xlu0 0
    %1822 = vperm.xlu0 %1821, %v1816
    %v1823 = vpop.permute.xlu0 %1822
    %v1825 = vsub.f32 %v1808, %v1823
    %v1826 = vmul.f32 %v1825, 1.442695
    %v1827 = vpow.pop %v1826
    %v1828 = vmul.f32 %v1819, %v1812
    %v1829 = vsel %vm414, %v1827, 0.0
    %1830 = vadd.xlane.f32.xlu0 %v1829
    %v1831 = vpop.xlane.xlu0 %1830
    %v1832 = vadd.f32 %v1828, %v1831
    %1833 = vrot.lane.b32.xlu0 %v323, 72
    %v1834 = vpop.permute.xlu0 %1833
    %1835 = vrot.lane.b32.xlu0 %v328, 72
    %v1836 = vpop.permute.xlu0 %1835
    %v1840 = vsel %vm414, %v1827, 0
    %1842 = vmatprep.subr.mxu0 0.0
    %1843 = vmatpush1.msra.mxu0 %v1834
    %1844 = vmatprep.subr.mxu0 0.0
    %1845 = vmatpush1.msra.mxu0 %v1836
    %1846 = vmatprep.subr.mxu0 0.0
    %1847 = vmatpush1.msra.mxu0 0.0
    %1848 = vmatprep.subr.mxu0 0.0
    %1849 = vmatpush1.msra.mxu0 0.0
    %1850 = vmatprep.subr.mxu0 0.0
    %1851 = vmatpush1.msra.mxu0 0.0
    %1852 = vmatprep.subr.mxu0 0.0
    %1853 = vmatpush1.msra.mxu0 0.0
    %1854 = vmatprep.subr.mxu0 0.0
    %1855 = vmatpush1.msra.mxu0 0.0
    %1856 = vmatprep.subr.mxu0 0.0
    %1857 = vmatpush1.msra.mxu0 0.0
    %1858 = vmatprep.subr.mxu0 0.0
    %1859 = vmatpush1.msra.mxu0 0.0
    %1860 = vmatprep.subr.mxu0 0.0
    %1861 = vmatpush1.msra.mxu0 0.0
    %1862 = vmatprep.subr.mxu0 0.0
    %1863 = vmatpush1.msra.mxu0 0.0
    %1864 = vmatprep.subr.mxu0 0.0
    %1865 = vmatpush1.msra.mxu0 0.0
    %1866 = vmatprep.subr.mxu0 0.0
    %1867 = vmatpush1.msra.mxu0 0.0
    %1868 = vmatprep.subr.mxu0 0.0
    %1869 = vmatpush1.msra.mxu0 0.0
    %1870 = vmatprep.subr.mxu0 0.0
    %1871 = vmatpush1.msra.mxu0 0.0
    %1872 = vmatprep.subr.mxu0 0.0
    %1873 = vmatpush1.msra.mxu0 0.0
    %1874 = vmatprep.subr.mxu0 0.0
    %1875 = vmatpush1.msra.mxu0 0.0
    %1876 = vmatprep.subr.mxu0 0.0
    %1877 = vmatpush1.msra.mxu0 0.0
    %1878 = vmatprep.subr.mxu0 0.0
    %1879 = vmatpush1.msra.mxu0 0.0
    %1880 = vmatprep.subr.mxu0 0.0
    %1881 = vmatpush1.msra.mxu0 0.0
    %1882 = vmatprep.subr.mxu0 0.0
    %1883 = vmatpush1.msra.mxu0 0.0
    %1884 = vmatprep.subr.mxu0 0.0
    %1885 = vmatpush1.msra.mxu0 0.0
    %1886 = vmatprep.subr.mxu0 0.0
    %1887 = vmatpush1.msra.mxu0 0.0
    %1888 = vmatprep.subr.mxu0 0.0
    %1889 = vmatpush1.msra.mxu0 0.0
    %1890 = vmatprep.subr.mxu0 0.0
    %1891 = vmatpush1.msra.mxu0 0.0
    %1892 = vmatprep.subr.mxu0 0.0
    %1893 = vmatpush1.msra.mxu0 0.0
    %1894 = vmatprep.subr.mxu0 0.0
    %1895 = vmatpush1.msra.mxu0 0.0
    %1896 = vmatprep.subr.mxu0 0.0
    %1897 = vmatpush1.msra.mxu0 0.0
    %1898 = vmatprep.subr.mxu0 0.0
    %1899 = vmatpush1.msra.mxu0 0.0
    %1900 = vmatprep.subr.mxu0 0.0
    %1901 = vmatpush1.msra.mxu0 0.0
    %1902 = vmatprep.subr.mxu0 0.0
    %1903 = vmatpush1.msra.mxu0 0.0
    %1904 = vmatprep.subr.mxu0 0.0
    %1905 = vmatpush1.msra.mxu0 0.0
    %1906 = vmatprep.mubr.f32.mxu0 0.0
    %1907 = vmatmul.mubr.f32.gmra.mrb[0].mxu0 %v1840
    %v1908 = vpop.f32.mrb[0].mxu0
    %v1909 = vadd.f32 0.0, %v1908
    %v1910 = vpop.f32.mrb[0].mxu0
    %1911 = vdwg.mxu0
    %v1912 = vld [vmem:[#allocation3 + $0x8] sm:$0xff]
    %1914 = vset.pattern.permute.xlu0 0
    %1915 = vperm.xlu0 %1914, %v1819
    %v1916 = vpop.permute.xlu0 %1915
    %v1918 = vmul.f32 %v1916, %v1912
    %1920 = vrot.lane.b32.xlu0 %v1909, 24
    %v1921 = vpop.permute.xlu0 %1920
    %v1923 = vadd.f32 %v1918, %v1921
    %1924 = vst.msk [vmem:[#allocation3 + $0x8] sm:$0xff] %vm1131, %v1923
    %1925 = vst.msk [vmem:[%s1016 + $0x8] sm:$0xff] %vm523, %v1816
    %1926 = vst.msk [vmem:[%s1018 + $0x8] sm:$0xff] %vm523, %v1832
    // Predicated region
    $region58: #{tpu_custom_call.1} parent=1 // pred_check
      %p1927 = pneg %p98
    $region59: #{tpu_custom_call.1} parent=1 // pred_check_branch
      %1929 = sbr.rel (%p1927) target = $region61
    $region60: #{tpu_custom_call.1} parent=1 // pred_region
      %v1930 = vld [vmem:[#allocation3] sm:$0xff]
      %v1931 = vld [vmem:[#allocation3 + $0x8] sm:$0xff]
      %v1932 = vld [vmem:[#allocation5] sm:$0xff]
      %v1933 = vld [vmem:[#allocation5 + $0x8] sm:$0xff]
      %v1934 = vrcp.pop %v1932
      %v1935 = vrcp.pop %v1933
      %1937 = vset.pattern.permute.xlu0 0
      %1938 = vperm.xlu0 %1937, %v1934
      %v1939 = vpop.permute.xlu0 %1938
      %1942 = vset.pattern.permute.xlu0 0
      %1943 = vperm.xlu0 %1942, %v1935
      %v1944 = vpop.permute.xlu0 %1943
      %v1946 = vmul.f32 %v1930, %v1939
      %v1947 = vmul.f32 %v1931, %v1944
      %1948 = vst.msk [vmem:[#allocation3] sm:$0xff] %vm332, %v1946
      %1949 = vst.msk [vmem:[#allocation3 + $0x8] sm:$0xff] %vm332, %v1947
      %v1950 = vld [vmem:[#allocation3] sm:$0xff]
      %v1951 = vld [vmem:[#allocation3 + $0x8] sm:$0xff]
      %v1952 = vld [vmem:[%s612] sm:$0xff]
      %v1953 = vld [vmem:[%s612 + $0x8] sm:$0xff]
      %v1954 = vrcp.pop %v1952
      %v1955 = vrcp.pop %v1953
      %1957 = vset.pattern.permute.xlu0 0
      %1958 = vperm.xlu0 %1957, %v1954
      %v1959 = vpop.permute.xlu0 %1958
      %1962 = vset.pattern.permute.xlu0 0
      %1963 = vperm.xlu0 %1962, %v1955
      %v1964 = vpop.permute.xlu0 %1963
      %v1966 = vmul.f32 %v1950, %v1959
      %v1967 = vmul.f32 %v1951, %v1964
      %1968 = vst.msk [vmem:[#allocation3] sm:$0xff] %vm725, %v1966
      %1969 = vst.msk [vmem:[#allocation3 + $0x8] sm:$0xff] %vm725, %v1967
      %v1970 = vld [vmem:[#allocation3] sm:$0xff]
      %v1971 = vld [vmem:[#allocation3 + $0x8] sm:$0xff]
      %v1972 = vld [vmem:[%s815] sm:$0xff]
      %v1973 = vld [vmem:[%s815 + $0x8] sm:$0xff]
      %v1974 = vrcp.pop %v1972
      %v1975 = vrcp.pop %v1973
      %1977 = vset.pattern.permute.xlu0 0
      %1978 = vperm.xlu0 %1977, %v1974
      %v1979 = vpop.permute.xlu0 %1978
      %1982 = vset.pattern.permute.xlu0 0
      %1983 = vperm.xlu0 %1982, %v1975
      %v1984 = vpop.permute.xlu0 %1983
      %v1986 = vmul.f32 %v1970, %v1979
      %v1987 = vmul.f32 %v1971, %v1984
      %1988 = vst.msk [vmem:[#allocation3] sm:$0xff] %vm928, %v1986
      %1989 = vst.msk [vmem:[#allocation3 + $0x8] sm:$0xff] %vm928, %v1987
      %v1990 = vld [vmem:[#allocation3] sm:$0xff]
      %v1991 = vld [vmem:[#allocation3 + $0x8] sm:$0xff]
      %v1992 = vld [vmem:[%s1018] sm:$0xff]
      %v1993 = vld [vmem:[%s1018 + $0x8] sm:$0xff]
      %v1994 = vrcp.pop %v1992
      %v1995 = vrcp.pop %v1993
      %1997 = vset.pattern.permute.xlu0 0
      %1998 = vperm.xlu0 %1997, %v1994
      %v1999 = vpop.permute.xlu0 %1998
      %2002 = vset.pattern.permute.xlu0 0
      %2003 = vperm.xlu0 %2002, %v1995
      %v2004 = vpop.permute.xlu0 %2003
      %v2006 = vmul.f32 %v1990, %v1999
      %v2007 = vmul.f32 %v1991, %v2004
      %2008 = vst.msk [vmem:[#allocation3] sm:$0xff] %vm1131, %v2006
      %2009 = vst.msk [vmem:[#allocation3 + $0x8] sm:$0xff] %vm1131, %v2007
      %v2010 = vld [vmem:[#allocation3] sm:$0xff]
      %v2011 = vld [vmem:[#allocation3 + $0x8] sm:$0xff]
      %v2012 = vld [vmem:[#allocation6] sm:$0xff]
      %v2013 = vld [vmem:[#allocation6 + $0x8] sm:$0xff]
      %v2014 = vld [vmem:[#allocation14] sm:$0xff]
      %v2015 = vld [vmem:[#allocation14 + $0x8] sm:$0xff]
      %v2016 = vld [vmem:[#allocation14 + $0x10] sm:$0xff]
      %v2017 = vld [vmem:[#allocation14 + $0x18] sm:$0xff]
      %v2018 = vld [vmem:[%s7] sm:$0x1]
      %v2020 = vlaneseq
      %v2021 = vshrl.u32 %v2020, 7
      %v2022 = vsub.s32 0, %v2021
      %v2023 = vrot.slane %v2018, %v2022
      %v2026 = vsel %vm233, %v2010, 0
      %v2029 = vsel %vm233, %v2011, 0
      %2031 = vmatprep.subr.mxu0 0.0
      %2032 = vmatpush1.msra.mxu0 %v2014
      %2033 = vmatprep.subr.mxu0 0.0
      %2034 = vmatpush1.msra.mxu0 %v2015
      %2035 = vmatprep.subr.mxu0 0.0
      %2036 = vmatpush1.msra.mxu0 %v2016
      %2037 = vmatprep.subr.mxu0 0.0
      %2038 = vmatpush1.msra.mxu0 %v2017
      %2039 = vmatprep.subr.mxu0 0.0
      %2040 = vmatpush1.msra.mxu0 0.0
      %2041 = vmatprep.subr.mxu0 0.0
      %2042 = vmatpush1.msra.mxu0 0.0
      %2043 = vmatprep.subr.mxu0 0.0
      %2044 = vmatpush1.msra.mxu0 0.0
      %2045 = vmatprep.subr.mxu0 0.0
      %2046 = vmatpush1.msra.mxu0 0.0
      %2047 = vmatprep.subr.mxu0 0.0
      %2048 = vmatpush1.msra.mxu0 0.0
      %2049 = vmatprep.subr.mxu0 0.0
      %2050 = vmatpush1.msra.mxu0 0.0
      %2051 = vmatprep.subr.mxu0 0.0
      %2052 = vmatpush1.msra.mxu0 0.0
      %2053 = vmatprep.subr.mxu0 0.0
      %2054 = vmatpush1.msra.mxu0 0.0
      %2055 = vmatprep.subr.mxu0 0.0
      %2056 = vmatpush1.msra.mxu0 0.0
      %2057 = vmatprep.subr.mxu0 0.0
      %2058 = vmatpush1.msra.mxu0 0.0
      %2059 = vmatprep.subr.mxu0 0.0
      %2060 = vmatpush1.msra.mxu0 0.0
      %2061 = vmatprep.subr.mxu0 0.0
      %2062 = vmatpush1.msra.mxu0 0.0
      %2063 = vmatprep.subr.mxu0 0.0
      %2064 = vmatpush1.msra.mxu0 0.0
      %2065 = vmatprep.subr.mxu0 0.0
      %2066 = vmatpush1.msra.mxu0 0.0
      %2067 = vmatprep.subr.mxu0 0.0
      %2068 = vmatpush1.msra.mxu0 0.0
      %2069 = vmatprep.subr.mxu0 0.0
      %2070 = vmatpush1.msra.mxu0 0.0
      %2071 = vmatprep.subr.mxu0 0.0
      %2072 = vmatpush1.msra.mxu0 0.0
      %2073 = vmatprep.subr.mxu0 0.0
      %2074 = vmatpush1.msra.mxu0 0.0
      %2075 = vmatprep.subr.mxu0 0.0
      %2076 = vmatpush1.msra.mxu0 0.0
      %2077 = vmatprep.subr.mxu0 0.0
      %2078 = vmatpush1.msra.mxu0 0.0
      %2079 = vmatprep.subr.mxu0 0.0
      %2080 = vmatpush1.msra.mxu0 0.0
      %2081 = vmatprep.subr.mxu0 0.0
      %2082 = vmatpush1.msra.mxu0 0.0
      %2083 = vmatprep.subr.mxu0 0.0
      %2084 = vmatpush1.msra.mxu0 0.0
      %2085 = vmatprep.subr.mxu0 0.0
      %2086 = vmatpush1.msra.mxu0 0.0
      %2087 = vmatprep.subr.mxu0 0.0
      %2088 = vmatpush1.msra.mxu0 0.0
      %2089 = vmatprep.subr.mxu0 0.0
      %2090 = vmatpush1.msra.mxu0 0.0
      %2091 = vmatprep.subr.mxu0 0.0
      %2092 = vmatpush1.msra.mxu0 0.0
      %2093 = vmatprep.subr.mxu0 0.0
      %2094 = vmatpush1.msra.mxu0 0.0
      %2095 = vmatprep.mubr.f32.mxu0 0.0
      %2096 = vmatmul.mubr.f32.gmra.mrb[0].mxu0 %v2026
      %v2097 = vpop.f32.mrb[0].mxu0
      %v2098 = vadd.f32 %v2023, %v2097
      %v2099 = vpop.f32.mrb[0].mxu0
      %2100 = vmatprep.mubr.f32.mxu0 0.0
      %2101 = vmatmul.mubr.f32.gmra.mrb[0].mxu0 %v2029
      %v2102 = vpop.f32.mrb[0].mxu0
      %v2103 = vadd.f32 %v2023, %v2102
      %v2104 = vpop.f32.mrb[0].mxu0
      %2105 = vdwg.mxu0
      %v2106 = vadd.f32 %v2098, %v2012
      %v2107 = vadd.f32 %v2103, %v2013
      %2108 = vst.msk [vmem:[#allocation15] sm:$0xff] %vm233, %v2106
      %2109 = vst.msk [vmem:[#allocation15 + $0x8] sm:$0xff] %vm233, %v2107
    $region61: #{tpu_custom_call.1} parent=1 // pred_fallthru
      _
    // Predicated region
    $region62: #{tpu_custom_call.1} parent=1 // pred_check
      _
    $region63: #{tpu_custom_call.1} parent=1 // pred_check_branch
      %2111 = sbr.rel (0) target = $region65
    $region64: #{tpu_custom_call.1} parent=1 // pred_region
      %s2113 = ssub.s32 256, 256
      %2114 = vsyncadd [#allocation8], %s2113
      %s2115 = sshll.u32 [#allocation15], 4
      %s2116 = int_to_ptr.vmem [resolvable:$true] %s2115
      %2121 = dma.vmem_to_hbm [thread:$0]  %s2116, 256, %s8, [#allocation8], 128, 128, 8
    $region65: #{tpu_custom_call.1} parent=1 // pred_fallthru
      _
    // Predicated region
    $region66: #{tpu_custom_call.1} parent=1 // pred_check
      _
    $region67: #{tpu_custom_call.1} parent=1 // pred_check_branch
      %2123 = sbr.rel (0) target = $region69
    $region68: #{tpu_custom_call.1} parent=1 // pred_region
      %2124 = dma.done [#allocation8], 256
    $region69: #{tpu_custom_call.1} parent=1 // pred_fallthru
      _
    %2125 = vsyncpa [#allocation7], 1
    %2126 = vsyncpa [#allocation10], 1
    %2127 = vsyncpa [#allocation13], 1
    %2128 = vsyncpa [#allocation8], 1

</llo_original>
